<compile_context>
chip_gen: v7x
topology: tpu7x:2x2x1
jax: 0.10.0
libtpu: 0.0.40
codegen_flags: <defaults>
</compile_context>

<pallas_src>
import math

import jax
import jax.numpy as jnp
from jax import lax
from jax.experimental import pallas as pl
from jax.experimental.pallas import tpu as pltpu


def _silu(x):
    return x * (1.0 / (1.0 + jnp.exp(-x)))


def _col_tile(m):
    """Lane-dense column tile for the pointwise kernels (multiple of 128 if possible)."""
    for t in (512, 256, 128):
        if m % t == 0:
            return t
    return m


# -----------------------------------------------------------------------------
# Fused cv0+cv1: 1x1 conv + bias + SiLU (single read of x, 2c-wide output)
# -----------------------------------------------------------------------------
def fused_pointwise_silu(x3, w, b):
    """x3: (N, Cin, M); w: (Cout, Cin); b: (Cout, 1) -> (N, Cout, M)."""
    N, Cin, M = x3.shape
    Cout = w.shape[0]
    tcol = _col_tile(M)

    def kernel(x_ref, w_ref, b_ref, o_ref):
        acc = jnp.dot(w_ref[...], x_ref[0], preferred_element_type=jnp.float32)
        acc = acc + b_ref[...]
        o_ref[0] = _silu(acc).astype(o_ref.dtype)

    return pl.pallas_call(
        kernel,
        out_shape=jax.ShapeDtypeStruct((N, Cout, M), x3.dtype),
        grid=(N, M // tcol),
        in_specs=[
            pl.BlockSpec((1, Cin, tcol), lambda n, j: (n, 0, j)),
            pl.BlockSpec((Cout, Cin), lambda n, j: (0, 0)),
            pl.BlockSpec((Cout, 1), lambda n, j: (0, 0)),
        ],
        out_specs=pl.BlockSpec((1, Cout, tcol), lambda n, j: (n, 0, j)),
        compiler_params=pltpu.CompilerParams(
            dimension_semantics=("parallel", "parallel")),
    )(x3, w, b)


# -----------------------------------------------------------------------------
# Concat-free cv2: grouped 1x1 conv + bias + SiLU
# -----------------------------------------------------------------------------
def grouped_pointwise_silu(ys, w_groups, b):
    """SiLU(sum_g w_g @ y_g + b) == 1x1 conv of channel-concat(ys).

    ys: list of (N, Cg, M); w_groups: list of (Cout, Cg); b: (Cout, 1).
    """
    N, _, M = ys[0].shape
    Cout = b.shape[0]
    tcol = _col_tile(M)
    G = len(ys)

    def kernel(*refs):
        y_refs = refs[:G]
        w_refs = refs[G:2 * G]
        b_ref = refs[2 * G]
        o_ref = refs[2 * G + 1]
        acc = jnp.dot(w_refs[0][...], y_refs[0][0],
                      preferred_element_type=jnp.float32)
        for g in range(1, G):
            acc = acc + jnp.dot(w_refs[g][...], y_refs[g][0],
                                preferred_element_type=jnp.float32)
        acc = acc + b_ref[...]
        o_ref[0] = _silu(acc).astype(o_ref.dtype)

    in_specs = [pl.BlockSpec((1, y.shape[1], tcol), lambda n, j: (n, 0, j))
                for y in ys]
    in_specs += [pl.BlockSpec((Cout, w.shape[1]), lambda n, j: (0, 0))
                 for w in w_groups]
    in_specs += [pl.BlockSpec((Cout, 1), lambda n, j: (0, 0))]

    return pl.pallas_call(
        kernel,
        out_shape=jax.ShapeDtypeStruct((N, Cout, M), ys[0].dtype),
        grid=(N, M // tcol),
        in_specs=in_specs,
        out_specs=pl.BlockSpec((1, Cout, tcol), lambda n, j: (n, 0, j)),
        compiler_params=pltpu.CompilerParams(
            dimension_semantics=("parallel", "parallel")),
    )(*ys, *list(w_groups), b)


# -----------------------------------------------------------------------------
# Fused Bottleneck: 3x3 conv+BN+SiLU -> 3x3 conv+BN+SiLU, one kernel per image
# -----------------------------------------------------------------------------
def _make_bottleneck_kernel(H, W, chan_off, cin):
    Wp = W + 2            # padded row stride
    Lw = H * Wp           # "wide" conv output length (2 garbage cols per row)

    def taps(src_ref, w_ref):
        # 9 taps = 9 contiguous lane-slices of the flat padded image; no reshapes.
        acc = None
        for dy in range(3):
            for dx in range(3):
                off = dy * Wp + dx
                xs = src_ref[:, off:off + Lw]
                t = jnp.dot(w_ref[dy * 3 + dx], xs,
                            preferred_element_type=jnp.float32)
                acc = t if acc is None else acc + t
        return acc

    def kernel(x_ref, w1_ref, b1_ref, w2_ref, b2_ref, mask_ref,
               o_ref, xpad_ref, mid_ref):
        # x_ref   : (1, Cb, H*W)   flat activations; use channels [chan_off, chan_off+cin)
        # w*_ref  : (9, Cout, Cin) 3x3 taps, k = dy*3 + dx
        # b*_ref  : (Cout, 1)
        # mask_ref: (1, Lw)        1.0 on valid cols (w < W), 0.0 on pad cols
        # xpad_ref: (cin,  (H+3)*(W+2))  zero-padded flat input scratch
        # mid_ref : (Cmid, (H+3)*(W+2))  zero-padded flat intermediate scratch
        xv = x_ref[0, chan_off:chan_off + cin, :]          # (cin, H*W)

        # in-VMEM zero padding of the input image (row stride W+2).
        xpad_ref[...] = jnp.zeros_like(xpad_ref)
        for h in range(H):
            xpad_ref[:, (h + 1) * Wp + 1:(h + 1) * Wp + 1 + W] = \
                xv[:, h * W:(h + 1) * W]

        # conv1 + SiLU; zero the 2 garbage columns per wide row, then write the
        # result (shifted by one padded row + one column) into the padded flat
        # intermediate scratch -> it is already re-padded for conv2, in VMEM.
        a1 = _silu(taps(xpad_ref, w1_ref) + b1_ref[...]) * mask_ref[...]
        mid_ref[...] = jnp.zeros_like(mid_ref)
        mid_ref[:, W + 3:W + 3 + Lw] = a1

        # conv2 + SiLU; crop the (W+2)-wide rows back to W and store lane-dense.
        a2 = _silu(taps(mid_ref, w2_ref) + b2_ref[...])
        a2c = jnp.concatenate([a2[:, h * Wp:h * Wp + W] for h in range(H)],
                              axis=1)
        o_ref[0] = a2c.astype(o_ref.dtype)

    return kernel


def bottleneck_fused(y_flat, wt1, b1, wt2, b2, chan_off, H, W):
    """Fused Bottleneck(c, c, shortcut=False) on channels [chan_off, chan_off+c)."""
    N, Cb, HW = y_flat.shape
    Cin = wt1.shape[2]
    Cmid = wt1.shape[1]
    Cout = wt2.shape[1]
    Wp = W + 2
    Lw = H * Wp
    Lext = (H + 3) * Wp   # one extra zero row so every tap slice stays in bounds
    mask = ((jnp.arange(Lw, dtype=jnp.int32) % Wp) < W).astype(y_flat.dtype)
    mask = mask.reshape(1, Lw)

    return pl.pallas_call(
        _make_bottleneck_kernel(H, W, chan_off, Cin),
        out_shape=jax.ShapeDtypeStruct((N, Cout, HW), y_flat.dtype),
        grid=(N,),
        in_specs=[
            pl.BlockSpec((1, Cb, HW), lambda n: (n, 0, 0)),
            pl.BlockSpec((9, Cmid, Cin), lambda n: (0, 0, 0)),
            pl.BlockSpec((Cmid, 1), lambda n: (0, 0)),
            pl.BlockSpec((9, Cout, Cmid), lambda n: (0, 0, 0)),
            pl.BlockSpec((Cout, 1), lambda n: (0, 0)),
            pl.BlockSpec((1, Lw), lambda n: (0, 0)),
        ],
        out_specs=pl.BlockSpec((1, Cout, HW), lambda n: (n, 0, 0)),
        scratch_shapes=[
            pltpu.VMEM((Cin, Lext), jnp.float32),
            pltpu.VMEM((Cmid, Lext), jnp.float32),
        ],
        compiler_params=pltpu.CompilerParams(
            dimension_semantics=("parallel",)),
    )(y_flat, wt1, b1, wt2, b2, mask)


# -----------------------------------------------------------------------------
# Parameter construction (deterministic, BN folded at build time)
# -----------------------------------------------------------------------------
def make_conv_bn_params(key, cin, cout, k):
    """Returns (w_eff, b_eff) with w_eff in PyTorch OIHW layout, BN folded."""
    kw, kg, kb, km, kv = jax.random.split(key, 5)
    w = jax.random.normal(kw, (cout, cin, k, k), jnp.float32) / math.sqrt(cin * k * k)
    gamma = jax.random.uniform(kg, (cout,), jnp.float32, 0.5, 1.5)
    beta = jax.random.normal(kb, (cout,), jnp.float32) * 0.1
    mean = jax.random.normal(km, (cout,), jnp.float32) * 0.1
    var = jax.random.uniform(kv, (cout,), jnp.float32, 0.5, 1.5)
    s = gamma / jnp.sqrt(var + 1e-5)
    w_eff = w * s[:, None, None, None]
    b_eff = beta - mean * s
    return w_eff, b_eff


def build_c2f_v2_params(key, c1, c2, n=1, e=0.5):
    c = int(c2 * e)
    keys = jax.random.split(key, 3 + 2 * n)
    return {
        "cv0": make_conv_bn_params(keys[0], c1, c, 1),
        "cv1": make_conv_bn_params(keys[1], c1, c, 1),
        "cv2": make_conv_bn_params(keys[2], (2 + n) * c, c2, 1),
        "m": [
            (
                make_conv_bn_params(keys[3 + 2 * i], c, c, 3),
                make_conv_bn_params(keys[4 + 2 * i], c, c, 3),
            )
            for i in range(n)
        ],
    }


def prep_kernel_params(P):
    """Pre-lay-out folded weights for the kernels (runs once, outside jit)."""
    (w0, b0), (w1, b1) = P["cv0"], P["cv1"]
    c = w0.shape[0]
    w01 = jnp.concatenate([w0[:, :, 0, 0], w1[:, :, 0, 0]], axis=0)     # (2c, c1)
    b01 = jnp.concatenate([b0, b1], axis=0).reshape(2 * c, 1)

    m = []
    for (wA, bA), (wB, bB) in P["m"]:
        # OIHW (co, ci, ky, kx) -> taps (ky*3+kx, co, ci)
        wtA = jnp.transpose(wA, (2, 3, 0, 1)).reshape(9, wA.shape[0], wA.shape[1])
        wtB = jnp.transpose(wB, (2, 3, 0, 1)).reshape(9, wB.shape[0], wB.shape[1])
        m.append((wtA, bA.reshape(-1, 1), wtB, bB.reshape(-1, 1)))

    w2, b2 = P["cv2"]
    c2 = w2.shape[0]
    w2 = w2[:, :, 0, 0]                                                  # (c2, (2+n)c)
    n = len(P["m"])
    w2_groups = [w2[:, :2 * c]]
    for i in range(n):
        w2_groups.append(w2[:, 2 * c + i * c: 2 * c + (i + 1) * c])
    return {"w01": w01, "b01": b01, "m": m,
            "w2_groups": tuple(w2_groups), "b2": b2.reshape(c2, 1)}


# -----------------------------------------------------------------------------
# Forward passes
# -----------------------------------------------------------------------------
def c2f_v2_pallas(x_nchw, KP):
    N, c1, H, W = x_nchw.shape
    HW = H * W
    c = KP["w01"].shape[0] // 2
    x3 = x_nchw.reshape(N, c1, HW)                 # bitcast, channels-first flat

    y01 = fused_pointwise_silu(x3, KP["w01"], KP["b01"])        # (N, 2c, HW)

    groups = [y01]
    prev, chan_off = y01, c                        # bottleneck 0 eats the cv1 half
    for (wt1, b1, wt2, b2) in KP["m"]:
        t = bottleneck_fused(prev, wt1, b1, wt2, b2, chan_off, H, W)  # (N, c, HW)
        groups.append(t)
        prev, chan_off = t, 0

    out = grouped_pointwise_silu(groups, KP["w2_groups"], KP["b2"])   # (N, c2, HW)
    c2 = KP["b2"].shape[0]
    return out.reshape(N, c2, H, W)


def _ref_conv_silu(x, w_eff, b_eff, pad):
    y = lax.conv_general_dilated(
        x, w_eff, window_strides=(1, 1), padding=[(pad, pad), (pad, pad)],
        dimension_numbers=("NCHW", "OIHW", "NCHW"))
    y = y + b_eff.reshape(1, -1, 1, 1)
    return y * jax.nn.sigmoid(y)


def c2f_v2_reference(x, P):
    y0 = _ref_conv_silu(x, *P["cv0"], 0)
    y1 = _ref_conv_silu(x, *P["cv1"], 0)
    ys = [y0, y1]
    for wb1, wb2 in P["m"]:
        t = _ref_conv_silu(ys[-1], *wb1, 1)
        t = _ref_conv_silu(t, *wb2, 1)
        ys.append(t)
    return _ref_conv_silu(jnp.concatenate(ys, axis=1), *P["cv2"], 0)


# -----------------------------------------------------------------------------
if __name__ == "__main__":
    key = jax.random.PRNGKey(0)
    kp, kx = jax.random.split(key)

    N, c1, H, W = 2, 4, 16, 16
    c2, n = 8, 1

    raw_params = build_c2f_v2_params(kp, c1, c2, n=n, e=0.5)
    kernel_params = prep_kernel_params(raw_params)
    x = jax.random.normal(kx, (N, c1, H, W), jnp.float32)

    out = jax.jit(c2f_v2_pallas)(x, kernel_params)
    out = jax.block_until_ready(out)

    ref = jax.jit(c2f_v2_reference)(x, raw_params)
    ref = jax.block_until_ready(ref)

    assert out.shape == (N, c2, H, W), out.shape
    assert out.dtype == jnp.float32
    max_err = float(jnp.max(jnp.abs(out - ref)))
    assert max_err < 1e-2, f"mismatch vs reference: {max_err}"

    print("KERNEL_OK")
</pallas_src>

<mosaic_0001>
module attributes {stable_mosaic.version = 11 : i64} {
  func.func @kernel(%arg0: i32, %arg1: memref<1x8x256xf32, #tpu.memory_space<vmem>>, %arg2: memref<9x4x4xf32, #tpu.memory_space<vmem>>, %arg3: memref<4x1xf32, #tpu.memory_space<vmem>>, %arg4: memref<9x4x4xf32, #tpu.memory_space<vmem>>, %arg5: memref<4x1xf32, #tpu.memory_space<vmem>>, %arg6: memref<1x288xf32, #tpu.memory_space<vmem>>, %arg7: memref<1x4x256xf32, #tpu.memory_space<vmem>>, %arg8: memref<4x342xf32, #tpu.memory_space<vmem>>, %arg9: memref<4x342xf32, #tpu.memory_space<vmem>>) attributes {dimension_semantics = [#tpu.dimension_semantics<parallel>], iteration_bounds = array<i64: 2>, scalar_prefetch = 0 : i64, scratch_operands = 2 : i64, tpu.core_type = #tpu.core_type<tc>, window_params = [{transform_indices = @transform_0, window_bounds = array<i64: 1, 8, 256>}, {pipeline_mode = #tpu.pipeline_mode<synchronous>, transform_indices = @transform_1, window_bounds = array<i64: 9, 4, 4>}, {pipeline_mode = #tpu.pipeline_mode<synchronous>, transform_indices = @transform_2, window_bounds = array<i64: 4, 1>}, {pipeline_mode = #tpu.pipeline_mode<synchronous>, transform_indices = @transform_3, window_bounds = array<i64: 9, 4, 4>}, {pipeline_mode = #tpu.pipeline_mode<synchronous>, transform_indices = @transform_4, window_bounds = array<i64: 4, 1>}, {pipeline_mode = #tpu.pipeline_mode<synchronous>, transform_indices = @transform_5, window_bounds = array<i64: 1, 288>}, {transform_indices = @transform_6, window_bounds = array<i64: 1, 4, 256>}]} {
    %c0 = arith.constant 0 : index
    %c4 = arith.constant 4 : index
    %c0_0 = arith.constant 0 : index
    %0 = vector.load %arg1[%c0, %c4, %c0_0] : memref<1x8x256xf32, #tpu.memory_space<vmem>>, vector<1x4x256xf32>
    %1 = vector.shape_cast %0 : vector<1x4x256xf32> to vector<4x256xf32>
    %cst = arith.constant 0.000000e+00 : f32
    %2 = vector.broadcast %cst : f32 to vector<4x342xf32>
    %c0_1 = arith.constant 0 : index
    %c0_2 = arith.constant 0 : index
    %3 = vector.load %arg8[%c0_1, %c0_2] : memref<4x342xf32, #tpu.memory_space<vmem>>, vector<4x342xf32>
    tpu.vector_store %arg8[%c0_1, %c0_2], %2 {strides = array<i32>} : memref<4x342xf32, #tpu.memory_space<vmem>>, vector<4x342xf32>,
    %4 = vector.extract_strided_slice %1 {offsets = [0, 0], sizes = [4, 16], strides = [1, 1]} : vector<4x256xf32> to vector<4x16xf32>
    %c0_3 = arith.constant 0 : index
    %c19 = arith.constant 19 : index
    %5 = vector.load %arg8[%c0_3, %c19] : memref<4x342xf32, #tpu.memory_space<vmem>>, vector<4x16xf32>
    tpu.vector_store %arg8[%c0_3, %c19], %4 {strides = array<i32>} : memref<4x342xf32, #tpu.memory_space<vmem>>, vector<4x16xf32>,
    %6 = vector.extract_strided_slice %1 {offsets = [0, 16], sizes = [4, 16], strides = [1, 1]} : vector<4x256xf32> to vector<4x16xf32>
    %c0_4 = arith.constant 0 : index
    %c37 = arith.constant 37 : index
    %7 = vector.load %arg8[%c0_4, %c37] : memref<4x342xf32, #tpu.memory_space<vmem>>, vector<4x16xf32>
    tpu.vector_store %arg8[%c0_4, %c37], %6 {strides = array<i32>} : memref<4x342xf32, #tpu.memory_space<vmem>>, vector<4x16xf32>,
    %8 = vector.extract_strided_slice %1 {offsets = [0, 32], sizes = [4, 16], strides = [1, 1]} : vector<4x256xf32> to vector<4x16xf32>
    %c0_5 = arith.constant 0 : index
    %c55 = arith.constant 55 : index
    %9 = vector.load %arg8[%c0_5, %c55] : memref<4x342xf32, #tpu.memory_space<vmem>>, vector<4x16xf32>
    tpu.vector_store %arg8[%c0_5, %c55], %8 {strides = array<i32>} : memref<4x342xf32, #tpu.memory_space<vmem>>, vector<4x16xf32>,
    %10 = vector.extract_strided_slice %1 {offsets = [0, 48], sizes = [4, 16], strides = [1, 1]} : vector<4x256xf32> to vector<4x16xf32>
    %c0_6 = arith.constant 0 : index
    %c73 = arith.constant 73 : index
    %11 = vector.load %arg8[%c0_6, %c73] : memref<4x342xf32, #tpu.memory_space<vmem>>, vector<4x16xf32>
    tpu.vector_store %arg8[%c0_6, %c73], %10 {strides = array<i32>} : memref<4x342xf32, #tpu.memory_space<vmem>>, vector<4x16xf32>,
    %12 = vector.extract_strided_slice %1 {offsets = [0, 64], sizes = [4, 16], strides = [1, 1]} : vector<4x256xf32> to vector<4x16xf32>
    %c0_7 = arith.constant 0 : index
    %c91 = arith.constant 91 : index
    %13 = vector.load %arg8[%c0_7, %c91] : memref<4x342xf32, #tpu.memory_space<vmem>>, vector<4x16xf32>
    tpu.vector_store %arg8[%c0_7, %c91], %12 {strides = array<i32>} : memref<4x342xf32, #tpu.memory_space<vmem>>, vector<4x16xf32>,
    %14 = vector.extract_strided_slice %1 {offsets = [0, 80], sizes = [4, 16], strides = [1, 1]} : vector<4x256xf32> to vector<4x16xf32>
    %c0_8 = arith.constant 0 : index
    %c109 = arith.constant 109 : index
    %15 = vector.load %arg8[%c0_8, %c109] : memref<4x342xf32, #tpu.memory_space<vmem>>, vector<4x16xf32>
    tpu.vector_store %arg8[%c0_8, %c109], %14 {strides = array<i32>} : memref<4x342xf32, #tpu.memory_space<vmem>>, vector<4x16xf32>,
    %16 = vector.extract_strided_slice %1 {offsets = [0, 96], sizes = [4, 16], strides = [1, 1]} : vector<4x256xf32> to vector<4x16xf32>
    %c0_9 = arith.constant 0 : index
    %c127 = arith.constant 127 : index
    %17 = vector.load %arg8[%c0_9, %c127] : memref<4x342xf32, #tpu.memory_space<vmem>>, vector<4x16xf32>
    tpu.vector_store %arg8[%c0_9, %c127], %16 {strides = array<i32>} : memref<4x342xf32, #tpu.memory_space<vmem>>, vector<4x16xf32>,
    %18 = vector.extract_strided_slice %1 {offsets = [0, 112], sizes = [4, 16], strides = [1, 1]} : vector<4x256xf32> to vector<4x16xf32>
    %c0_10 = arith.constant 0 : index
    %c145 = arith.constant 145 : index
    %19 = vector.load %arg8[%c0_10, %c145] : memref<4x342xf32, #tpu.memory_space<vmem>>, vector<4x16xf32>
    tpu.vector_store %arg8[%c0_10, %c145], %18 {strides = array<i32>} : memref<4x342xf32, #tpu.memory_space<vmem>>, vector<4x16xf32>,
    %20 = vector.extract_strided_slice %1 {offsets = [0, 128], sizes = [4, 16], strides = [1, 1]} : vector<4x256xf32> to vector<4x16xf32>
    %c0_11 = arith.constant 0 : index
    %c163 = arith.constant 163 : index
    %21 = vector.load %arg8[%c0_11, %c163] : memref<4x342xf32, #tpu.memory_space<vmem>>, vector<4x16xf32>
    tpu.vector_store %arg8[%c0_11, %c163], %20 {strides = array<i32>} : memref<4x342xf32, #tpu.memory_space<vmem>>, vector<4x16xf32>,
    %22 = vector.extract_strided_slice %1 {offsets = [0, 144], sizes = [4, 16], strides = [1, 1]} : vector<4x256xf32> to vector<4x16xf32>
    %c0_12 = arith.constant 0 : index
    %c181 = arith.constant 181 : index
    %23 = vector.load %arg8[%c0_12, %c181] : memref<4x342xf32, #tpu.memory_space<vmem>>, vector<4x16xf32>
    tpu.vector_store %arg8[%c0_12, %c181], %22 {strides = array<i32>} : memref<4x342xf32, #tpu.memory_space<vmem>>, vector<4x16xf32>,
    %24 = vector.extract_strided_slice %1 {offsets = [0, 160], sizes = [4, 16], strides = [1, 1]} : vector<4x256xf32> to vector<4x16xf32>
    %c0_13 = arith.constant 0 : index
    %c199 = arith.constant 199 : index
    %25 = vector.load %arg8[%c0_13, %c199] : memref<4x342xf32, #tpu.memory_space<vmem>>, vector<4x16xf32>
    tpu.vector_store %arg8[%c0_13, %c199], %24 {strides = array<i32>} : memref<4x342xf32, #tpu.memory_space<vmem>>, vector<4x16xf32>,
    %26 = vector.extract_strided_slice %1 {offsets = [0, 176], sizes = [4, 16], strides = [1, 1]} : vector<4x256xf32> to vector<4x16xf32>
    %c0_14 = arith.constant 0 : index
    %c217 = arith.constant 217 : index
    %27 = vector.load %arg8[%c0_14, %c217] : memref<4x342xf32, #tpu.memory_space<vmem>>, vector<4x16xf32>
    tpu.vector_store %arg8[%c0_14, %c217], %26 {strides = array<i32>} : memref<4x342xf32, #tpu.memory_space<vmem>>, vector<4x16xf32>,
    %28 = vector.extract_strided_slice %1 {offsets = [0, 192], sizes = [4, 16], strides = [1, 1]} : vector<4x256xf32> to vector<4x16xf32>
    %c0_15 = arith.constant 0 : index
    %c235 = arith.constant 235 : index
    %29 = vector.load %arg8[%c0_15, %c235] : memref<4x342xf32, #tpu.memory_space<vmem>>, vector<4x16xf32>
    tpu.vector_store %arg8[%c0_15, %c235], %28 {strides = array<i32>} : memref<4x342xf32, #tpu.memory_space<vmem>>, vector<4x16xf32>,
    %30 = vector.extract_strided_slice %1 {offsets = [0, 208], sizes = [4, 16], strides = [1, 1]} : vector<4x256xf32> to vector<4x16xf32>
    %c0_16 = arith.constant 0 : index
    %c253 = arith.constant 253 : index
    %31 = vector.load %arg8[%c0_16, %c253] : memref<4x342xf32, #tpu.memory_space<vmem>>, vector<4x16xf32>
    tpu.vector_store %arg8[%c0_16, %c253], %30 {strides = array<i32>} : memref<4x342xf32, #tpu.memory_space<vmem>>, vector<4x16xf32>,
    %32 = vector.extract_strided_slice %1 {offsets = [0, 224], sizes = [4, 16], strides = [1, 1]} : vector<4x256xf32> to vector<4x16xf32>
    %c0_17 = arith.constant 0 : index
    %c271 = arith.constant 271 : index
    %33 = vector.load %arg8[%c0_17, %c271] : memref<4x342xf32, #tpu.memory_space<vmem>>, vector<4x16xf32>
    tpu.vector_store %arg8[%c0_17, %c271], %32 {strides = array<i32>} : memref<4x342xf32, #tpu.memory_space<vmem>>, vector<4x16xf32>,
    %34 = vector.extract_strided_slice %1 {offsets = [0, 240], sizes = [4, 16], strides = [1, 1]} : vector<4x256xf32> to vector<4x16xf32>
    %c0_18 = arith.constant 0 : index
    %c289 = arith.constant 289 : index
    %35 = vector.load %arg8[%c0_18, %c289] : memref<4x342xf32, #tpu.memory_space<vmem>>, vector<4x16xf32>
    tpu.vector_store %arg8[%c0_18, %c289], %34 {strides = array<i32>} : memref<4x342xf32, #tpu.memory_space<vmem>>, vector<4x16xf32>,
    %c0_19 = arith.constant 0 : index
    %c0_20 = arith.constant 0 : index
    %36 = vector.load %arg8[%c0_19, %c0_20] : memref<4x342xf32, #tpu.memory_space<vmem>>, vector<4x288xf32>
    %c0_21 = arith.constant 0 : index
    %c0_22 = arith.constant 0 : index
    %c0_23 = arith.constant 0 : index
    %37 = vector.load %arg2[%c0_21, %c0_22, %c0_23] : memref<9x4x4xf32, #tpu.memory_space<vmem>>, vector<1x4x4xf32>
    %38 = vector.shape_cast %37 : vector<1x4x4xf32> to vector<4x4xf32>
    %cst_24 = arith.constant dense<0.000000e+00> : vector<4x288xf32>
    %39 = tpu.matmul %38, %36, %cst_24 {dimension_numbers = #tpu.dot_dimension_numbers<[1], [0], [0], [1], [0, 0, 1, 1], [], []>} : vector<4x4xf32>, vector<4x288xf32>, vector<4x288xf32> -> vector<4x288xf32>
    %c0_25 = arith.constant 0 : index
    %c1 = arith.constant 1 : index
    %40 = vector.load %arg8[%c0_25, %c1] : memref<4x342xf32, #tpu.memory_space<vmem>>, vector<4x288xf32>
    %c1_26 = arith.constant 1 : index
    %c0_27 = arith.constant 0 : index
    %c0_28 = arith.constant 0 : index
    %41 = vector.load %arg2[%c1_26, %c0_27, %c0_28] : memref<9x4x4xf32, #tpu.memory_space<vmem>>, vector<1x4x4xf32>
    %42 = vector.shape_cast %41 : vector<1x4x4xf32> to vector<4x4xf32>
    %cst_29 = arith.constant dense<0.000000e+00> : vector<4x288xf32>
    %43 = tpu.matmul %42, %40, %cst_29 {dimension_numbers = #tpu.dot_dimension_numbers<[1], [0], [0], [1], [0, 0, 1, 1], [], []>} : vector<4x4xf32>, vector<4x288xf32>, vector<4x288xf32> -> vector<4x288xf32>
    %44 = arith.addf %39, %43 : vector<4x288xf32>
    %c0_30 = arith.constant 0 : index
    %c2 = arith.constant 2 : index
    %45 = vector.load %arg8[%c0_30, %c2] : memref<4x342xf32, #tpu.memory_space<vmem>>, vector<4x288xf32>
    %c2_31 = arith.constant 2 : index
    %c0_32 = arith.constant 0 : index
    %c0_33 = arith.constant 0 : index
    %46 = vector.load %arg2[%c2_31, %c0_32, %c0_33] : memref<9x4x4xf32, #tpu.memory_space<vmem>>, vector<1x4x4xf32>
    %47 = vector.shape_cast %46 : vector<1x4x4xf32> to vector<4x4xf32>
    %cst_34 = arith.constant dense<0.000000e+00> : vector<4x288xf32>
    %48 = tpu.matmul %47, %45, %cst_34 {dimension_numbers = #tpu.dot_dimension_numbers<[1], [0], [0], [1], [0, 0, 1, 1], [], []>} : vector<4x4xf32>, vector<4x288xf32>, vector<4x288xf32> -> vector<4x288xf32>
    %49 = arith.addf %44, %48 : vector<4x288xf32>
    %c0_35 = arith.constant 0 : index
    %c18 = arith.constant 18 : index
    %50 = vector.load %arg8[%c0_35, %c18] : memref<4x342xf32, #tpu.memory_space<vmem>>, vector<4x288xf32>
    %c3 = arith.constant 3 : index
    %c0_36 = arith.constant 0 : index
    %c0_37 = arith.constant 0 : index
    %51 = vector.load %arg2[%c3, %c0_36, %c0_37] : memref<9x4x4xf32, #tpu.memory_space<vmem>>, vector<1x4x4xf32>
    %52 = vector.shape_cast %51 : vector<1x4x4xf32> to vector<4x4xf32>
    %cst_38 = arith.constant dense<0.000000e+00> : vector<4x288xf32>
    %53 = tpu.matmul %52, %50, %cst_38 {dimension_numbers = #tpu.dot_dimension_numbers<[1], [0], [0], [1], [0, 0, 1, 1], [], []>} : vector<4x4xf32>, vector<4x288xf32>, vector<4x288xf32> -> vector<4x288xf32>
    %54 = arith.addf %49, %53 : vector<4x288xf32>
    %c0_39 = arith.constant 0 : index
    %c19_40 = arith.constant 19 : index
    %55 = vector.load %arg8[%c0_39, %c19_40] : memref<4x342xf32, #tpu.memory_space<vmem>>, vector<4x288xf32>
    %c4_41 = arith.constant 4 : index
    %c0_42 = arith.constant 0 : index
    %c0_43 = arith.constant 0 : index
    %56 = vector.load %arg2[%c4_41, %c0_42, %c0_43] : memref<9x4x4xf32, #tpu.memory_space<vmem>>, vector<1x4x4xf32>
    %57 = vector.shape_cast %56 : vector<1x4x4xf32> to vector<4x4xf32>
    %cst_44 = arith.constant dense<0.000000e+00> : vector<4x288xf32>
    %58 = tpu.matmul %57, %55, %cst_44 {dimension_numbers = #tpu.dot_dimension_numbers<[1], [0], [0], [1], [0, 0, 1, 1], [], []>} : vector<4x4xf32>, vector<4x288xf32>, vector<4x288xf32> -> vector<4x288xf32>
    %59 = arith.addf %54, %58 : vector<4x288xf32>
    %c0_45 = arith.constant 0 : index
    %c20 = arith.constant 20 : index
    %60 = vector.load %arg8[%c0_45, %c20] : memref<4x342xf32, #tpu.memory_space<vmem>>, vector<4x288xf32>
    %c5 = arith.constant 5 : index
    %c0_46 = arith.constant 0 : index
    %c0_47 = arith.constant 0 : index
    %61 = vector.load %arg2[%c5, %c0_46, %c0_47] : memref<9x4x4xf32, #tpu.memory_space<vmem>>, vector<1x4x4xf32>
    %62 = vector.shape_cast %61 : vector<1x4x4xf32> to vector<4x4xf32>
    %cst_48 = arith.constant dense<0.000000e+00> : vector<4x288xf32>
    %63 = tpu.matmul %62, %60, %cst_48 {dimension_numbers = #tpu.dot_dimension_numbers<[1], [0], [0], [1], [0, 0, 1, 1], [], []>} : vector<4x4xf32>, vector<4x288xf32>, vector<4x288xf32> -> vector<4x288xf32>
    %64 = arith.addf %59, %63 : vector<4x288xf32>
    %c0_49 = arith.constant 0 : index
    %c36 = arith.constant 36 : index
    %65 = vector.load %arg8[%c0_49, %c36] : memref<4x342xf32, #tpu.memory_space<vmem>>, vector<4x288xf32>
    %c6 = arith.constant 6 : index
    %c0_50 = arith.constant 0 : index
    %c0_51 = arith.constant 0 : index
    %66 = vector.load %arg2[%c6, %c0_50, %c0_51] : memref<9x4x4xf32, #tpu.memory_space<vmem>>, vector<1x4x4xf32>
    %67 = vector.shape_cast %66 : vector<1x4x4xf32> to vector<4x4xf32>
    %cst_52 = arith.constant dense<0.000000e+00> : vector<4x288xf32>
    %68 = tpu.matmul %67, %65, %cst_52 {dimension_numbers = #tpu.dot_dimension_numbers<[1], [0], [0], [1], [0, 0, 1, 1], [], []>} : vector<4x4xf32>, vector<4x288xf32>, vector<4x288xf32> -> vector<4x288xf32>
    %69 = arith.addf %64, %68 : vector<4x288xf32>
    %c0_53 = arith.constant 0 : index
    %c37_54 = arith.constant 37 : index
    %70 = vector.load %arg8[%c0_53, %c37_54] : memref<4x342xf32, #tpu.memory_space<vmem>>, vector<4x288xf32>
    %c7 = arith.constant 7 : index
    %c0_55 = arith.constant 0 : index
    %c0_56 = arith.constant 0 : index
    %71 = vector.load %arg2[%c7, %c0_55, %c0_56] : memref<9x4x4xf32, #tpu.memory_space<vmem>>, vector<1x4x4xf32>
    %72 = vector.shape_cast %71 : vector<1x4x4xf32> to vector<4x4xf32>
    %cst_57 = arith.constant dense<0.000000e+00> : vector<4x288xf32>
    %73 = tpu.matmul %72, %70, %cst_57 {dimension_numbers = #tpu.dot_dimension_numbers<[1], [0], [0], [1], [0, 0, 1, 1], [], []>} : vector<4x4xf32>, vector<4x288xf32>, vector<4x288xf32> -> vector<4x288xf32>
    %74 = arith.addf %69, %73 : vector<4x288xf32>
    %c0_58 = arith.constant 0 : index
    %c38 = arith.constant 38 : index
    %75 = vector.load %arg8[%c0_58, %c38] : memref<4x342xf32, #tpu.memory_space<vmem>>, vector<4x288xf32>
    %c8 = arith.constant 8 : index
    %c0_59 = arith.constant 0 : index
    %c0_60 = arith.constant 0 : index
    %76 = vector.load %arg2[%c8, %c0_59, %c0_60] : memref<9x4x4xf32, #tpu.memory_space<vmem>>, vector<1x4x4xf32>
    %77 = vector.shape_cast %76 : vector<1x4x4xf32> to vector<4x4xf32>
    %cst_61 = arith.constant dense<0.000000e+00> : vector<4x288xf32>
    %78 = tpu.matmul %77, %75, %cst_61 {dimension_numbers = #tpu.dot_dimension_numbers<[1], [0], [0], [1], [0, 0, 1, 1], [], []>} : vector<4x4xf32>, vector<4x288xf32>, vector<4x288xf32> -> vector<4x288xf32>
    %79 = arith.addf %74, %78 : vector<4x288xf32>
    %c0_62 = arith.constant 0 : index
    %c0_63 = arith.constant 0 : index
    %80 = vector.load %arg3[%c0_62, %c0_63] : memref<4x1xf32, #tpu.memory_space<vmem>>, vector<4x1xf32>
    %81 = vector.broadcast %80 : vector<4x1xf32> to vector<4x288xf32>
    %82 = arith.addf %79, %81 : vector<4x288xf32>
    %cst_64 = arith.constant 0.000000e+00 : f32
    %83 = vector.broadcast %cst_64 : f32 to vector<4x288xf32>
    %84 = arith.subf %83, %82 : vector<4x288xf32>
    %85 = math.exp %84 : vector<4x288xf32>
    %cst_65 = arith.constant 1.000000e+00 : f32
    %86 = vector.broadcast %cst_65 : f32 to vector<4x288xf32>
    %87 = arith.addf %86, %85 : vector<4x288xf32>
    %cst_66 = arith.constant 1.000000e+00 : f32
    %88 = vector.broadcast %cst_66 : f32 to vector<4x288xf32>
    %89 = arith.divf %88, %87 : vector<4x288xf32>
    %90 = arith.mulf %82, %89 : vector<4x288xf32>
    %c0_67 = arith.constant 0 : index
    %c0_68 = arith.constant 0 : index
    %91 = vector.load %arg6[%c0_67, %c0_68] : memref<1x288xf32, #tpu.memory_space<vmem>>, vector<1x288xf32>
    %92 = vector.broadcast %91 : vector<1x288xf32> to vector<4x288xf32>
    %93 = arith.mulf %90, %92 : vector<4x288xf32>
    %cst_69 = arith.constant 0.000000e+00 : f32
    %94 = vector.broadcast %cst_69 : f32 to vector<4x342xf32>
    %c0_70 = arith.constant 0 : index
    %c0_71 = arith.constant 0 : index
    %95 = vector.load %arg9[%c0_70, %c0_71] : memref<4x342xf32, #tpu.memory_space<vmem>>, vector<4x342xf32>
    tpu.vector_store %arg9[%c0_70, %c0_71], %94 {strides = array<i32>} : memref<4x342xf32, #tpu.memory_space<vmem>>, vector<4x342xf32>,
    %c0_72 = arith.constant 0 : index
    %c19_73 = arith.constant 19 : index
    %96 = vector.load %arg9[%c0_72, %c19_73] : memref<4x342xf32, #tpu.memory_space<vmem>>, vector<4x288xf32>
    tpu.vector_store %arg9[%c0_72, %c19_73], %93 {strides = array<i32>} : memref<4x342xf32, #tpu.memory_space<vmem>>, vector<4x288xf32>,
    %c0_74 = arith.constant 0 : index
    %c0_75 = arith.constant 0 : index
    %97 = vector.load %arg9[%c0_74, %c0_75] : memref<4x342xf32, #tpu.memory_space<vmem>>, vector<4x288xf32>
    %c0_76 = arith.constant 0 : index
    %c0_77 = arith.constant 0 : index
    %c0_78 = arith.constant 0 : index
    %98 = vector.load %arg4[%c0_76, %c0_77, %c0_78] : memref<9x4x4xf32, #tpu.memory_space<vmem>>, vector<1x4x4xf32>
    %99 = vector.shape_cast %98 : vector<1x4x4xf32> to vector<4x4xf32>
    %cst_79 = arith.constant dense<0.000000e+00> : vector<4x288xf32>
    %100 = tpu.matmul %99, %97, %cst_79 {dimension_numbers = #tpu.dot_dimension_numbers<[1], [0], [0], [1], [0, 0, 1, 1], [], []>} : vector<4x4xf32>, vector<4x288xf32>, vector<4x288xf32> -> vector<4x288xf32>
    %c0_80 = arith.constant 0 : index
    %c1_81 = arith.constant 1 : index
    %101 = vector.load %arg9[%c0_80, %c1_81] : memref<4x342xf32, #tpu.memory_space<vmem>>, vector<4x288xf32>
    %c1_82 = arith.constant 1 : index
    %c0_83 = arith.constant 0 : index
    %c0_84 = arith.constant 0 : index
    %102 = vector.load %arg4[%c1_82, %c0_83, %c0_84] : memref<9x4x4xf32, #tpu.memory_space<vmem>>, vector<1x4x4xf32>
    %103 = vector.shape_cast %102 : vector<1x4x4xf32> to vector<4x4xf32>
    %cst_85 = arith.constant dense<0.000000e+00> : vector<4x288xf32>
    %104 = tpu.matmul %103, %101, %cst_85 {dimension_numbers = #tpu.dot_dimension_numbers<[1], [0], [0], [1], [0, 0, 1, 1], [], []>} : vector<4x4xf32>, vector<4x288xf32>, vector<4x288xf32> -> vector<4x288xf32>
    %105 = arith.addf %100, %104 : vector<4x288xf32>
    %c0_86 = arith.constant 0 : index
    %c2_87 = arith.constant 2 : index
    %106 = vector.load %arg9[%c0_86, %c2_87] : memref<4x342xf32, #tpu.memory_space<vmem>>, vector<4x288xf32>
    %c2_88 = arith.constant 2 : index
    %c0_89 = arith.constant 0 : index
    %c0_90 = arith.constant 0 : index
    %107 = vector.load %arg4[%c2_88, %c0_89, %c0_90] : memref<9x4x4xf32, #tpu.memory_space<vmem>>, vector<1x4x4xf32>
    %108 = vector.shape_cast %107 : vector<1x4x4xf32> to vector<4x4xf32>
    %cst_91 = arith.constant dense<0.000000e+00> : vector<4x288xf32>
    %109 = tpu.matmul %108, %106, %cst_91 {dimension_numbers = #tpu.dot_dimension_numbers<[1], [0], [0], [1], [0, 0, 1, 1], [], []>} : vector<4x4xf32>, vector<4x288xf32>, vector<4x288xf32> -> vector<4x288xf32>
    %110 = arith.addf %105, %109 : vector<4x288xf32>
    %c0_92 = arith.constant 0 : index
    %c18_93 = arith.constant 18 : index
    %111 = vector.load %arg9[%c0_92, %c18_93] : memref<4x342xf32, #tpu.memory_space<vmem>>, vector<4x288xf32>
    %c3_94 = arith.constant 3 : index
    %c0_95 = arith.constant 0 : index
    %c0_96 = arith.constant 0 : index
    %112 = vector.load %arg4[%c3_94, %c0_95, %c0_96] : memref<9x4x4xf32, #tpu.memory_space<vmem>>, vector<1x4x4xf32>
    %113 = vector.shape_cast %112 : vector<1x4x4xf32> to vector<4x4xf32>
    %cst_97 = arith.constant dense<0.000000e+00> : vector<4x288xf32>
    %114 = tpu.matmul %113, %111, %cst_97 {dimension_numbers = #tpu.dot_dimension_numbers<[1], [0], [0], [1], [0, 0, 1, 1], [], []>} : vector<4x4xf32>, vector<4x288xf32>, vector<4x288xf32> -> vector<4x288xf32>
    %115 = arith.addf %110, %114 : vector<4x288xf32>
    %c0_98 = arith.constant 0 : index
    %c19_99 = arith.constant 19 : index
    %116 = vector.load %arg9[%c0_98, %c19_99] : memref<4x342xf32, #tpu.memory_space<vmem>>, vector<4x288xf32>
    %c4_100 = arith.constant 4 : index
    %c0_101 = arith.constant 0 : index
    %c0_102 = arith.constant 0 : index
    %117 = vector.load %arg4[%c4_100, %c0_101, %c0_102] : memref<9x4x4xf32, #tpu.memory_space<vmem>>, vector<1x4x4xf32>
    %118 = vector.shape_cast %117 : vector<1x4x4xf32> to vector<4x4xf32>
    %cst_103 = arith.constant dense<0.000000e+00> : vector<4x288xf32>
    %119 = tpu.matmul %118, %116, %cst_103 {dimension_numbers = #tpu.dot_dimension_numbers<[1], [0], [0], [1], [0, 0, 1, 1], [], []>} : vector<4x4xf32>, vector<4x288xf32>, vector<4x288xf32> -> vector<4x288xf32>
    %120 = arith.addf %115, %119 : vector<4x288xf32>
    %c0_104 = arith.constant 0 : index
    %c20_105 = arith.constant 20 : index
    %121 = vector.load %arg9[%c0_104, %c20_105] : memref<4x342xf32, #tpu.memory_space<vmem>>, vector<4x288xf32>
    %c5_106 = arith.constant 5 : index
    %c0_107 = arith.constant 0 : index
    %c0_108 = arith.constant 0 : index
    %122 = vector.load %arg4[%c5_106, %c0_107, %c0_108] : memref<9x4x4xf32, #tpu.memory_space<vmem>>, vector<1x4x4xf32>
    %123 = vector.shape_cast %122 : vector<1x4x4xf32> to vector<4x4xf32>
    %cst_109 = arith.constant dense<0.000000e+00> : vector<4x288xf32>
    %124 = tpu.matmul %123, %121, %cst_109 {dimension_numbers = #tpu.dot_dimension_numbers<[1], [0], [0], [1], [0, 0, 1, 1], [], []>} : vector<4x4xf32>, vector<4x288xf32>, vector<4x288xf32> -> vector<4x288xf32>
    %125 = arith.addf %120, %124 : vector<4x288xf32>
    %c0_110 = arith.constant 0 : index
    %c36_111 = arith.constant 36 : index
    %126 = vector.load %arg9[%c0_110, %c36_111] : memref<4x342xf32, #tpu.memory_space<vmem>>, vector<4x288xf32>
    %c6_112 = arith.constant 6 : index
    %c0_113 = arith.constant 0 : index
    %c0_114 = arith.constant 0 : index
    %127 = vector.load %arg4[%c6_112, %c0_113, %c0_114] : memref<9x4x4xf32, #tpu.memory_space<vmem>>, vector<1x4x4xf32>
    %128 = vector.shape_cast %127 : vector<1x4x4xf32> to vector<4x4xf32>
    %cst_115 = arith.constant dense<0.000000e+00> : vector<4x288xf32>
    %129 = tpu.matmul %128, %126, %cst_115 {dimension_numbers = #tpu.dot_dimension_numbers<[1], [0], [0], [1], [0, 0, 1, 1], [], []>} : vector<4x4xf32>, vector<4x288xf32>, vector<4x288xf32> -> vector<4x288xf32>
    %130 = arith.addf %125, %129 : vector<4x288xf32>
    %c0_116 = arith.constant 0 : index
    %c37_117 = arith.constant 37 : index
    %131 = vector.load %arg9[%c0_116, %c37_117] : memref<4x342xf32, #tpu.memory_space<vmem>>, vector<4x288xf32>
    %c7_118 = arith.constant 7 : index
    %c0_119 = arith.constant 0 : index
    %c0_120 = arith.constant 0 : index
    %132 = vector.load %arg4[%c7_118, %c0_119, %c0_120] : memref<9x4x4xf32, #tpu.memory_space<vmem>>, vector<1x4x4xf32>
    %133 = vector.shape_cast %132 : vector<1x4x4xf32> to vector<4x4xf32>
    %cst_121 = arith.constant dense<0.000000e+00> : vector<4x288xf32>
    %134 = tpu.matmul %133, %131, %cst_121 {dimension_numbers = #tpu.dot_dimension_numbers<[1], [0], [0], [1], [0, 0, 1, 1], [], []>} : vector<4x4xf32>, vector<4x288xf32>, vector<4x288xf32> -> vector<4x288xf32>
    %135 = arith.addf %130, %134 : vector<4x288xf32>
    %c0_122 = arith.constant 0 : index
    %c38_123 = arith.constant 38 : index
    %136 = vector.load %arg9[%c0_122, %c38_123] : memref<4x342xf32, #tpu.memory_space<vmem>>, vector<4x288xf32>
    %c8_124 = arith.constant 8 : index
    %c0_125 = arith.constant 0 : index
    %c0_126 = arith.constant 0 : index
    %137 = vector.load %arg4[%c8_124, %c0_125, %c0_126] : memref<9x4x4xf32, #tpu.memory_space<vmem>>, vector<1x4x4xf32>
    %138 = vector.shape_cast %137 : vector<1x4x4xf32> to vector<4x4xf32>
    %cst_127 = arith.constant dense<0.000000e+00> : vector<4x288xf32>
    %139 = tpu.matmul %138, %136, %cst_127 {dimension_numbers = #tpu.dot_dimension_numbers<[1], [0], [0], [1], [0, 0, 1, 1], [], []>} : vector<4x4xf32>, vector<4x288xf32>, vector<4x288xf32> -> vector<4x288xf32>
    %140 = arith.addf %135, %139 : vector<4x288xf32>
    %c0_128 = arith.constant 0 : index
    %c0_129 = arith.constant 0 : index
    %141 = vector.load %arg5[%c0_128, %c0_129] : memref<4x1xf32, #tpu.memory_space<vmem>>, vector<4x1xf32>
    %142 = vector.broadcast %141 : vector<4x1xf32> to vector<4x288xf32>
    %143 = arith.addf %140, %142 : vector<4x288xf32>
    %cst_130 = arith.constant 0.000000e+00 : f32
    %144 = vector.broadcast %cst_130 : f32 to vector<4x288xf32>
    %145 = arith.subf %144, %143 : vector<4x288xf32>
    %146 = math.exp %145 : vector<4x288xf32>
    %cst_131 = arith.constant 1.000000e+00 : f32
    %147 = vector.broadcast %cst_131 : f32 to vector<4x288xf32>
    %148 = arith.addf %147, %146 : vector<4x288xf32>
    %cst_132 = arith.constant 1.000000e+00 : f32
    %149 = vector.broadcast %cst_132 : f32 to vector<4x288xf32>
    %150 = arith.divf %149, %148 : vector<4x288xf32>
    %151 = arith.mulf %143, %150 : vector<4x288xf32>
    %152 = vector.extract_strided_slice %151 {offsets = [0, 0], sizes = [4, 16], strides = [1, 1]} : vector<4x288xf32> to vector<4x16xf32>
    %153 = vector.extract_strided_slice %151 {offsets = [0, 18], sizes = [4, 16], strides = [1, 1]} : vector<4x288xf32> to vector<4x16xf32>
    %154 = vector.extract_strided_slice %151 {offsets = [0, 36], sizes = [4, 16], strides = [1, 1]} : vector<4x288xf32> to vector<4x16xf32>
    %155 = vector.extract_strided_slice %151 {offsets = [0, 54], sizes = [4, 16], strides = [1, 1]} : vector<4x288xf32> to vector<4x16xf32>
    %156 = vector.extract_strided_slice %151 {offsets = [0, 72], sizes = [4, 16], strides = [1, 1]} : vector<4x288xf32> to vector<4x16xf32>
    %157 = vector.extract_strided_slice %151 {offsets = [0, 90], sizes = [4, 16], strides = [1, 1]} : vector<4x288xf32> to vector<4x16xf32>
    %158 = vector.extract_strided_slice %151 {offsets = [0, 108], sizes = [4, 16], strides = [1, 1]} : vector<4x288xf32> to vector<4x16xf32>
    %159 = vector.extract_strided_slice %151 {offsets = [0, 126], sizes = [4, 16], strides = [1, 1]} : vector<4x288xf32> to vector<4x16xf32>
    %160 = vector.extract_strided_slice %151 {offsets = [0, 144], sizes = [4, 16], strides = [1, 1]} : vector<4x288xf32> to vector<4x16xf32>
    %161 = vector.extract_strided_slice %151 {offsets = [0, 162], sizes = [4, 16], strides = [1, 1]} : vector<4x288xf32> to vector<4x16xf32>
    %162 = vector.extract_strided_slice %151 {offsets = [0, 180], sizes = [4, 16], strides = [1, 1]} : vector<4x288xf32> to vector<4x16xf32>
    %163 = vector.extract_strided_slice %151 {offsets = [0, 198], sizes = [4, 16], strides = [1, 1]} : vector<4x288xf32> to vector<4x16xf32>
    %164 = vector.extract_strided_slice %151 {offsets = [0, 216], sizes = [4, 16], strides = [1, 1]} : vector<4x288xf32> to vector<4x16xf32>
    %165 = vector.extract_strided_slice %151 {offsets = [0, 234], sizes = [4, 16], strides = [1, 1]} : vector<4x288xf32> to vector<4x16xf32>
    %166 = vector.extract_strided_slice %151 {offsets = [0, 252], sizes = [4, 16], strides = [1, 1]} : vector<4x288xf32> to vector<4x16xf32>
    %167 = vector.extract_strided_slice %151 {offsets = [0, 270], sizes = [4, 16], strides = [1, 1]} : vector<4x288xf32> to vector<4x16xf32>
    %168 = tpu.concatenate %152, %153, %154, %155, %156, %157, %158, %159, %160, %161, %162, %163, %164, %165, %166, %167 in 1 : vector<4x16xf32>, vector<4x16xf32>, vector<4x16xf32>, vector<4x16xf32>, vector<4x16xf32>, vector<4x16xf32>, vector<4x16xf32>, vector<4x16xf32>, vector<4x16xf32>, vector<4x16xf32>, vector<4x16xf32>, vector<4x16xf32>, vector<4x16xf32>, vector<4x16xf32>, vector<4x16xf32>, vector<4x16xf32> -> vector<4x256xf32>
    %c0_133 = arith.constant 0 : index
    %c0_134 = arith.constant 0 : index
    %c0_135 = arith.constant 0 : index
    %169 = vector.load %arg7[%c0_133, %c0_134, %c0_135] : memref<1x4x256xf32, #tpu.memory_space<vmem>>, vector<1x4x256xf32>
    %170 = vector.shape_cast %169 : vector<1x4x256xf32> to vector<4x256xf32>
    %171 = vector.shape_cast %168 : vector<4x256xf32> to vector<1x4x256xf32>
    tpu.vector_store %arg7[%c0_133, %c0_134, %c0_135], %171 {strides = array<i32>} : memref<1x4x256xf32, #tpu.memory_space<vmem>>, vector<1x4x256xf32>,
    return
  }
  func.func @transform_0(%arg0: i32) -> (i32, i32, i32) {
    %c0_i32 = arith.constant 0 : i32
    %c0_i32_0 = arith.constant 0 : i32
    %c0_i32_1 = arith.constant 0 : i32
    return %arg0, %c0_i32, %c0_i32_0 : i32, i32, i32
  }
  func.func @transform_1(%arg0: i32) -> (i32, i32, i32) {
    %c0_i32 = arith.constant 0 : i32
    %c0_i32_0 = arith.constant 0 : i32
    %c0_i32_1 = arith.constant 0 : i32
    %c0_i32_2 = arith.constant 0 : i32
    return %c0_i32, %c0_i32_0, %c0_i32_1 : i32, i32, i32
  }
  func.func @transform_2(%arg0: i32) -> (i32, i32) {
    %c0_i32 = arith.constant 0 : i32
    %c0_i32_0 = arith.constant 0 : i32
    %c0_i32_1 = arith.constant 0 : i32
    return %c0_i32, %c0_i32_0 : i32, i32
  }
  func.func @transform_3(%arg0: i32) -> (i32, i32, i32) {
    %c0_i32 = arith.constant 0 : i32
    %c0_i32_0 = arith.constant 0 : i32
    %c0_i32_1 = arith.constant 0 : i32
    %c0_i32_2 = arith.constant 0 : i32
    return %c0_i32, %c0_i32_0, %c0_i32_1 : i32, i32, i32
  }
  func.func @transform_4(%arg0: i32) -> (i32, i32) {
    %c0_i32 = arith.constant 0 : i32
    %c0_i32_0 = arith.constant 0 : i32
    %c0_i32_1 = arith.constant 0 : i32
    return %c0_i32, %c0_i32_0 : i32, i32
  }
  func.func @transform_5(%arg0: i32) -> (i32, i32) {
    %c0_i32 = arith.constant 0 : i32
    %c0_i32_0 = arith.constant 0 : i32
    %c0_i32_1 = arith.constant 0 : i32
    return %c0_i32, %c0_i32_0 : i32, i32
  }
  func.func @transform_6(%arg0: i32) -> (i32, i32, i32) {
    %c0_i32 = arith.constant 0 : i32
    %c0_i32_0 = arith.constant 0 : i32
    %c0_i32_1 = arith.constant 0 : i32
    return %arg0, %c0_i32, %c0_i32_0 : i32, i32, i32
  }
}

module attributes {stable_mosaic.version = 11 : i64} {
  func.func @kernel(%arg0: i32, %arg1: i32, %arg2: memref<1x4x256xf32, #tpu.memory_space<vmem>>, %arg3: memref<8x4xf32, #tpu.memory_space<vmem>>, %arg4: memref<8x1xf32, #tpu.memory_space<vmem>>, %arg5: memref<1x8x256xf32, #tpu.memory_space<vmem>>) attributes {dimension_semantics = [#tpu.dimension_semantics<parallel>, #tpu.dimension_semantics<parallel>], iteration_bounds = array<i64: 2, 1>, scalar_prefetch = 0 : i64, scratch_operands = 0 : i64, tpu.core_type = #tpu.core_type<tc>, window_params = [{transform_indices = @transform_0, window_bounds = array<i64: 1, 4, 256>}, {pipeline_mode = #tpu.pipeline_mode<synchronous>, transform_indices = @transform_1, window_bounds = array<i64: 8, 4>}, {pipeline_mode = #tpu.pipeline_mode<synchronous>, transform_indices = @transform_2, window_bounds = array<i64: 8, 1>}, {transform_indices = @transform_3, window_bounds = array<i64: 1, 8, 256>}]} {
    %c0 = arith.constant 0 : index
    %c0_0 = arith.constant 0 : index
    %0 = vector.load %arg3[%c0, %c0_0] : memref<8x4xf32, #tpu.memory_space<vmem>>, vector<8x4xf32>
    %c0_1 = arith.constant 0 : index
    %c0_2 = arith.constant 0 : index
    %c0_3 = arith.constant 0 : index
    %1 = vector.load %arg2[%c0_1, %c0_2, %c0_3] : memref<1x4x256xf32, #tpu.memory_space<vmem>>, vector<1x4x256xf32>
    %2 = vector.shape_cast %1 : vector<1x4x256xf32> to vector<4x256xf32>
    %cst = arith.constant dense<0.000000e+00> : vector<8x256xf32>
    %3 = tpu.matmul %0, %2, %cst {dimension_numbers = #tpu.dot_dimension_numbers<[1], [0], [0], [1], [0, 0, 1, 1], [], []>} : vector<8x4xf32>, vector<4x256xf32>, vector<8x256xf32> -> vector<8x256xf32>
    %c0_4 = arith.constant 0 : index
    %c0_5 = arith.constant 0 : index
    %4 = vector.load %arg4[%c0_4, %c0_5] : memref<8x1xf32, #tpu.memory_space<vmem>>, vector<8x1xf32>
    %5 = vector.broadcast %4 : vector<8x1xf32> to vector<8x256xf32>
    %6 = arith.addf %3, %5 : vector<8x256xf32>
    %cst_6 = arith.constant 0.000000e+00 : f32
    %7 = vector.broadcast %cst_6 : f32 to vector<8x256xf32>
    %8 = arith.subf %7, %6 : vector<8x256xf32>
    %9 = math.exp %8 : vector<8x256xf32>
    %cst_7 = arith.constant 1.000000e+00 : f32
    %10 = vector.broadcast %cst_7 : f32 to vector<8x256xf32>
    %11 = arith.addf %10, %9 : vector<8x256xf32>
    %cst_8 = arith.constant 1.000000e+00 : f32
    %12 = vector.broadcast %cst_8 : f32 to vector<8x256xf32>
    %13 = arith.divf %12, %11 : vector<8x256xf32>
    %14 = arith.mulf %6, %13 : vector<8x256xf32>
    %c0_9 = arith.constant 0 : index
    %c0_10 = arith.constant 0 : index
    %c0_11 = arith.constant 0 : index
    %15 = vector.load %arg5[%c0_9, %c0_10, %c0_11] : memref<1x8x256xf32, #tpu.memory_space<vmem>>, vector<1x8x256xf32>
    %16 = vector.shape_cast %15 : vector<1x8x256xf32> to vector<8x256xf32>
    %17 = vector.shape_cast %14 : vector<8x256xf32> to vector<1x8x256xf32>
    tpu.vector_store %arg5[%c0_9, %c0_10, %c0_11], %17 {strides = array<i32>} : memref<1x8x256xf32, #tpu.memory_space<vmem>>, vector<1x8x256xf32>,
    return
  }
  func.func @transform_0(%arg0: i32, %arg1: i32) -> (i32, i32, i32) {
    %c0_i32 = arith.constant 0 : i32
    %c0_i32_0 = arith.constant 0 : i32
    return %arg0, %c0_i32, %arg1 : i32, i32, i32
  }
  func.func @transform_1(%arg0: i32, %arg1: i32) -> (i32, i32) {
    %c0_i32 = arith.constant 0 : i32
    %c0_i32_0 = arith.constant 0 : i32
    %c0_i32_1 = arith.constant 0 : i32
    return %c0_i32, %c0_i32_0 : i32, i32
  }
  func.func @transform_2(%arg0: i32, %arg1: i32) -> (i32, i32) {
    %c0_i32 = arith.constant 0 : i32
    %c0_i32_0 = arith.constant 0 : i32
    %c0_i32_1 = arith.constant 0 : i32
    return %c0_i32, %c0_i32_0 : i32, i32
  }
  func.func @transform_3(%arg0: i32, %arg1: i32) -> (i32, i32, i32) {
    %c0_i32 = arith.constant 0 : i32
    %c0_i32_0 = arith.constant 0 : i32
    return %arg0, %c0_i32, %arg1 : i32, i32, i32
  }
}

module attributes {stable_mosaic.version = 11 : i64} {
  func.func @kernel(%arg0: i32, %arg1: i32, %arg2: memref<1x8x256xf32, #tpu.memory_space<vmem>>, %arg3: memref<1x4x256xf32, #tpu.memory_space<vmem>>, %arg4: memref<8x8xf32, #tpu.memory_space<vmem>>, %arg5: memref<8x4xf32, #tpu.memory_space<vmem>>, %arg6: memref<8x1xf32, #tpu.memory_space<vmem>>, %arg7: memref<1x8x256xf32, #tpu.memory_space<vmem>>) attributes {dimension_semantics = [#tpu.dimension_semantics<parallel>, #tpu.dimension_semantics<parallel>], iteration_bounds = array<i64: 2, 1>, scalar_prefetch = 0 : i64, scratch_operands = 0 : i64, tpu.core_type = #tpu.core_type<tc>, window_params = [{transform_indices = @transform_0, window_bounds = array<i64: 1, 8, 256>}, {transform_indices = @transform_1, window_bounds = array<i64: 1, 4, 256>}, {pipeline_mode = #tpu.pipeline_mode<synchronous>, transform_indices = @transform_2, window_bounds = array<i64: 8, 8>}, {pipeline_mode = #tpu.pipeline_mode<synchronous>, transform_indices = @transform_3, window_bounds = array<i64: 8, 4>}, {pipeline_mode = #tpu.pipeline_mode<synchronous>, transform_indices = @transform_4, window_bounds = array<i64: 8, 1>}, {transform_indices = @transform_5, window_bounds = array<i64: 1, 8, 256>}]} {
    %c0 = arith.constant 0 : index
    %c0_0 = arith.constant 0 : index
    %0 = vector.load %arg4[%c0, %c0_0] : memref<8x8xf32, #tpu.memory_space<vmem>>, vector<8x8xf32>
    %c0_1 = arith.constant 0 : index
    %c0_2 = arith.constant 0 : index
    %c0_3 = arith.constant 0 : index
    %1 = vector.load %arg2[%c0_1, %c0_2, %c0_3] : memref<1x8x256xf32, #tpu.memory_space<vmem>>, vector<1x8x256xf32>
    %2 = vector.shape_cast %1 : vector<1x8x256xf32> to vector<8x256xf32>
    %cst = arith.constant dense<0.000000e+00> : vector<8x256xf32>
    %3 = tpu.matmul %0, %2, %cst {dimension_numbers = #tpu.dot_dimension_numbers<[1], [0], [0], [1], [0, 0, 1, 1], [], []>} : vector<8x8xf32>, vector<8x256xf32>, vector<8x256xf32> -> vector<8x256xf32>
    %c0_4 = arith.constant 0 : index
    %c0_5 = arith.constant 0 : index
    %4 = vector.load %arg5[%c0_4, %c0_5] : memref<8x4xf32, #tpu.memory_space<vmem>>, vector<8x4xf32>
    %c0_6 = arith.constant 0 : index
    %c0_7 = arith.constant 0 : index
    %c0_8 = arith.constant 0 : index
    %5 = vector.load %arg3[%c0_6, %c0_7, %c0_8] : memref<1x4x256xf32, #tpu.memory_space<vmem>>, vector<1x4x256xf32>
    %6 = vector.shape_cast %5 : vector<1x4x256xf32> to vector<4x256xf32>
    %cst_9 = arith.constant dense<0.000000e+00> : vector<8x256xf32>
    %7 = tpu.matmul %4, %6, %cst_9 {dimension_numbers = #tpu.dot_dimension_numbers<[1], [0], [0], [1], [0, 0, 1, 1], [], []>} : vector<8x4xf32>, vector<4x256xf32>, vector<8x256xf32> -> vector<8x256xf32>
    %8 = arith.addf %3, %7 : vector<8x256xf32>
    %c0_10 = arith.constant 0 : index
    %c0_11 = arith.constant 0 : index
    %9 = vector.load %arg6[%c0_10, %c0_11] : memref<8x1xf32, #tpu.memory_space<vmem>>, vector<8x1xf32>
    %10 = vector.broadcast %9 : vector<8x1xf32> to vector<8x256xf32>
    %11 = arith.addf %8, %10 : vector<8x256xf32>
    %cst_12 = arith.constant 0.000000e+00 : f32
    %12 = vector.broadcast %cst_12 : f32 to vector<8x256xf32>
    %13 = arith.subf %12, %11 : vector<8x256xf32>
    %14 = math.exp %13 : vector<8x256xf32>
    %cst_13 = arith.constant 1.000000e+00 : f32
    %15 = vector.broadcast %cst_13 : f32 to vector<8x256xf32>
    %16 = arith.addf %15, %14 : vector<8x256xf32>
    %cst_14 = arith.constant 1.000000e+00 : f32
    %17 = vector.broadcast %cst_14 : f32 to vector<8x256xf32>
    %18 = arith.divf %17, %16 : vector<8x256xf32>
    %19 = arith.mulf %11, %18 : vector<8x256xf32>
    %c0_15 = arith.constant 0 : index
    %c0_16 = arith.constant 0 : index
    %c0_17 = arith.constant 0 : index
    %20 = vector.load %arg7[%c0_15, %c0_16, %c0_17] : memref<1x8x256xf32, #tpu.memory_space<vmem>>, vector<1x8x256xf32>
    %21 = vector.shape_cast %20 : vector<1x8x256xf32> to vector<8x256xf32>
    %22 = vector.shape_cast %19 : vector<8x256xf32> to vector<1x8x256xf32>
    tpu.vector_store %arg7[%c0_15, %c0_16, %c0_17], %22 {strides = array<i32>} : memref<1x8x256xf32, #tpu.memory_space<vmem>>, vector<1x8x256xf32>,
    return
  }
  func.func @transform_0(%arg0: i32, %arg1: i32) -> (i32, i32, i32) {
    %c0_i32 = arith.constant 0 : i32
    %c0_i32_0 = arith.constant 0 : i32
    return %arg0, %c0_i32, %arg1 : i32, i32, i32
  }
  func.func @transform_1(%arg0: i32, %arg1: i32) -> (i32, i32, i32) {
    %c0_i32 = arith.constant 0 : i32
    %c0_i32_0 = arith.constant 0 : i32
    return %arg0, %c0_i32, %arg1 : i32, i32, i32
  }
  func.func @transform_2(%arg0: i32, %arg1: i32) -> (i32, i32) {
    %c0_i32 = arith.constant 0 : i32
    %c0_i32_0 = arith.constant 0 : i32
    %c0_i32_1 = arith.constant 0 : i32
    return %c0_i32, %c0_i32_0 : i32, i32
  }
  func.func @transform_3(%arg0: i32, %arg1: i32) -> (i32, i32) {
    %c0_i32 = arith.constant 0 : i32
    %c0_i32_0 = arith.constant 0 : i32
    %c0_i32_1 = arith.constant 0 : i32
    return %c0_i32, %c0_i32_0 : i32, i32
  }
  func.func @transform_4(%arg0: i32, %arg1: i32) -> (i32, i32) {
    %c0_i32 = arith.constant 0 : i32
    %c0_i32_0 = arith.constant 0 : i32
    %c0_i32_1 = arith.constant 0 : i32
    return %c0_i32, %c0_i32_0 : i32, i32
  }
  func.func @transform_5(%arg0: i32, %arg1: i32) -> (i32, i32, i32) {
    %c0_i32 = arith.constant 0 : i32
    %c0_i32_0 = arith.constant 0 : i32
    return %arg0, %c0_i32, %arg1 : i32, i32, i32
  }
}

</mosaic_0001>

<llo_original>
// kernel: c2f_v2_pallas.3
$region0: #{c2f_v2_pallas.3}
  #allocation0 [shape = 'u32[]', space=smem, size = 0x4, offset = 0x4, fixed_abs, tag = 'smem constant byte address 0x4 - core index']
  #allocation1 [shape = 'u32[144,128]{1,0:T(1,128)}', space=vmem, size = 0x12000, scoped, tag = 'internal scratch']
  %s0 = inlined_call_operand.vmem [shape: f32[2,4,256], index: 0, kind: input, shape index: {}]
  %s1 = inlined_call_operand.vmem [shape: f32[8,4], index: 1, kind: input, shape index: {}]
  %s2 = inlined_call_operand.vmem [shape: f32[8,1], index: 2, kind: input, shape index: {}]
  %s3 = inlined_call_operand.vmem [shape: f32[2,8,256], index: 3, kind: output, shape index: {}]
  %s4 = sld [smem:[#allocation0]]
  $region45: #{c2f_v2_pallas.3} parent=0
    _
  %s6 = ssub.s32 1, %s4
  %s7 = scalar_select 0, %s6, %s4
  loop: start=0, step=1, limit=4
  $region2: #{c2f_v2_pallas.3} parent=0 // loop_pre_header
    _
  $region3: #{c2f_v2_pallas.3} parent=0 // loop_header
    %s9 = sphi 0, %s13
    %p10 = scmp.ge.s32.totalorder %s9, 4
    %s16 = sphi 0, %s28
    %s17 = sphi 0, %s24
    %s18 = sphi 0, %s16
    %s19 = sphi 0, %s17
    %s20 = sphi 0, %s18
    %s21 = sphi 0, %s19
    %s33 = sphi 0, %s35
    %s36 = sphi 0, %s33
    %s37 = sphi 0, %s36
    %s53 = sphi 0, %s37
    %s57 = sphi 0, %s57
    %s59 = sphi 0, %s57
    %s60 = sphi 0, %s59
    %s74 = sphi 0, %s60
    %s78 = sphi 0, %s78
    %s80 = sphi 0, %s78
    %s81 = sphi 0, %s80
    %s95 = sphi 0, %s81
    %s103 = sphi 0, %s105
    %s106 = sphi 0, %s103
    %s107 = sphi 0, %s106
    %s123 = sphi 0, %s107
  $region4: #{c2f_v2_pallas.3} parent=0 // loop_header_branch
    %12 = sbr.rel (%p10) target = $region8
  $region5: #{c2f_v2_pallas.3} parent=0 // loop_body
    %s14 = ssub.s32 %s9, 1
    %s15 = ssub.s32 %s9, 2
    %s22 = sadd.s32 1, %s17
    %p23 = scmp.ge.s32.totalorder %s22, 1
    %s24 = scalar_select %p23, 0, %s22
    %s25 = sadd.s32 1, %s16
    %s26 = scalar_select %p23, %s25, %s16
    %p27 = scmp.ge.s32.totalorder %s26, 2
    %s28 = scalar_select %p27, 0, %s26
    %s29 = ssub.s32 %s16, %s28
    %s30 = ssub.s32 %s17, %s24
    %s31 = sor.u32 %s29, %s30
    %p32 = scmp.eq.s32.totalorder %s31, 0
    %s34 = sadd.s32 %s33, 1
    %s35 = scalar_select %p32, %s33, %s34
    %p38 = pneg %p32
    %p39 = scmp.eq.s32.totalorder %s9, 1
    %p40 = por %p38, %p39
    %p41 = scmp.ne.s32.totalorder %s33, %s36
    %p42 = scmp.eq.s32.totalorder %s9, 0
    %p43 = por %p41, %p42
    %p44 = scmp.ne.s32.totalorder %s33, %s36
    %p45 = scmp.eq.s32.totalorder %s14, 1
    %p46 = por %p44, %p45
    %p47 = scmp.ne.s32.totalorder %s36, %s37
    %p48 = scmp.eq.s32.totalorder %s14, 0
    %p49 = por %p47, %p48
    %p50 = scmp.ne.s32.totalorder %s36, %s37
    %p51 = scmp.eq.s32.totalorder %s15, 1
    %p52 = por %p50, %p51
    %p54 = scmp.ne.s32.totalorder %s37, %s53
    %p55 = scmp.eq.s32.totalorder %s15, 0
    %p56 = por %p54, %p55
    %s58 = sadd.s32 %s57, 1
    %p61 = scmp.eq.s32.totalorder %s9, 1
    %p62 = scmp.ne.s32.totalorder %s57, %s59
    %p63 = scmp.eq.s32.totalorder %s9, 0
    %p64 = por %p62, %p63
    %p65 = scmp.ne.s32.totalorder %s57, %s59
    %p66 = scmp.eq.s32.totalorder %s14, 1
    %p67 = por %p65, %p66
    %p68 = scmp.ne.s32.totalorder %s59, %s60
    %p69 = scmp.eq.s32.totalorder %s14, 0
    %p70 = por %p68, %p69
    %p71 = scmp.ne.s32.totalorder %s59, %s60
    %p72 = scmp.eq.s32.totalorder %s15, 1
    %p73 = por %p71, %p72
    %p75 = scmp.ne.s32.totalorder %s60, %s74
    %p76 = scmp.eq.s32.totalorder %s15, 0
    %p77 = por %p75, %p76
    %s79 = sadd.s32 %s78, 1
    %p82 = scmp.eq.s32.totalorder %s9, 1
    %p83 = scmp.ne.s32.totalorder %s78, %s80
    %p84 = scmp.eq.s32.totalorder %s9, 0
    %p85 = por %p83, %p84
    %p86 = scmp.ne.s32.totalorder %s78, %s80
    %p87 = scmp.eq.s32.totalorder %s14, 1
    %p88 = por %p86, %p87
    %p89 = scmp.ne.s32.totalorder %s80, %s81
    %p90 = scmp.eq.s32.totalorder %s14, 0
    %p91 = por %p89, %p90
    %p92 = scmp.ne.s32.totalorder %s80, %s81
    %p93 = scmp.eq.s32.totalorder %s15, 1
    %p94 = por %p92, %p93
    %p96 = scmp.ne.s32.totalorder %s81, %s95
    %p97 = scmp.eq.s32.totalorder %s15, 0
    %p98 = por %p96, %p97
    %s99 = ssub.s32 %s16, %s28
    %s100 = ssub.s32 %s17, %s24
    %s101 = sor.u32 %s99, %s100
    %p102 = scmp.eq.s32.totalorder %s101, 0
    %s104 = sadd.s32 %s103, 1
    %s105 = scalar_select %p102, %s103, %s104
    %p108 = pneg %p102
    %p109 = scmp.eq.s32.totalorder %s9, 1
    %p110 = por %p108, %p109
    %p111 = scmp.ne.s32.totalorder %s103, %s106
    %p112 = scmp.eq.s32.totalorder %s9, 0
    %p113 = por %p111, %p112
    %p114 = scmp.ne.s32.totalorder %s103, %s106
    %p115 = scmp.eq.s32.totalorder %s14, 1
    %p116 = por %p114, %p115
    %p117 = scmp.ne.s32.totalorder %s106, %s107
    %p118 = scmp.eq.s32.totalorder %s14, 0
    %p119 = por %p117, %p118
    %p120 = scmp.ne.s32.totalorder %s106, %s107
    %p121 = scmp.eq.s32.totalorder %s15, 1
    %p122 = por %p120, %p121
    %p124 = scmp.ne.s32.totalorder %s107, %s123
    %p125 = scmp.eq.s32.totalorder %s15, 0
    %p126 = por %p124, %p125
    %p127 = scmp.le.s32.totalorder 1, %s9
    %p128 = scmp.lt.s32.totalorder %s9, 3
    %p129 = pnand %p127, %p128
    %p130 = pneg %p129
    // Predicated region
    $region9: #{c2f_v2_pallas.3} parent=5 // pred_check
      _
    $region10: #{c2f_v2_pallas.3} parent=5 // pred_check_branch
      %132 = sbr.rel (%p129) target = $region12
    $region11: #{c2f_v2_pallas.3} parent=5 // pred_region
      %s133 = ssub.s32 %s9, 1
      // Predicated region
      $region13: #{c2f_v2_pallas.3} parent=11 // pred_check
        %p134 = pneg %p70
      $region14: #{c2f_v2_pallas.3} parent=11 // pred_check_branch
        %136 = sbr.rel (%p134) target = $region16
      $region15: #{c2f_v2_pallas.3} parent=11 // pred_region
        _
      $region16: #{c2f_v2_pallas.3} parent=11 // pred_fallthru
        _
      // Predicated region
      $region17: #{c2f_v2_pallas.3} parent=11 // pred_check
        %p137 = pneg %p91
      $region18: #{c2f_v2_pallas.3} parent=11 // pred_check_branch
        %139 = sbr.rel (%p137) target = $region20
      $region19: #{c2f_v2_pallas.3} parent=11 // pred_region
        _
      $region20: #{c2f_v2_pallas.3} parent=11 // pred_fallthru
        _
    $region12: #{c2f_v2_pallas.3} parent=5 // pred_fallthru
      _
    %p140 = scmp.lt.s32.totalorder %s9, 2
    // Predicated region
    $region21: #{c2f_v2_pallas.3} parent=5 // pred_check
      %p141 = pneg %p140
    $region22: #{c2f_v2_pallas.3} parent=5 // pred_check_branch
      %143 = sbr.rel (%p141) target = $region24
    $region23: #{c2f_v2_pallas.3} parent=5 // pred_region
      // Predicated region
      $region25: #{c2f_v2_pallas.3} parent=23 // pred_check
        %p144 = pneg %p43
      $region26: #{c2f_v2_pallas.3} parent=23 // pred_check_branch
        %146 = sbr.rel (%p144) target = $region28
      $region27: #{c2f_v2_pallas.3} parent=23 // pred_region
        %s147 = smul.u32 2, %s17
        %p148 = scmp.lt.s32.totalorder %s16, 1
        %s149 = scalar_select %p148, %s16, 1
        %p150 = scmp.lt.s32.totalorder %s147, 1
        %s151 = scalar_select %p150, %s147, 1
        %s152 = smul.addr %s149, 2
        %s153 = sadd.s32 %s151, %s152
        %s154 = smul.addr %s153, 4
        %s155 = scalar_lea.vmem %s0, %s154
        %s156 = smul.u32 2, %s17
      $region28: #{c2f_v2_pallas.3} parent=23 // pred_fallthru
        _
    $region24: #{c2f_v2_pallas.3} parent=5 // pred_fallthru
      _
    %p157 = scmp.le.s32.totalorder 1, %s9
    %p158 = scmp.lt.s32.totalorder %s9, 3
    %p159 = pnand %p157, %p158
    %p160 = pneg %p159
    // Predicated region
    $region29: #{c2f_v2_pallas.3} parent=5 // pred_check
      _
    $region30: #{c2f_v2_pallas.3} parent=5 // pred_check_branch
      %162 = sbr.rel (%p159) target = $region32
    $region31: #{c2f_v2_pallas.3} parent=5 // pred_region
      %s163 = ssub.s32 %s9, 1
      %s164 = smul.u32 2, %s19
      %p165 = scmp.lt.s32.totalorder %s18, 1
      %s166 = scalar_select %p165, %s18, 1
      %p167 = scmp.lt.s32.totalorder %s164, 1
      %s168 = scalar_select %p167, %s164, 1
      %s169 = smul.addr %s166, 2
      %s170 = sadd.s32 %s168, %s169
      %s171 = smul.addr %s170, 4
      %s172 = scalar_lea.vmem %s0, %s171
      %p173 = pneg %p49
      %p174 = pneg %p46
      %p175 = pneg %p70
      %p176 = pneg %p67
      %p177 = pneg %p91
      %p178 = pneg %p88
      %p179 = pneg %p119
      %p180 = pneg %p116
      %s181 = smul.u32 2, %s19
      %p182 = scmp.lt.s32.totalorder %s18, 1
      %s183 = scalar_select %p182, %s18, 1
      %p184 = scmp.lt.s32.totalorder %s181, 1
      %s185 = scalar_select %p184, %s181, 1
      %s186 = smul.addr %s183, 2
      %s187 = sadd.s32 %s185, %s186
      %s188 = smul.addr %s187, 8
      %s189 = scalar_lea.vmem %s3, %s188
      %s190 = smul.u32 2, %s19
      %p191 = scmp.lt.s32.totalorder %s18, 1
      %s192 = scalar_select %p191, %s18, 1
      %p193 = scmp.lt.s32.totalorder %s190, 1
      %s194 = scalar_select %p193, %s190, 1
      %s195 = smul.addr %s192, 2
      %s196 = sadd.s32 %s194, %s195
      %s197 = smul.addr %s196, 4
      %s198 = scalar_lea.vmem %s0, %s197
      %s199 = smul.u32 2, %s19
      %s200 = smul.u32 2, %s19
      %p201 = scmp.lt.s32.totalorder %s18, 1
      %s202 = scalar_select %p201, %s18, 1
      %p203 = scmp.lt.s32.totalorder %s200, 1
      %s204 = scalar_select %p203, %s200, 1
      %s205 = smul.addr %s202, 2
      %s206 = sadd.s32 %s204, %s205
      %s207 = smul.addr %s206, 8
      %s208 = scalar_lea.vmem %s3, %s207
      %s209 = smul.u32 2, %s19
      %v210 = vld [vmem:[%s1] sm:$0xff]
      %v211 = vld [vmem:[%s198] sm:$0xff]
      %v212 = vld [vmem:[%s2] sm:$0xff]
      %214 = vset.pattern.permute.xlu0 0
      %215 = vperm.xlu0 %214, %v212
      %v216 = vpop.permute.xlu0 %215
      %v219 = vcombine.high %v211, %v211
      %vm220 = vcmask 31744
      %v222 = vsel %vm220, %v210, 0
      %vm224 = vcmask 1043456
      %v225 = vsel %vm224, %v211, 0
      %v227 = vsel %vm224, %v219, 0
      %229 = vmatprep.subr.mxu0 %v227
      %230 = vmatpush1.msra.mxu0 %v225
      %231 = vmatprep.subr.mxu0 0.0
      %232 = vmatpush1.msra.mxu0 0.0
      %233 = vmatprep.subr.mxu0 0.0
      %234 = vmatpush1.msra.mxu0 0.0
      %235 = vmatprep.subr.mxu0 0.0
      %236 = vmatpush1.msra.mxu0 0.0
      %237 = vmatprep.subr.mxu0 0.0
      %238 = vmatpush1.msra.mxu0 0.0
      %239 = vmatprep.subr.mxu0 0.0
      %240 = vmatpush1.msra.mxu0 0.0
      %241 = vmatprep.subr.mxu0 0.0
      %242 = vmatpush1.msra.mxu0 0.0
      %243 = vmatprep.subr.mxu0 0.0
      %244 = vmatpush1.msra.mxu0 0.0
      %245 = vmatprep.subr.mxu0 0.0
      %246 = vmatpush1.msra.mxu0 0.0
      %247 = vmatprep.subr.mxu0 0.0
      %248 = vmatpush1.msra.mxu0 0.0
      %249 = vmatprep.subr.mxu0 0.0
      %250 = vmatpush1.msra.mxu0 0.0
      %251 = vmatprep.subr.mxu0 0.0
      %252 = vmatpush1.msra.mxu0 0.0
      %253 = vmatprep.subr.mxu0 0.0
      %254 = vmatpush1.msra.mxu0 0.0
      %255 = vmatprep.subr.mxu0 0.0
      %256 = vmatpush1.msra.mxu0 0.0
      %257 = vmatprep.subr.mxu0 0.0
      %258 = vmatpush1.msra.mxu0 0.0
      %259 = vmatprep.subr.mxu0 0.0
      %260 = vmatpush1.msra.mxu0 0.0
      %261 = vmatprep.subr.mxu0 0.0
      %262 = vmatpush1.msra.mxu0 0.0
      %263 = vmatprep.subr.mxu0 0.0
      %264 = vmatpush1.msra.mxu0 0.0
      %265 = vmatprep.subr.mxu0 0.0
      %266 = vmatpush1.msra.mxu0 0.0
      %267 = vmatprep.subr.mxu0 0.0
      %268 = vmatpush1.msra.mxu0 0.0
      %269 = vmatprep.subr.mxu0 0.0
      %270 = vmatpush1.msra.mxu0 0.0
      %271 = vmatprep.subr.mxu0 0.0
      %272 = vmatpush1.msra.mxu0 0.0
      %273 = vmatprep.subr.mxu0 0.0
      %274 = vmatpush1.msra.mxu0 0.0
      %275 = vmatprep.subr.mxu0 0.0
      %276 = vmatpush1.msra.mxu0 0.0
      %277 = vmatprep.subr.mxu0 0.0
      %278 = vmatpush1.msra.mxu0 0.0
      %279 = vmatprep.subr.mxu0 0.0
      %280 = vmatpush1.msra.mxu0 0.0
      %281 = vmatprep.subr.mxu0 0.0
      %282 = vmatpush1.msra.mxu0 0.0
      %283 = vmatprep.subr.mxu0 0.0
      %284 = vmatpush1.msra.mxu0 0.0
      %285 = vmatprep.subr.mxu0 0.0
      %286 = vmatpush1.msra.mxu0 0.0
      %287 = vmatprep.subr.mxu0 0.0
      %288 = vmatpush1.msra.mxu0 0.0
      %289 = vmatprep.subr.mxu0 0.0
      %290 = vmatpush1.msra.mxu0 0.0
      %291 = vmatprep.subr.mxu0 0.0
      %292 = vmatpush1.msra.mxu0 0.0
      %293 = vmatprep.mubr.f32.mxu0 0.0
      %294 = vmatmul.mubr.f32.gmra.mrb[0].mxu0 %v222
      %v295 = vpop.f32.mrb[0].mxu0
      %v296 = vadd.f32 %v216, %v295
      %v297 = vpop.f32.mrb[0].mxu0
      %v298 = vadd.f32 %v216, %v297
      %299 = vdwg.mxu0
      %v300 = vsub.f32 0.0, %v296
      %v301 = vsub.f32 0.0, %v298
      %v302 = vmul.f32 %v300, 1.442695
      %v303 = vpow.pop %v302
      %v304 = vmul.f32 %v301, 1.442695
      %v305 = vpow.pop %v304
      %v306 = vadd.f32 %v303, 1.0
      %v307 = vadd.f32 %v305, 1.0
      %v308 = vrcp.pop %v306
      %v309 = vmul.f32 1.0, %v308
      %v310 = vrcp.pop %v307
      %v311 = vmul.f32 1.0, %v310
      %v312 = vmul.f32 %v296, %v309
      %v313 = vmul.f32 %v298, %v311
      %314 = vst [vmem:[%s208] sm:$0xff] %v312
      %315 = vst [vmem:[%s208 + $0x8] sm:$0xff] %v313
      %s316 = smul.u32 2, %s19
      %p317 = scmp.lt.s32.totalorder %s18, 1
      %s318 = scalar_select %p317, %s18, 1
      %p319 = scmp.lt.s32.totalorder %s316, 1
      %s320 = scalar_select %p319, %s316, 1
      %s321 = smul.addr %s318, 2
      %s322 = sadd.s32 %s320, %s321
      %s323 = smul.addr %s322, 8
      %s324 = scalar_lea.vmem %s3, %s323
      // Predicated region
      $region33: #{c2f_v2_pallas.3} parent=31 // pred_check
        %p325 = pneg %p116
      $region34: #{c2f_v2_pallas.3} parent=31 // pred_check_branch
        %327 = sbr.rel (%p325) target = $region36
      $region35: #{c2f_v2_pallas.3} parent=31 // pred_region
        %s328 = smul.u32 2, %s19
      $region36: #{c2f_v2_pallas.3} parent=31 // pred_fallthru
        _
    $region32: #{c2f_v2_pallas.3} parent=5 // pred_fallthru
      _
    %p329 = scmp.le.s32.totalorder 2, %s9
    // Predicated region
    $region37: #{c2f_v2_pallas.3} parent=5 // pred_check
      %p330 = pneg %p329
    $region38: #{c2f_v2_pallas.3} parent=5 // pred_check_branch
      %332 = sbr.rel (%p330) target = $region40
    $region39: #{c2f_v2_pallas.3} parent=5 // pred_region
      %s333 = ssub.s32 %s9, 2
      // Predicated region
      $region41: #{c2f_v2_pallas.3} parent=39 // pred_check
        %p334 = pneg %p122
      $region42: #{c2f_v2_pallas.3} parent=39 // pred_check_branch
        %336 = sbr.rel (%p334) target = $region44
      $region43: #{c2f_v2_pallas.3} parent=39 // pred_region
        %s337 = smul.u32 2, %s21
        %p338 = scmp.lt.s32.totalorder %s20, 1
        %s339 = scalar_select %p338, %s20, 1
        %p340 = scmp.lt.s32.totalorder %s337, 1
        %s341 = scalar_select %p340, %s337, 1
        %s342 = smul.addr %s339, 2
        %s343 = sadd.s32 %s341, %s342
        %s344 = smul.addr %s343, 8
        %s345 = scalar_lea.vmem %s3, %s344
      $region44: #{c2f_v2_pallas.3} parent=39 // pred_fallthru
        _
    $region40: #{c2f_v2_pallas.3} parent=5 // pred_fallthru
      _
  $region6: #{c2f_v2_pallas.3} parent=0 // loop_footer
    %s13 = sadd.s32 1, %s9
  $region7: #{c2f_v2_pallas.3} parent=0 // loop_footer_branch
    %8 = sbr.rel target = $region3
  $region8: #{c2f_v2_pallas.3} parent=0 // loop_exit
    _

// kernel: c2f_v2_pallas.5
$region0: #{c2f_v2_pallas.5}
  #allocation0 [shape = 'u32[]', space=smem, size = 0x4, offset = 0x4, fixed_abs, tag = 'smem constant byte address 0x4 - core index']
  #allocation1 [shape = 'u32[144,128]{1,0:T(1,128)}', space=vmem, size = 0x12000, scoped, tag = 'internal scratch']
  %s0 = inlined_call_operand.vmem [shape: f32[2,8,256], index: 0, kind: input, shape index: {}]
  %s1 = inlined_call_operand.vmem [shape: f32[2,4,256], index: 1, kind: input, shape index: {}]
  %s2 = inlined_call_operand.vmem [shape: f32[8,8], index: 2, kind: input, shape index: {}]
  %s3 = inlined_call_operand.vmem [shape: f32[8,4], index: 3, kind: input, shape index: {}]
  %s4 = inlined_call_operand.vmem [shape: f32[8,1], index: 4, kind: input, shape index: {}]
  %s5 = inlined_call_operand.vmem [shape: f32[2,8,256], index: 5, kind: output, shape index: {}]
  %s6 = sld [smem:[#allocation0]]
  $region53: #{c2f_v2_pallas.5} parent=0
    _
  %s8 = ssub.s32 1, %s6
  %s9 = scalar_select 0, %s8, %s6
  loop: start=0, step=1, limit=4
  $region2: #{c2f_v2_pallas.5} parent=0 // loop_pre_header
    _
  $region3: #{c2f_v2_pallas.5} parent=0 // loop_header
    %s11 = sphi 0, %s15
    %p12 = scmp.ge.s32.totalorder %s11, 4
    %s18 = sphi 0, %s30
    %s19 = sphi 0, %s26
    %s20 = sphi 0, %s18
    %s21 = sphi 0, %s19
    %s22 = sphi 0, %s20
    %s23 = sphi 0, %s21
    %s35 = sphi 0, %s37
    %s38 = sphi 0, %s35
    %s39 = sphi 0, %s38
    %s55 = sphi 0, %s39
    %s63 = sphi 0, %s65
    %s66 = sphi 0, %s63
    %s67 = sphi 0, %s66
    %s83 = sphi 0, %s67
    %s87 = sphi 0, %s87
    %s89 = sphi 0, %s87
    %s90 = sphi 0, %s89
    %s104 = sphi 0, %s90
    %s108 = sphi 0, %s108
    %s110 = sphi 0, %s108
    %s111 = sphi 0, %s110
    %s125 = sphi 0, %s111
    %s129 = sphi 0, %s129
    %s131 = sphi 0, %s129
    %s132 = sphi 0, %s131
    %s146 = sphi 0, %s132
    %s154 = sphi 0, %s156
    %s157 = sphi 0, %s154
    %s158 = sphi 0, %s157
    %s174 = sphi 0, %s158
  $region4: #{c2f_v2_pallas.5} parent=0 // loop_header_branch
    %14 = sbr.rel (%p12) target = $region8
  $region5: #{c2f_v2_pallas.5} parent=0 // loop_body
    %s16 = ssub.s32 %s11, 1
    %s17 = ssub.s32 %s11, 2
    %s24 = sadd.s32 1, %s19
    %p25 = scmp.ge.s32.totalorder %s24, 1
    %s26 = scalar_select %p25, 0, %s24
    %s27 = sadd.s32 1, %s18
    %s28 = scalar_select %p25, %s27, %s18
    %p29 = scmp.ge.s32.totalorder %s28, 2
    %s30 = scalar_select %p29, 0, %s28
    %s31 = ssub.s32 %s18, %s30
    %s32 = ssub.s32 %s19, %s26
    %s33 = sor.u32 %s31, %s32
    %p34 = scmp.eq.s32.totalorder %s33, 0
    %s36 = sadd.s32 %s35, 1
    %s37 = scalar_select %p34, %s35, %s36
    %p40 = pneg %p34
    %p41 = scmp.eq.s32.totalorder %s11, 1
    %p42 = por %p40, %p41
    %p43 = scmp.ne.s32.totalorder %s35, %s38
    %p44 = scmp.eq.s32.totalorder %s11, 0
    %p45 = por %p43, %p44
    %p46 = scmp.ne.s32.totalorder %s35, %s38
    %p47 = scmp.eq.s32.totalorder %s16, 1
    %p48 = por %p46, %p47
    %p49 = scmp.ne.s32.totalorder %s38, %s39
    %p50 = scmp.eq.s32.totalorder %s16, 0
    %p51 = por %p49, %p50
    %p52 = scmp.ne.s32.totalorder %s38, %s39
    %p53 = scmp.eq.s32.totalorder %s17, 1
    %p54 = por %p52, %p53
    %p56 = scmp.ne.s32.totalorder %s39, %s55
    %p57 = scmp.eq.s32.totalorder %s17, 0
    %p58 = por %p56, %p57
    %s59 = ssub.s32 %s18, %s30
    %s60 = ssub.s32 %s19, %s26
    %s61 = sor.u32 %s59, %s60
    %p62 = scmp.eq.s32.totalorder %s61, 0
    %s64 = sadd.s32 %s63, 1
    %s65 = scalar_select %p62, %s63, %s64
    %p68 = pneg %p62
    %p69 = scmp.eq.s32.totalorder %s11, 1
    %p70 = por %p68, %p69
    %p71 = scmp.ne.s32.totalorder %s63, %s66
    %p72 = scmp.eq.s32.totalorder %s11, 0
    %p73 = por %p71, %p72
    %p74 = scmp.ne.s32.totalorder %s63, %s66
    %p75 = scmp.eq.s32.totalorder %s16, 1
    %p76 = por %p74, %p75
    %p77 = scmp.ne.s32.totalorder %s66, %s67
    %p78 = scmp.eq.s32.totalorder %s16, 0
    %p79 = por %p77, %p78
    %p80 = scmp.ne.s32.totalorder %s66, %s67
    %p81 = scmp.eq.s32.totalorder %s17, 1
    %p82 = por %p80, %p81
    %p84 = scmp.ne.s32.totalorder %s67, %s83
    %p85 = scmp.eq.s32.totalorder %s17, 0
    %p86 = por %p84, %p85
    %s88 = sadd.s32 %s87, 1
    %p91 = scmp.eq.s32.totalorder %s11, 1
    %p92 = scmp.ne.s32.totalorder %s87, %s89
    %p93 = scmp.eq.s32.totalorder %s11, 0
    %p94 = por %p92, %p93
    %p95 = scmp.ne.s32.totalorder %s87, %s89
    %p96 = scmp.eq.s32.totalorder %s16, 1
    %p97 = por %p95, %p96
    %p98 = scmp.ne.s32.totalorder %s89, %s90
    %p99 = scmp.eq.s32.totalorder %s16, 0
    %p100 = por %p98, %p99
    %p101 = scmp.ne.s32.totalorder %s89, %s90
    %p102 = scmp.eq.s32.totalorder %s17, 1
    %p103 = por %p101, %p102
    %p105 = scmp.ne.s32.totalorder %s90, %s104
    %p106 = scmp.eq.s32.totalorder %s17, 0
    %p107 = por %p105, %p106
    %s109 = sadd.s32 %s108, 1
    %p112 = scmp.eq.s32.totalorder %s11, 1
    %p113 = scmp.ne.s32.totalorder %s108, %s110
    %p114 = scmp.eq.s32.totalorder %s11, 0
    %p115 = por %p113, %p114
    %p116 = scmp.ne.s32.totalorder %s108, %s110
    %p117 = scmp.eq.s32.totalorder %s16, 1
    %p118 = por %p116, %p117
    %p119 = scmp.ne.s32.totalorder %s110, %s111
    %p120 = scmp.eq.s32.totalorder %s16, 0
    %p121 = por %p119, %p120
    %p122 = scmp.ne.s32.totalorder %s110, %s111
    %p123 = scmp.eq.s32.totalorder %s17, 1
    %p124 = por %p122, %p123
    %p126 = scmp.ne.s32.totalorder %s111, %s125
    %p127 = scmp.eq.s32.totalorder %s17, 0
    %p128 = por %p126, %p127
    %s130 = sadd.s32 %s129, 1
    %p133 = scmp.eq.s32.totalorder %s11, 1
    %p134 = scmp.ne.s32.totalorder %s129, %s131
    %p135 = scmp.eq.s32.totalorder %s11, 0
    %p136 = por %p134, %p135
    %p137 = scmp.ne.s32.totalorder %s129, %s131
    %p138 = scmp.eq.s32.totalorder %s16, 1
    %p139 = por %p137, %p138
    %p140 = scmp.ne.s32.totalorder %s131, %s132
    %p141 = scmp.eq.s32.totalorder %s16, 0
    %p142 = por %p140, %p141
    %p143 = scmp.ne.s32.totalorder %s131, %s132
    %p144 = scmp.eq.s32.totalorder %s17, 1
    %p145 = por %p143, %p144
    %p147 = scmp.ne.s32.totalorder %s132, %s146
    %p148 = scmp.eq.s32.totalorder %s17, 0
    %p149 = por %p147, %p148
    %s150 = ssub.s32 %s18, %s30
    %s151 = ssub.s32 %s19, %s26
    %s152 = sor.u32 %s150, %s151
    %p153 = scmp.eq.s32.totalorder %s152, 0
    %s155 = sadd.s32 %s154, 1
    %s156 = scalar_select %p153, %s154, %s155
    %p159 = pneg %p153
    %p160 = scmp.eq.s32.totalorder %s11, 1
    %p161 = por %p159, %p160
    %p162 = scmp.ne.s32.totalorder %s154, %s157
    %p163 = scmp.eq.s32.totalorder %s11, 0
    %p164 = por %p162, %p163
    %p165 = scmp.ne.s32.totalorder %s154, %s157
    %p166 = scmp.eq.s32.totalorder %s16, 1
    %p167 = por %p165, %p166
    %p168 = scmp.ne.s32.totalorder %s157, %s158
    %p169 = scmp.eq.s32.totalorder %s16, 0
    %p170 = por %p168, %p169
    %p171 = scmp.ne.s32.totalorder %s157, %s158
    %p172 = scmp.eq.s32.totalorder %s17, 1
    %p173 = por %p171, %p172
    %p175 = scmp.ne.s32.totalorder %s158, %s174
    %p176 = scmp.eq.s32.totalorder %s17, 0
    %p177 = por %p175, %p176
    %p178 = scmp.le.s32.totalorder 1, %s11
    %p179 = scmp.lt.s32.totalorder %s11, 3
    %p180 = pnand %p178, %p179
    %p181 = pneg %p180
    // Predicated region
    $region9: #{c2f_v2_pallas.5} parent=5 // pred_check
      _
    $region10: #{c2f_v2_pallas.5} parent=5 // pred_check_branch
      %183 = sbr.rel (%p180) target = $region12
    $region11: #{c2f_v2_pallas.5} parent=5 // pred_region
      %s184 = ssub.s32 %s11, 1
      // Predicated region
      $region13: #{c2f_v2_pallas.5} parent=11 // pred_check
        %p185 = pneg %p100
      $region14: #{c2f_v2_pallas.5} parent=11 // pred_check_branch
        %187 = sbr.rel (%p185) target = $region16
      $region15: #{c2f_v2_pallas.5} parent=11 // pred_region
        _
      $region16: #{c2f_v2_pallas.5} parent=11 // pred_fallthru
        _
      // Predicated region
      $region17: #{c2f_v2_pallas.5} parent=11 // pred_check
        %p188 = pneg %p121
      $region18: #{c2f_v2_pallas.5} parent=11 // pred_check_branch
        %190 = sbr.rel (%p188) target = $region20
      $region19: #{c2f_v2_pallas.5} parent=11 // pred_region
        _
      $region20: #{c2f_v2_pallas.5} parent=11 // pred_fallthru
        _
      // Predicated region
      $region21: #{c2f_v2_pallas.5} parent=11 // pred_check
        %p191 = pneg %p142
      $region22: #{c2f_v2_pallas.5} parent=11 // pred_check_branch
        %193 = sbr.rel (%p191) target = $region24
      $region23: #{c2f_v2_pallas.5} parent=11 // pred_region
        _
      $region24: #{c2f_v2_pallas.5} parent=11 // pred_fallthru
        _
    $region12: #{c2f_v2_pallas.5} parent=5 // pred_fallthru
      _
    %p194 = scmp.lt.s32.totalorder %s11, 2
    // Predicated region
    $region25: #{c2f_v2_pallas.5} parent=5 // pred_check
      %p195 = pneg %p194
    $region26: #{c2f_v2_pallas.5} parent=5 // pred_check_branch
      %197 = sbr.rel (%p195) target = $region28
    $region27: #{c2f_v2_pallas.5} parent=5 // pred_region
      // Predicated region
      $region29: #{c2f_v2_pallas.5} parent=27 // pred_check
        %p198 = pneg %p45
      $region30: #{c2f_v2_pallas.5} parent=27 // pred_check_branch
        %200 = sbr.rel (%p198) target = $region32
      $region31: #{c2f_v2_pallas.5} parent=27 // pred_region
        %s201 = smul.u32 2, %s19
        %p202 = scmp.lt.s32.totalorder %s18, 1
        %s203 = scalar_select %p202, %s18, 1
        %p204 = scmp.lt.s32.totalorder %s201, 1
        %s205 = scalar_select %p204, %s201, 1
        %s206 = smul.addr %s203, 2
        %s207 = sadd.s32 %s205, %s206
        %s208 = smul.addr %s207, 8
        %s209 = scalar_lea.vmem %s0, %s208
        %s210 = smul.u32 2, %s19
      $region32: #{c2f_v2_pallas.5} parent=27 // pred_fallthru
        _
      // Predicated region
      $region33: #{c2f_v2_pallas.5} parent=27 // pred_check
        %p211 = pneg %p73
      $region34: #{c2f_v2_pallas.5} parent=27 // pred_check_branch
        %213 = sbr.rel (%p211) target = $region36
      $region35: #{c2f_v2_pallas.5} parent=27 // pred_region
        %s214 = smul.u32 2, %s19
        %p215 = scmp.lt.s32.totalorder %s18, 1
        %s216 = scalar_select %p215, %s18, 1
        %p217 = scmp.lt.s32.totalorder %s214, 1
        %s218 = scalar_select %p217, %s214, 1
        %s219 = smul.addr %s216, 2
        %s220 = sadd.s32 %s218, %s219
        %s221 = smul.addr %s220, 4
        %s222 = scalar_lea.vmem %s1, %s221
        %s223 = smul.u32 2, %s19
      $region36: #{c2f_v2_pallas.5} parent=27 // pred_fallthru
        _
    $region28: #{c2f_v2_pallas.5} parent=5 // pred_fallthru
      _
    %p224 = scmp.le.s32.totalorder 1, %s11
    %p225 = scmp.lt.s32.totalorder %s11, 3
    %p226 = pnand %p224, %p225
    %p227 = pneg %p226
    // Predicated region
    $region37: #{c2f_v2_pallas.5} parent=5 // pred_check
      _
    $region38: #{c2f_v2_pallas.5} parent=5 // pred_check_branch
      %229 = sbr.rel (%p226) target = $region40
    $region39: #{c2f_v2_pallas.5} parent=5 // pred_region
      %s230 = ssub.s32 %s11, 1
      %s231 = smul.u32 2, %s21
      %p232 = scmp.lt.s32.totalorder %s20, 1
      %s233 = scalar_select %p232, %s20, 1
      %p234 = scmp.lt.s32.totalorder %s231, 1
      %s235 = scalar_select %p234, %s231, 1
      %s236 = smul.addr %s233, 2
      %s237 = sadd.s32 %s235, %s236
      %s238 = smul.addr %s237, 8
      %s239 = scalar_lea.vmem %s0, %s238
      %p240 = pneg %p51
      %p241 = pneg %p48
      %s242 = smul.u32 2, %s21
      %p243 = scmp.lt.s32.totalorder %s20, 1
      %s244 = scalar_select %p243, %s20, 1
      %p245 = scmp.lt.s32.totalorder %s242, 1
      %s246 = scalar_select %p245, %s242, 1
      %s247 = smul.addr %s244, 2
      %s248 = sadd.s32 %s246, %s247
      %s249 = smul.addr %s248, 4
      %s250 = scalar_lea.vmem %s1, %s249
      %p251 = pneg %p79
      %p252 = pneg %p76
      %p253 = pneg %p100
      %p254 = pneg %p97
      %p255 = pneg %p121
      %p256 = pneg %p118
      %p257 = pneg %p142
      %p258 = pneg %p139
      %p259 = pneg %p170
      %p260 = pneg %p167
      %s261 = smul.u32 2, %s21
      %p262 = scmp.lt.s32.totalorder %s20, 1
      %s263 = scalar_select %p262, %s20, 1
      %p264 = scmp.lt.s32.totalorder %s261, 1
      %s265 = scalar_select %p264, %s261, 1
      %s266 = smul.addr %s263, 2
      %s267 = sadd.s32 %s265, %s266
      %s268 = smul.addr %s267, 8
      %s269 = scalar_lea.vmem %s5, %s268
      %s270 = smul.u32 2, %s21
      %p271 = scmp.lt.s32.totalorder %s20, 1
      %s272 = scalar_select %p271, %s20, 1
      %p273 = scmp.lt.s32.totalorder %s270, 1
      %s274 = scalar_select %p273, %s270, 1
      %s275 = smul.addr %s272, 2
      %s276 = sadd.s32 %s274, %s275
      %s277 = smul.addr %s276, 8
      %s278 = scalar_lea.vmem %s0, %s277
      %s279 = smul.u32 2, %s21
      %s280 = smul.u32 2, %s21
      %p281 = scmp.lt.s32.totalorder %s20, 1
      %s282 = scalar_select %p281, %s20, 1
      %p283 = scmp.lt.s32.totalorder %s280, 1
      %s284 = scalar_select %p283, %s280, 1
      %s285 = smul.addr %s282, 2
      %s286 = sadd.s32 %s284, %s285
      %s287 = smul.addr %s286, 4
      %s288 = scalar_lea.vmem %s1, %s287
      %s289 = smul.u32 2, %s21
      %s290 = smul.u32 2, %s21
      %p291 = scmp.lt.s32.totalorder %s20, 1
      %s292 = scalar_select %p291, %s20, 1
      %p293 = scmp.lt.s32.totalorder %s290, 1
      %s294 = scalar_select %p293, %s290, 1
      %s295 = smul.addr %s292, 2
      %s296 = sadd.s32 %s294, %s295
      %s297 = smul.addr %s296, 8
      %s298 = scalar_lea.vmem %s5, %s297
      %s299 = smul.u32 2, %s21
      %v300 = vld [vmem:[%s2] sm:$0xff]
      %v301 = vld [vmem:[%s278] sm:$0xff]
      %v302 = vld [vmem:[%s278 + $0x8] sm:$0xff]
      %v303 = vld [vmem:[%s3] sm:$0xff]
      %v304 = vld [vmem:[%s288] sm:$0xff]
      %v306 = vcombine.high %v304, %v304
      %vm307 = vcmask 31744
      %v309 = vsel %vm307, %v303, 0
      %vm311 = vcmask 1043456
      %v312 = vsel %vm311, %v304, 0
      %v314 = vsel %vm311, %v306, 0
      %316 = vmatprep.subr.mxu0 %v314
      %317 = vmatpush1.msra.mxu0 %v312
      %318 = vmatprep.subr.mxu0 0.0
      %319 = vmatpush1.msra.mxu0 0.0
      %320 = vmatprep.subr.mxu0 0.0
      %321 = vmatpush1.msra.mxu0 0.0
      %322 = vmatprep.subr.mxu0 0.0
      %323 = vmatpush1.msra.mxu0 0.0
      %324 = vmatprep.subr.mxu0 0.0
      %325 = vmatpush1.msra.mxu0 0.0
      %326 = vmatprep.subr.mxu0 0.0
      %327 = vmatpush1.msra.mxu0 0.0
      %328 = vmatprep.subr.mxu0 0.0
      %329 = vmatpush1.msra.mxu0 0.0
      %330 = vmatprep.subr.mxu0 0.0
      %331 = vmatpush1.msra.mxu0 0.0
      %332 = vmatprep.subr.mxu0 0.0
      %333 = vmatpush1.msra.mxu0 0.0
      %334 = vmatprep.subr.mxu0 0.0
      %335 = vmatpush1.msra.mxu0 0.0
      %336 = vmatprep.subr.mxu0 0.0
      %337 = vmatpush1.msra.mxu0 0.0
      %338 = vmatprep.subr.mxu0 0.0
      %339 = vmatpush1.msra.mxu0 0.0
      %340 = vmatprep.subr.mxu0 0.0
      %341 = vmatpush1.msra.mxu0 0.0
      %342 = vmatprep.subr.mxu0 0.0
      %343 = vmatpush1.msra.mxu0 0.0
      %344 = vmatprep.subr.mxu0 0.0
      %345 = vmatpush1.msra.mxu0 0.0
      %346 = vmatprep.subr.mxu0 0.0
      %347 = vmatpush1.msra.mxu0 0.0
      %348 = vmatprep.subr.mxu0 0.0
      %349 = vmatpush1.msra.mxu0 0.0
      %350 = vmatprep.subr.mxu0 0.0
      %351 = vmatpush1.msra.mxu0 0.0
      %352 = vmatprep.subr.mxu0 0.0
      %353 = vmatpush1.msra.mxu0 0.0
      %354 = vmatprep.subr.mxu0 0.0
      %355 = vmatpush1.msra.mxu0 0.0
      %356 = vmatprep.subr.mxu0 0.0
      %357 = vmatpush1.msra.mxu0 0.0
      %358 = vmatprep.subr.mxu0 0.0
      %359 = vmatpush1.msra.mxu0 0.0
      %360 = vmatprep.subr.mxu0 0.0
      %361 = vmatpush1.msra.mxu0 0.0
      %362 = vmatprep.subr.mxu0 0.0
      %363 = vmatpush1.msra.mxu0 0.0
      %364 = vmatprep.subr.mxu0 0.0
      %365 = vmatpush1.msra.mxu0 0.0
      %366 = vmatprep.subr.mxu0 0.0
      %367 = vmatpush1.msra.mxu0 0.0
      %368 = vmatprep.subr.mxu0 0.0
      %369 = vmatpush1.msra.mxu0 0.0
      %370 = vmatprep.subr.mxu0 0.0
      %371 = vmatpush1.msra.mxu0 0.0
      %372 = vmatprep.subr.mxu0 0.0
      %373 = vmatpush1.msra.mxu0 0.0
      %374 = vmatprep.subr.mxu0 0.0
      %375 = vmatpush1.msra.mxu0 0.0
      %376 = vmatprep.subr.mxu0 0.0
      %377 = vmatpush1.msra.mxu0 0.0
      %378 = vmatprep.subr.mxu0 0.0
      %379 = vmatpush1.msra.mxu0 0.0
      %380 = vmatprep.mubr.f32.mxu0 0.0
      %381 = vmatmul.mubr.f32.gmra.mrb[0].mxu0 %v309
      %v382 = vpop.f32.mrb[0].mxu0
      %v383 = vadd.f32 0.0, %v382
      %v384 = vpop.f32.mrb[0].mxu0
      %v385 = vadd.f32 0.0, %v384
      %386 = vdwg.mxu0
      %vm387 = vcmask 64512
      %v389 = vsel %vm387, %v300, 0
      %391 = vmatprep.subr.mxu0 %v302
      %392 = vmatpush1.msra.mxu0 %v301
      %393 = vmatprep.subr.mxu0 0.0
      %394 = vmatpush1.msra.mxu0 0.0
      %395 = vmatprep.subr.mxu0 0.0
      %396 = vmatpush1.msra.mxu0 0.0
      %397 = vmatprep.subr.mxu0 0.0
      %398 = vmatpush1.msra.mxu0 0.0
      %399 = vmatprep.subr.mxu0 0.0
      %400 = vmatpush1.msra.mxu0 0.0
      %401 = vmatprep.subr.mxu0 0.0
      %402 = vmatpush1.msra.mxu0 0.0
      %403 = vmatprep.subr.mxu0 0.0
      %404 = vmatpush1.msra.mxu0 0.0
      %405 = vmatprep.subr.mxu0 0.0
      %406 = vmatpush1.msra.mxu0 0.0
      %407 = vmatprep.subr.mxu0 0.0
      %408 = vmatpush1.msra.mxu0 0.0
      %409 = vmatprep.subr.mxu0 0.0
      %410 = vmatpush1.msra.mxu0 0.0
      %411 = vmatprep.subr.mxu0 0.0
      %412 = vmatpush1.msra.mxu0 0.0
      %413 = vmatprep.subr.mxu0 0.0
      %414 = vmatpush1.msra.mxu0 0.0
      %415 = vmatprep.subr.mxu0 0.0
      %416 = vmatpush1.msra.mxu0 0.0
      %417 = vmatprep.subr.mxu0 0.0
      %418 = vmatpush1.msra.mxu0 0.0
      %419 = vmatprep.subr.mxu0 0.0
      %420 = vmatpush1.msra.mxu0 0.0
      %421 = vmatprep.subr.mxu0 0.0
      %422 = vmatpush1.msra.mxu0 0.0
      %423 = vmatprep.subr.mxu0 0.0
      %424 = vmatpush1.msra.mxu0 0.0
      %425 = vmatprep.subr.mxu0 0.0
      %426 = vmatpush1.msra.mxu0 0.0
      %427 = vmatprep.subr.mxu0 0.0
      %428 = vmatpush1.msra.mxu0 0.0
      %429 = vmatprep.subr.mxu0 0.0
      %430 = vmatpush1.msra.mxu0 0.0
      %431 = vmatprep.subr.mxu0 0.0
      %432 = vmatpush1.msra.mxu0 0.0
      %433 = vmatprep.subr.mxu0 0.0
      %434 = vmatpush1.msra.mxu0 0.0
      %435 = vmatprep.subr.mxu0 0.0
      %436 = vmatpush1.msra.mxu0 0.0
      %437 = vmatprep.subr.mxu0 0.0
      %438 = vmatpush1.msra.mxu0 0.0
      %439 = vmatprep.subr.mxu0 0.0
      %440 = vmatpush1.msra.mxu0 0.0
      %441 = vmatprep.subr.mxu0 0.0
      %442 = vmatpush1.msra.mxu0 0.0
      %443 = vmatprep.subr.mxu0 0.0
      %444 = vmatpush1.msra.mxu0 0.0
      %445 = vmatprep.subr.mxu0 0.0
      %446 = vmatpush1.msra.mxu0 0.0
      %447 = vmatprep.subr.mxu0 0.0
      %448 = vmatpush1.msra.mxu0 0.0
      %449 = vmatprep.subr.mxu0 0.0
      %450 = vmatpush1.msra.mxu0 0.0
      %451 = vmatprep.subr.mxu0 0.0
      %452 = vmatpush1.msra.mxu0 0.0
      %453 = vmatprep.subr.mxu0 0.0
      %454 = vmatpush1.msra.mxu0 0.0
      %455 = vmatprep.mubr.f32.mxu0 0.0
      %456 = vmatmul.mubr.f32.gmra.mrb[0].mxu0 %v389
      %v457 = vpop.f32.mrb[0].mxu0
      %v458 = vadd.f32 %v383, %v457
      %v459 = vpop.f32.mrb[0].mxu0
      %v460 = vadd.f32 %v385, %v459
      %461 = vdwg.mxu0
      %v462 = vld [vmem:[%s4] sm:$0xff]
      %464 = vset.pattern.permute.xlu0 0
      %465 = vperm.xlu0 %464, %v462
      %v466 = vpop.permute.xlu0 %465
      %v468 = vadd.f32 %v458, %v466
      %v469 = vadd.f32 %v460, %v466
      %v470 = vsub.f32 0.0, %v468
      %v471 = vsub.f32 0.0, %v469
      %v472 = vmul.f32 %v470, 1.442695
      %v473 = vpow.pop %v472
      %v474 = vmul.f32 %v471, 1.442695
      %v475 = vpow.pop %v474
      %v476 = vadd.f32 %v473, 1.0
      %v477 = vadd.f32 %v475, 1.0
      %v478 = vrcp.pop %v476
      %v479 = vmul.f32 1.0, %v478
      %v480 = vrcp.pop %v477
      %v481 = vmul.f32 1.0, %v480
      %v482 = vmul.f32 %v468, %v479
      %v483 = vmul.f32 %v469, %v481
      %484 = vst [vmem:[%s298] sm:$0xff] %v482
      %485 = vst [vmem:[%s298 + $0x8] sm:$0xff] %v483
      %s486 = smul.u32 2, %s21
      %p487 = scmp.lt.s32.totalorder %s20, 1
      %s488 = scalar_select %p487, %s20, 1
      %p489 = scmp.lt.s32.totalorder %s486, 1
      %s490 = scalar_select %p489, %s486, 1
      %s491 = smul.addr %s488, 2
      %s492 = sadd.s32 %s490, %s491
      %s493 = smul.addr %s492, 8
      %s494 = scalar_lea.vmem %s5, %s493
      // Predicated region
      $region41: #{c2f_v2_pallas.5} parent=39 // pred_check
        %p495 = pneg %p167
      $region42: #{c2f_v2_pallas.5} parent=39 // pred_check_branch
        %497 = sbr.rel (%p495) target = $region44
      $region43: #{c2f_v2_pallas.5} parent=39 // pred_region
        %s498 = smul.u32 2, %s21
      $region44: #{c2f_v2_pallas.5} parent=39 // pred_fallthru
        _
    $region40: #{c2f_v2_pallas.5} parent=5 // pred_fallthru
      _
    %p499 = scmp.le.s32.totalorder 2, %s11
    // Predicated region
    $region45: #{c2f_v2_pallas.5} parent=5 // pred_check
      %p500 = pneg %p499
    $region46: #{c2f_v2_pallas.5} parent=5 // pred_check_branch
      %502 = sbr.rel (%p500) target = $region48
    $region47: #{c2f_v2_pallas.5} parent=5 // pred_region
      %s503 = ssub.s32 %s11, 2
      // Predicated region
      $region49: #{c2f_v2_pallas.5} parent=47 // pred_check
        %p504 = pneg %p173
      $region50: #{c2f_v2_pallas.5} parent=47 // pred_check_branch
        %506 = sbr.rel (%p504) target = $region52
      $region51: #{c2f_v2_pallas.5} parent=47 // pred_region
        %s507 = smul.u32 2, %s23
        %p508 = scmp.lt.s32.totalorder %s22, 1
        %s509 = scalar_select %p508, %s22, 1
        %p510 = scmp.lt.s32.totalorder %s507, 1
        %s511 = scalar_select %p510, %s507, 1
        %s512 = smul.addr %s509, 2
        %s513 = sadd.s32 %s511, %s512
        %s514 = smul.addr %s513, 8
        %s515 = scalar_lea.vmem %s5, %s514
      $region52: #{c2f_v2_pallas.5} parent=47 // pred_fallthru
        _
    $region48: #{c2f_v2_pallas.5} parent=5 // pred_fallthru
      _
  $region6: #{c2f_v2_pallas.5} parent=0 // loop_footer
    %s15 = sadd.s32 1, %s11
  $region7: #{c2f_v2_pallas.5} parent=0 // loop_footer_branch
    %10 = sbr.rel target = $region3
  $region8: #{c2f_v2_pallas.5} parent=0 // loop_exit
    _

// kernel: c2f_v2_pallas.4
$region0: #{c2f_v2_pallas.4}
  #allocation0 [shape = 'u32[]', space=smem, size = 0x4, offset = 0x4, fixed_abs, tag = 'smem constant byte address 0x4 - core index']
  #allocation1 [shape = 'u32[144,128]{1,0:T(1,128)}', space=vmem, size = 0x12000, scoped, tag = 'internal scratch']
  #allocation2 [shape = 'f32[4,342]{1,0:T(4,128)}', space=vmem, size = 0x1800, scoped, tag = 'scratch operand']
  #allocation3 [shape = 'f32[4,342]{1,0:T(4,128)}', space=vmem, size = 0x1800, scoped, tag = 'scratch operand']
  %s0 = inlined_call_operand.vmem [shape: f32[2,8,256], index: 0, kind: input, shape index: {}]
  %s1 = inlined_call_operand.vmem [shape: f32[9,4,4], index: 1, kind: input, shape index: {}]
  %s2 = inlined_call_operand.vmem [shape: f32[4,1], index: 2, kind: input, shape index: {}]
  %s3 = inlined_call_operand.vmem [shape: f32[9,4,4], index: 3, kind: input, shape index: {}]
  %s4 = inlined_call_operand.vmem [shape: f32[4,1], index: 4, kind: input, shape index: {}]
  %s5 = inlined_call_operand.vmem [shape: f32[1,288], index: 5, kind: input, shape index: {}]
  %s6 = inlined_call_operand.vmem [shape: f32[2,4,256], index: 6, kind: output, shape index: {}]
  %s7 = sld [smem:[#allocation0]]
  $region57: #{c2f_v2_pallas.4} parent=0
    _
  %s9 = ssub.s32 1, %s7
  %s10 = scalar_select 0, %s9, %s7
  loop: start=0, step=1, limit=4
  $region2: #{c2f_v2_pallas.4} parent=0 // loop_pre_header
    _
  $region3: #{c2f_v2_pallas.4} parent=0 // loop_header
    %s12 = sphi 0, %s16
    %p13 = scmp.ge.s32.totalorder %s12, 4
    %s22 = sphi 0, %s24
    %s25 = sphi 0, %s22
    %s26 = sphi 0, %s25
    %s42 = sphi 0, %s26
    %s46 = sphi 0, %s46
    %s48 = sphi 0, %s46
    %s49 = sphi 0, %s48
    %s63 = sphi 0, %s49
    %s67 = sphi 0, %s67
    %s69 = sphi 0, %s67
    %s70 = sphi 0, %s69
    %s84 = sphi 0, %s70
    %s88 = sphi 0, %s88
    %s90 = sphi 0, %s88
    %s91 = sphi 0, %s90
    %s105 = sphi 0, %s91
    %s109 = sphi 0, %s109
    %s111 = sphi 0, %s109
    %s112 = sphi 0, %s111
    %s126 = sphi 0, %s112
    %s130 = sphi 0, %s130
    %s132 = sphi 0, %s130
    %s133 = sphi 0, %s132
    %s147 = sphi 0, %s133
    %s153 = sphi 0, %s155
    %s156 = sphi 0, %s153
    %s157 = sphi 0, %s156
    %s173 = sphi 0, %s157
  $region4: #{c2f_v2_pallas.4} parent=0 // loop_header_branch
    %15 = sbr.rel (%p13) target = $region8
  $region5: #{c2f_v2_pallas.4} parent=0 // loop_body
    %s17 = ssub.s32 %s12, 1
    %s18 = ssub.s32 %s12, 2
    %s19 = sadd.s32 %s12, 1
    %s20 = ssub.s32 %s12, %s19
    %p21 = scmp.eq.s32.totalorder %s20, 0
    %s23 = sadd.s32 %s22, 1
    %s24 = scalar_select %p21, %s22, %s23
    %p27 = pneg %p21
    %p28 = scmp.eq.s32.totalorder %s12, 1
    %p29 = por %p27, %p28
    %p30 = scmp.ne.s32.totalorder %s22, %s25
    %p31 = scmp.eq.s32.totalorder %s12, 0
    %p32 = por %p30, %p31
    %p33 = scmp.ne.s32.totalorder %s22, %s25
    %p34 = scmp.eq.s32.totalorder %s17, 1
    %p35 = por %p33, %p34
    %p36 = scmp.ne.s32.totalorder %s25, %s26
    %p37 = scmp.eq.s32.totalorder %s17, 0
    %p38 = por %p36, %p37
    %p39 = scmp.ne.s32.totalorder %s25, %s26
    %p40 = scmp.eq.s32.totalorder %s18, 1
    %p41 = por %p39, %p40
    %p43 = scmp.ne.s32.totalorder %s26, %s42
    %p44 = scmp.eq.s32.totalorder %s18, 0
    %p45 = por %p43, %p44
    %s47 = sadd.s32 %s46, 1
    %p50 = scmp.eq.s32.totalorder %s12, 1
    %p51 = scmp.ne.s32.totalorder %s46, %s48
    %p52 = scmp.eq.s32.totalorder %s12, 0
    %p53 = por %p51, %p52
    %p54 = scmp.ne.s32.totalorder %s46, %s48
    %p55 = scmp.eq.s32.totalorder %s17, 1
    %p56 = por %p54, %p55
    %p57 = scmp.ne.s32.totalorder %s48, %s49
    %p58 = scmp.eq.s32.totalorder %s17, 0
    %p59 = por %p57, %p58
    %p60 = scmp.ne.s32.totalorder %s48, %s49
    %p61 = scmp.eq.s32.totalorder %s18, 1
    %p62 = por %p60, %p61
    %p64 = scmp.ne.s32.totalorder %s49, %s63
    %p65 = scmp.eq.s32.totalorder %s18, 0
    %p66 = por %p64, %p65
    %s68 = sadd.s32 %s67, 1
    %p71 = scmp.eq.s32.totalorder %s12, 1
    %p72 = scmp.ne.s32.totalorder %s67, %s69
    %p73 = scmp.eq.s32.totalorder %s12, 0
    %p74 = por %p72, %p73
    %p75 = scmp.ne.s32.totalorder %s67, %s69
    %p76 = scmp.eq.s32.totalorder %s17, 1
    %p77 = por %p75, %p76
    %p78 = scmp.ne.s32.totalorder %s69, %s70
    %p79 = scmp.eq.s32.totalorder %s17, 0
    %p80 = por %p78, %p79
    %p81 = scmp.ne.s32.totalorder %s69, %s70
    %p82 = scmp.eq.s32.totalorder %s18, 1
    %p83 = por %p81, %p82
    %p85 = scmp.ne.s32.totalorder %s70, %s84
    %p86 = scmp.eq.s32.totalorder %s18, 0
    %p87 = por %p85, %p86
    %s89 = sadd.s32 %s88, 1
    %p92 = scmp.eq.s32.totalorder %s12, 1
    %p93 = scmp.ne.s32.totalorder %s88, %s90
    %p94 = scmp.eq.s32.totalorder %s12, 0
    %p95 = por %p93, %p94
    %p96 = scmp.ne.s32.totalorder %s88, %s90
    %p97 = scmp.eq.s32.totalorder %s17, 1
    %p98 = por %p96, %p97
    %p99 = scmp.ne.s32.totalorder %s90, %s91
    %p100 = scmp.eq.s32.totalorder %s17, 0
    %p101 = por %p99, %p100
    %p102 = scmp.ne.s32.totalorder %s90, %s91
    %p103 = scmp.eq.s32.totalorder %s18, 1
    %p104 = por %p102, %p103
    %p106 = scmp.ne.s32.totalorder %s91, %s105
    %p107 = scmp.eq.s32.totalorder %s18, 0
    %p108 = por %p106, %p107
    %s110 = sadd.s32 %s109, 1
    %p113 = scmp.eq.s32.totalorder %s12, 1
    %p114 = scmp.ne.s32.totalorder %s109, %s111
    %p115 = scmp.eq.s32.totalorder %s12, 0
    %p116 = por %p114, %p115
    %p117 = scmp.ne.s32.totalorder %s109, %s111
    %p118 = scmp.eq.s32.totalorder %s17, 1
    %p119 = por %p117, %p118
    %p120 = scmp.ne.s32.totalorder %s111, %s112
    %p121 = scmp.eq.s32.totalorder %s17, 0
    %p122 = por %p120, %p121
    %p123 = scmp.ne.s32.totalorder %s111, %s112
    %p124 = scmp.eq.s32.totalorder %s18, 1
    %p125 = por %p123, %p124
    %p127 = scmp.ne.s32.totalorder %s112, %s126
    %p128 = scmp.eq.s32.totalorder %s18, 0
    %p129 = por %p127, %p128
    %s131 = sadd.s32 %s130, 1
    %p134 = scmp.eq.s32.totalorder %s12, 1
    %p135 = scmp.ne.s32.totalorder %s130, %s132
    %p136 = scmp.eq.s32.totalorder %s12, 0
    %p137 = por %p135, %p136
    %p138 = scmp.ne.s32.totalorder %s130, %s132
    %p139 = scmp.eq.s32.totalorder %s17, 1
    %p140 = por %p138, %p139
    %p141 = scmp.ne.s32.totalorder %s132, %s133
    %p142 = scmp.eq.s32.totalorder %s17, 0
    %p143 = por %p141, %p142
    %p144 = scmp.ne.s32.totalorder %s132, %s133
    %p145 = scmp.eq.s32.totalorder %s18, 1
    %p146 = por %p144, %p145
    %p148 = scmp.ne.s32.totalorder %s133, %s147
    %p149 = scmp.eq.s32.totalorder %s18, 0
    %p150 = por %p148, %p149
    %s151 = ssub.s32 %s12, %s19
    %p152 = scmp.eq.s32.totalorder %s151, 0
    %s154 = sadd.s32 %s153, 1
    %s155 = scalar_select %p152, %s153, %s154
    %p158 = pneg %p152
    %p159 = scmp.eq.s32.totalorder %s12, 1
    %p160 = por %p158, %p159
    %p161 = scmp.ne.s32.totalorder %s153, %s156
    %p162 = scmp.eq.s32.totalorder %s12, 0
    %p163 = por %p161, %p162
    %p164 = scmp.ne.s32.totalorder %s153, %s156
    %p165 = scmp.eq.s32.totalorder %s17, 1
    %p166 = por %p164, %p165
    %p167 = scmp.ne.s32.totalorder %s156, %s157
    %p168 = scmp.eq.s32.totalorder %s17, 0
    %p169 = por %p167, %p168
    %p170 = scmp.ne.s32.totalorder %s156, %s157
    %p171 = scmp.eq.s32.totalorder %s18, 1
    %p172 = por %p170, %p171
    %p174 = scmp.ne.s32.totalorder %s157, %s173
    %p175 = scmp.eq.s32.totalorder %s18, 0
    %p176 = por %p174, %p175
    %p177 = scmp.le.s32.totalorder 1, %s12
    %p178 = scmp.lt.s32.totalorder %s12, 3
    %p179 = pnand %p177, %p178
    %p180 = pneg %p179
    // Predicated region
    $region9: #{c2f_v2_pallas.4} parent=5 // pred_check
      _
    $region10: #{c2f_v2_pallas.4} parent=5 // pred_check_branch
      %182 = sbr.rel (%p179) target = $region12
    $region11: #{c2f_v2_pallas.4} parent=5 // pred_region
      %s183 = ssub.s32 %s12, 1
      // Predicated region
      $region13: #{c2f_v2_pallas.4} parent=11 // pred_check
        %p184 = pneg %p59
      $region14: #{c2f_v2_pallas.4} parent=11 // pred_check_branch
        %186 = sbr.rel (%p184) target = $region16
      $region15: #{c2f_v2_pallas.4} parent=11 // pred_region
        _
      $region16: #{c2f_v2_pallas.4} parent=11 // pred_fallthru
        _
      // Predicated region
      $region17: #{c2f_v2_pallas.4} parent=11 // pred_check
        %p187 = pneg %p80
      $region18: #{c2f_v2_pallas.4} parent=11 // pred_check_branch
        %189 = sbr.rel (%p187) target = $region20
      $region19: #{c2f_v2_pallas.4} parent=11 // pred_region
        _
      $region20: #{c2f_v2_pallas.4} parent=11 // pred_fallthru
        _
      // Predicated region
      $region21: #{c2f_v2_pallas.4} parent=11 // pred_check
        %p190 = pneg %p101
      $region22: #{c2f_v2_pallas.4} parent=11 // pred_check_branch
        %192 = sbr.rel (%p190) target = $region24
      $region23: #{c2f_v2_pallas.4} parent=11 // pred_region
        _
      $region24: #{c2f_v2_pallas.4} parent=11 // pred_fallthru
        _
      // Predicated region
      $region25: #{c2f_v2_pallas.4} parent=11 // pred_check
        %p193 = pneg %p122
      $region26: #{c2f_v2_pallas.4} parent=11 // pred_check_branch
        %195 = sbr.rel (%p193) target = $region28
      $region27: #{c2f_v2_pallas.4} parent=11 // pred_region
        _
      $region28: #{c2f_v2_pallas.4} parent=11 // pred_fallthru
        _
      // Predicated region
      $region29: #{c2f_v2_pallas.4} parent=11 // pred_check
        %p196 = pneg %p143
      $region30: #{c2f_v2_pallas.4} parent=11 // pred_check_branch
        %198 = sbr.rel (%p196) target = $region32
      $region31: #{c2f_v2_pallas.4} parent=11 // pred_region
        _
      $region32: #{c2f_v2_pallas.4} parent=11 // pred_fallthru
        _
    $region12: #{c2f_v2_pallas.4} parent=5 // pred_fallthru
      _
    %p199 = scmp.lt.s32.totalorder %s12, 2
    // Predicated region
    $region33: #{c2f_v2_pallas.4} parent=5 // pred_check
      %p200 = pneg %p199
    $region34: #{c2f_v2_pallas.4} parent=5 // pred_check_branch
      %202 = sbr.rel (%p200) target = $region36
    $region35: #{c2f_v2_pallas.4} parent=5 // pred_region
      // Predicated region
      $region37: #{c2f_v2_pallas.4} parent=35 // pred_check
        %p203 = pneg %p32
      $region38: #{c2f_v2_pallas.4} parent=35 // pred_check_branch
        %205 = sbr.rel (%p203) target = $region40
      $region39: #{c2f_v2_pallas.4} parent=35 // pred_region
        %p206 = scmp.lt.s32.totalorder %s12, 1
        %s207 = scalar_select %p206, %s12, 1
        %s208 = smul.addr %s207, 2
        %s209 = smul.addr %s208, 8
        %s210 = scalar_lea.vmem %s0, %s209
      $region40: #{c2f_v2_pallas.4} parent=35 // pred_fallthru
        _
    $region36: #{c2f_v2_pallas.4} parent=5 // pred_fallthru
      _
    %p211 = scmp.le.s32.totalorder 1, %s12
    %p212 = scmp.lt.s32.totalorder %s12, 3
    %p213 = pnand %p211, %p212
    %p214 = pneg %p213
    // Predicated region
    $region41: #{c2f_v2_pallas.4} parent=5 // pred_check
      _
    $region42: #{c2f_v2_pallas.4} parent=5 // pred_check_branch
      %216 = sbr.rel (%p213) target = $region44
    $region43: #{c2f_v2_pallas.4} parent=5 // pred_region
      %s217 = ssub.s32 %s12, 1
      %p218 = scmp.lt.s32.totalorder %s17, 1
      %s219 = scalar_select %p218, %s17, 1
      %s220 = smul.addr %s219, 2
      %s221 = smul.addr %s220, 8
      %s222 = scalar_lea.vmem %s0, %s221
      %p223 = pneg %p38
      %p224 = pneg %p35
      %p225 = pneg %p59
      %p226 = pneg %p56
      %p227 = pneg %p80
      %p228 = pneg %p77
      %p229 = pneg %p101
      %p230 = pneg %p98
      %p231 = pneg %p122
      %p232 = pneg %p119
      %p233 = pneg %p143
      %p234 = pneg %p140
      %p235 = pneg %p169
      %p236 = pneg %p166
      %p237 = scmp.lt.s32.totalorder %s17, 1
      %s238 = scalar_select %p237, %s17, 1
      %s239 = smul.addr %s238, 2
      %s240 = smul.addr %s239, 4
      %s241 = scalar_lea.vmem %s6, %s240
      %p242 = scmp.lt.s32.totalorder %s17, 1
      %s243 = scalar_select %p242, %s17, 1
      %s244 = smul.addr %s243, 2
      %s245 = smul.addr %s244, 8
      %s246 = scalar_lea.vmem %s0, %s245
      %p247 = scmp.lt.s32.totalorder %s17, 1
      %s248 = scalar_select %p247, %s17, 1
      %s249 = smul.addr %s248, 2
      %s250 = smul.addr %s249, 4
      %s251 = scalar_lea.vmem %s6, %s250
      %v252 = vld [vmem:[%s246] sm:$0xf0]
      %v253 = vld [vmem:[%s246 + $0x8] sm:$0xf0]
      %254 = vst [vmem:[#allocation2] sm:$0xff] 0.0
      %vm255 = vcmask 699392
      %256 = vst.msk [vmem:[#allocation2 + $0x8] sm:$0xf] %vm255, 0.0
      %v258 = vcombine.high %v252, %v252
      %259 = vrot.lane.b32.xlu0 %v258, 19
      %v260 = vpop.permute.xlu0 %259
      %vm262 = vcmask 281752
      %263 = vst.msk [vmem:[#allocation2] sm:$0xf] %vm262, %v260
      %264 = vrot.lane.b32.xlu0 %v258, 21
      %v265 = vpop.permute.xlu0 %264
      %vm267 = vcmask 429352
      %268 = vst.msk [vmem:[#allocation2] sm:$0xf] %vm267, %v265
      %269 = vrot.lane.b32.xlu0 %v258, 23
      %v270 = vpop.permute.xlu0 %269
      %vm272 = vcmask 576952
      %273 = vst.msk [vmem:[#allocation2] sm:$0xf] %vm272, %v270
      %274 = vrot.lane.b32.xlu0 %v258, 25
      %v275 = vpop.permute.xlu0 %274
      %vm277 = vcmask 724552
      %278 = vst.msk [vmem:[#allocation2] sm:$0xf] %vm277, %v275
      %279 = vrot.lane.b32.xlu0 %v258, 27
      %v280 = vpop.permute.xlu0 %279
      %vm282 = vcmask 872152
      %283 = vst.msk [vmem:[#allocation2] sm:$0xf] %vm282, %v280
      %284 = vrot.lane.b32.xlu0 %v258, 29
      %v285 = vpop.permute.xlu0 %284
      %vm287 = vcmask 1019752
      %288 = vst.msk [vmem:[#allocation2] sm:$0xf] %vm287, %v285
      %289 = vrot.lane.b32.xlu0 %v258, 31
      %v290 = vpop.permute.xlu0 %289
      %v291 = vrot.slane %v290, 4
      %vm292 = vcmask 252928
      %v293 = vsel %vm292, %v291, %v290
      %vm295 = vcmask 1044472
      %vm296 = vcmask 121860
      %vm297 = vmor %vm296, %vm295
      %298 = vst.msk [vmem:[#allocation2] sm:$0xff] %vm297, %v293
      %299 = vrot.lane.b32.xlu0 %v258, 33
      %v300 = vpop.permute.xlu0 %299
      %vm302 = vcmask 265352
      %303 = vst.msk [vmem:[#allocation2 + $0x4] sm:$0xf] %vm302, %v300
      %v305 = vcombine.high %v253, %v253
      %306 = vrot.lane.b32.xlu0 %v305, 35
      %v307 = vpop.permute.xlu0 %306
      %vm309 = vcmask 412952
      %310 = vst.msk [vmem:[#allocation2 + $0x4] sm:$0xf] %vm309, %v307
      %311 = vrot.lane.b32.xlu0 %v305, 37
      %v312 = vpop.permute.xlu0 %311
      %vm314 = vcmask 560552
      %315 = vst.msk [vmem:[#allocation2 + $0x4] sm:$0xf] %vm314, %v312
      %316 = vrot.lane.b32.xlu0 %v305, 39
      %v317 = vpop.permute.xlu0 %316
      %vm319 = vcmask 708152
      %320 = vst.msk [vmem:[#allocation2 + $0x4] sm:$0xf] %vm319, %v317
      %321 = vrot.lane.b32.xlu0 %v305, 41
      %v322 = vpop.permute.xlu0 %321
      %vm324 = vcmask 855752
      %325 = vst.msk [vmem:[#allocation2 + $0x4] sm:$0xf] %vm324, %v322
      %326 = vrot.lane.b32.xlu0 %v305, 43
      %v327 = vpop.permute.xlu0 %326
      %vm329 = vcmask 1003352
      %330 = vst.msk [vmem:[#allocation2 + $0x4] sm:$0xf] %vm329, %v327
      %331 = vrot.lane.b32.xlu0 %v305, 45
      %v332 = vpop.permute.xlu0 %331
      %v333 = vrot.slane %v332, 4
      %vm334 = vcmask 367616
      %v335 = vsel %vm334, %v333, %v332
      %vm337 = vcmask 1044456
      %vm338 = vcmask 105476
      %vm339 = vmor %vm338, %vm337
      %340 = vst.msk [vmem:[#allocation2 + $0x4] sm:$0xff] %vm339, %v335
      %341 = vrot.lane.b32.xlu0 %v305, 47
      %v342 = vpop.permute.xlu0 %341
      %vm344 = vcmask 248952
      %345 = vst.msk [vmem:[#allocation2 + $0x8] sm:$0xf] %vm344, %v342
      %346 = vrot.lane.b32.xlu0 %v305, 49
      %v347 = vpop.permute.xlu0 %346
      %vm349 = vcmask 396552
      %350 = vst.msk [vmem:[#allocation2 + $0x8] sm:$0xf] %vm349, %v347
      %v351 = vld [vmem:[#allocation2] sm:$0xff]
      %v352 = vld [vmem:[#allocation2 + $0x8] sm:$0xf]
      %v353 = vld [vmem:[%s1] sm:$0xf]
      %s354 = scalar_lea.vmem %s1, 4
      %v355 = vld [vmem:[%s354] sm:$0xf]
      %v358 = vcombine.high %v351, %v351
      %359 = vrot.lane.b32.xlu0 %v351, 127
      %v360 = vpop.permute.xlu0 %359
      %361 = vrot.lane.b32.xlu0 %v358, 127
      %v362 = vpop.permute.xlu0 %361
      %363 = vrot.lane.b32.xlu0 %v352, 127
      %v364 = vpop.permute.xlu0 %363
      %vm365 = vcmask 1039360
      %v366 = vsel %vm365, %v360, %v362
      %v367 = vsel %vm365, %v362, %v364
      %vm368 = vcmask 31744
      %v370 = vsel %vm368, %v355, 0
      %vm372 = vcmask 1043456
      %v373 = vsel %vm372, %v366, 0
      %v375 = vsel %vm372, %v367, 0
      %v377 = vsel %vm372, %v364, 0
      %379 = vmatprep.subr.mxu0 %v375
      %380 = vmatpush1.msra.mxu0 %v373
      %381 = vmatprep.subr.mxu0 0.0
      %382 = vmatpush1.msra.mxu0 0.0
      %383 = vmatprep.subr.mxu0 0.0
      %384 = vmatpush1.msra.mxu0 0.0
      %385 = vmatprep.subr.mxu0 0.0
      %386 = vmatpush1.msra.mxu0 0.0
      %387 = vmatprep.subr.mxu0 0.0
      %388 = vmatpush1.msra.mxu0 0.0
      %389 = vmatprep.subr.mxu0 0.0
      %390 = vmatpush1.msra.mxu0 0.0
      %391 = vmatprep.subr.mxu0 0.0
      %392 = vmatpush1.msra.mxu0 0.0
      %393 = vmatprep.subr.mxu0 0.0
      %394 = vmatpush1.msra.mxu0 0.0
      %395 = vmatprep.subr.mxu0 0.0
      %396 = vmatpush1.msra.mxu0 0.0
      %397 = vmatprep.subr.mxu0 0.0
      %398 = vmatpush1.msra.mxu0 0.0
      %399 = vmatprep.subr.mxu0 0.0
      %400 = vmatpush1.msra.mxu0 0.0
      %401 = vmatprep.subr.mxu0 0.0
      %402 = vmatpush1.msra.mxu0 0.0
      %403 = vmatprep.subr.mxu0 0.0
      %404 = vmatpush1.msra.mxu0 0.0
      %405 = vmatprep.subr.mxu0 0.0
      %406 = vmatpush1.msra.mxu0 0.0
      %407 = vmatprep.subr.mxu0 0.0
      %408 = vmatpush1.msra.mxu0 0.0
      %409 = vmatprep.subr.mxu0 0.0
      %410 = vmatpush1.msra.mxu0 0.0
      %411 = vmatprep.subr.mxu0 0.0
      %412 = vmatpush1.msra.mxu0 0.0
      %413 = vmatprep.subr.mxu0 0.0
      %414 = vmatpush1.msra.mxu0 0.0
      %415 = vmatprep.subr.mxu0 0.0
      %416 = vmatpush1.msra.mxu0 0.0
      %417 = vmatprep.subr.mxu0 0.0
      %418 = vmatpush1.msra.mxu0 0.0
      %419 = vmatprep.subr.mxu0 0.0
      %420 = vmatpush1.msra.mxu0 0.0
      %421 = vmatprep.subr.mxu0 0.0
      %422 = vmatpush1.msra.mxu0 0.0
      %423 = vmatprep.subr.mxu0 0.0
      %424 = vmatpush1.msra.mxu0 0.0
      %425 = vmatprep.subr.mxu0 0.0
      %426 = vmatpush1.msra.mxu0 0.0
      %427 = vmatprep.subr.mxu0 0.0
      %428 = vmatpush1.msra.mxu0 0.0
      %429 = vmatprep.subr.mxu0 0.0
      %430 = vmatpush1.msra.mxu0 0.0
      %431 = vmatprep.subr.mxu0 0.0
      %432 = vmatpush1.msra.mxu0 0.0
      %433 = vmatprep.subr.mxu0 0.0
      %434 = vmatpush1.msra.mxu0 0.0
      %435 = vmatprep.subr.mxu0 0.0
      %436 = vmatpush1.msra.mxu0 0.0
      %437 = vmatprep.subr.mxu0 0.0
      %438 = vmatpush1.msra.mxu0 0.0
      %439 = vmatprep.subr.mxu0 0.0
      %440 = vmatpush1.msra.mxu0 0.0
      %441 = vmatprep.subr.mxu0 0.0
      %442 = vmatpush1.msra.mxu0 0.0
      %443 = vmatprep.mubr.f32.mxu0 0.0
      %444 = vmatmul.mubr.f32.gmra.mrb[0].mxu0 %v370
      %v445 = vpop.f32.mrb[0].mxu0
      %v446 = vadd.f32 0.0, %v445
      %v447 = vpop.f32.mrb[0].mxu0
      %v448 = vadd.f32 0.0, %v447
      %449 = vdwg.mxu0
      %450 = vmatprep.subr.mxu0 0.0
      %451 = vmatpush1.msra.mxu0 %v377
      %452 = vmatprep.subr.mxu0 0.0
      %453 = vmatpush1.msra.mxu0 0.0
      %454 = vmatprep.subr.mxu0 0.0
      %455 = vmatpush1.msra.mxu0 0.0
      %456 = vmatprep.subr.mxu0 0.0
      %457 = vmatpush1.msra.mxu0 0.0
      %458 = vmatprep.subr.mxu0 0.0
      %459 = vmatpush1.msra.mxu0 0.0
      %460 = vmatprep.subr.mxu0 0.0
      %461 = vmatpush1.msra.mxu0 0.0
      %462 = vmatprep.subr.mxu0 0.0
      %463 = vmatpush1.msra.mxu0 0.0
      %464 = vmatprep.subr.mxu0 0.0
      %465 = vmatpush1.msra.mxu0 0.0
      %466 = vmatprep.subr.mxu0 0.0
      %467 = vmatpush1.msra.mxu0 0.0
      %468 = vmatprep.subr.mxu0 0.0
      %469 = vmatpush1.msra.mxu0 0.0
      %470 = vmatprep.subr.mxu0 0.0
      %471 = vmatpush1.msra.mxu0 0.0
      %472 = vmatprep.subr.mxu0 0.0
      %473 = vmatpush1.msra.mxu0 0.0
      %474 = vmatprep.subr.mxu0 0.0
      %475 = vmatpush1.msra.mxu0 0.0
      %476 = vmatprep.subr.mxu0 0.0
      %477 = vmatpush1.msra.mxu0 0.0
      %478 = vmatprep.subr.mxu0 0.0
      %479 = vmatpush1.msra.mxu0 0.0
      %480 = vmatprep.subr.mxu0 0.0
      %481 = vmatpush1.msra.mxu0 0.0
      %482 = vmatprep.subr.mxu0 0.0
      %483 = vmatpush1.msra.mxu0 0.0
      %484 = vmatprep.subr.mxu0 0.0
      %485 = vmatpush1.msra.mxu0 0.0
      %486 = vmatprep.subr.mxu0 0.0
      %487 = vmatpush1.msra.mxu0 0.0
      %488 = vmatprep.subr.mxu0 0.0
      %489 = vmatpush1.msra.mxu0 0.0
      %490 = vmatprep.subr.mxu0 0.0
      %491 = vmatpush1.msra.mxu0 0.0
      %492 = vmatprep.subr.mxu0 0.0
      %493 = vmatpush1.msra.mxu0 0.0
      %494 = vmatprep.subr.mxu0 0.0
      %495 = vmatpush1.msra.mxu0 0.0
      %496 = vmatprep.subr.mxu0 0.0
      %497 = vmatpush1.msra.mxu0 0.0
      %498 = vmatprep.subr.mxu0 0.0
      %499 = vmatpush1.msra.mxu0 0.0
      %500 = vmatprep.subr.mxu0 0.0
      %501 = vmatpush1.msra.mxu0 0.0
      %502 = vmatprep.subr.mxu0 0.0
      %503 = vmatpush1.msra.mxu0 0.0
      %504 = vmatprep.subr.mxu0 0.0
      %505 = vmatpush1.msra.mxu0 0.0
      %506 = vmatprep.subr.mxu0 0.0
      %507 = vmatpush1.msra.mxu0 0.0
      %508 = vmatprep.subr.mxu0 0.0
      %509 = vmatpush1.msra.mxu0 0.0
      %510 = vmatprep.subr.mxu0 0.0
      %511 = vmatpush1.msra.mxu0 0.0
      %512 = vmatprep.subr.mxu0 0.0
      %513 = vmatpush1.msra.mxu0 0.0
      %514 = vmatprep.mubr.f32.mxu0 0.0
      %515 = vmatmul.mubr.f32.gmra.mrb[0].mxu0 %v370
      %v516 = vpop.f32.mrb[0].mxu0
      %v517 = vadd.f32 0.0, %v516
      %v518 = vpop.f32.mrb[0].mxu0
      %519 = vdwg.mxu0
      %v521 = vsel %vm368, %v353, 0
      %v523 = vsel %vm372, %v351, 0
      %v525 = vsel %vm372, %v358, 0
      %v527 = vsel %vm372, %v352, 0
      %529 = vmatprep.subr.mxu0 %v525
      %530 = vmatpush1.msra.mxu0 %v523
      %531 = vmatprep.subr.mxu0 0.0
      %532 = vmatpush1.msra.mxu0 0.0
      %533 = vmatprep.subr.mxu0 0.0
      %534 = vmatpush1.msra.mxu0 0.0
      %535 = vmatprep.subr.mxu0 0.0
      %536 = vmatpush1.msra.mxu0 0.0
      %537 = vmatprep.subr.mxu0 0.0
      %538 = vmatpush1.msra.mxu0 0.0
      %539 = vmatprep.subr.mxu0 0.0
      %540 = vmatpush1.msra.mxu0 0.0
      %541 = vmatprep.subr.mxu0 0.0
      %542 = vmatpush1.msra.mxu0 0.0
      %543 = vmatprep.subr.mxu0 0.0
      %544 = vmatpush1.msra.mxu0 0.0
      %545 = vmatprep.subr.mxu0 0.0
      %546 = vmatpush1.msra.mxu0 0.0
      %547 = vmatprep.subr.mxu0 0.0
      %548 = vmatpush1.msra.mxu0 0.0
      %549 = vmatprep.subr.mxu0 0.0
      %550 = vmatpush1.msra.mxu0 0.0
      %551 = vmatprep.subr.mxu0 0.0
      %552 = vmatpush1.msra.mxu0 0.0
      %553 = vmatprep.subr.mxu0 0.0
      %554 = vmatpush1.msra.mxu0 0.0
      %555 = vmatprep.subr.mxu0 0.0
      %556 = vmatpush1.msra.mxu0 0.0
      %557 = vmatprep.subr.mxu0 0.0
      %558 = vmatpush1.msra.mxu0 0.0
      %559 = vmatprep.subr.mxu0 0.0
      %560 = vmatpush1.msra.mxu0 0.0
      %561 = vmatprep.subr.mxu0 0.0
      %562 = vmatpush1.msra.mxu0 0.0
      %563 = vmatprep.subr.mxu0 0.0
      %564 = vmatpush1.msra.mxu0 0.0
      %565 = vmatprep.subr.mxu0 0.0
      %566 = vmatpush1.msra.mxu0 0.0
      %567 = vmatprep.subr.mxu0 0.0
      %568 = vmatpush1.msra.mxu0 0.0
      %569 = vmatprep.subr.mxu0 0.0
      %570 = vmatpush1.msra.mxu0 0.0
      %571 = vmatprep.subr.mxu0 0.0
      %572 = vmatpush1.msra.mxu0 0.0
      %573 = vmatprep.subr.mxu0 0.0
      %574 = vmatpush1.msra.mxu0 0.0
      %575 = vmatprep.subr.mxu0 0.0
      %576 = vmatpush1.msra.mxu0 0.0
      %577 = vmatprep.subr.mxu0 0.0
      %578 = vmatpush1.msra.mxu0 0.0
      %579 = vmatprep.subr.mxu0 0.0
      %580 = vmatpush1.msra.mxu0 0.0
      %581 = vmatprep.subr.mxu0 0.0
      %582 = vmatpush1.msra.mxu0 0.0
      %583 = vmatprep.subr.mxu0 0.0
      %584 = vmatpush1.msra.mxu0 0.0
      %585 = vmatprep.subr.mxu0 0.0
      %586 = vmatpush1.msra.mxu0 0.0
      %587 = vmatprep.subr.mxu0 0.0
      %588 = vmatpush1.msra.mxu0 0.0
      %589 = vmatprep.subr.mxu0 0.0
      %590 = vmatpush1.msra.mxu0 0.0
      %591 = vmatprep.subr.mxu0 0.0
      %592 = vmatpush1.msra.mxu0 0.0
      %593 = vmatprep.mubr.f32.mxu0 0.0
      %594 = vmatmul.mubr.f32.gmra.mrb[0].mxu0 %v521
      %v595 = vpop.f32.mrb[0].mxu0
      %v596 = vadd.f32 %v446, %v595
      %v597 = vpop.f32.mrb[0].mxu0
      %v598 = vadd.f32 %v448, %v597
      %599 = vdwg.mxu0
      %600 = vmatprep.subr.mxu0 0.0
      %601 = vmatpush1.msra.mxu0 %v527
      %602 = vmatprep.subr.mxu0 0.0
      %603 = vmatpush1.msra.mxu0 0.0
      %604 = vmatprep.subr.mxu0 0.0
      %605 = vmatpush1.msra.mxu0 0.0
      %606 = vmatprep.subr.mxu0 0.0
      %607 = vmatpush1.msra.mxu0 0.0
      %608 = vmatprep.subr.mxu0 0.0
      %609 = vmatpush1.msra.mxu0 0.0
      %610 = vmatprep.subr.mxu0 0.0
      %611 = vmatpush1.msra.mxu0 0.0
      %612 = vmatprep.subr.mxu0 0.0
      %613 = vmatpush1.msra.mxu0 0.0
      %614 = vmatprep.subr.mxu0 0.0
      %615 = vmatpush1.msra.mxu0 0.0
      %616 = vmatprep.subr.mxu0 0.0
      %617 = vmatpush1.msra.mxu0 0.0
      %618 = vmatprep.subr.mxu0 0.0
      %619 = vmatpush1.msra.mxu0 0.0
      %620 = vmatprep.subr.mxu0 0.0
      %621 = vmatpush1.msra.mxu0 0.0
      %622 = vmatprep.subr.mxu0 0.0
      %623 = vmatpush1.msra.mxu0 0.0
      %624 = vmatprep.subr.mxu0 0.0
      %625 = vmatpush1.msra.mxu0 0.0
      %626 = vmatprep.subr.mxu0 0.0
      %627 = vmatpush1.msra.mxu0 0.0
      %628 = vmatprep.subr.mxu0 0.0
      %629 = vmatpush1.msra.mxu0 0.0
      %630 = vmatprep.subr.mxu0 0.0
      %631 = vmatpush1.msra.mxu0 0.0
      %632 = vmatprep.subr.mxu0 0.0
      %633 = vmatpush1.msra.mxu0 0.0
      %634 = vmatprep.subr.mxu0 0.0
      %635 = vmatpush1.msra.mxu0 0.0
      %636 = vmatprep.subr.mxu0 0.0
      %637 = vmatpush1.msra.mxu0 0.0
      %638 = vmatprep.subr.mxu0 0.0
      %639 = vmatpush1.msra.mxu0 0.0
      %640 = vmatprep.subr.mxu0 0.0
      %641 = vmatpush1.msra.mxu0 0.0
      %642 = vmatprep.subr.mxu0 0.0
      %643 = vmatpush1.msra.mxu0 0.0
      %644 = vmatprep.subr.mxu0 0.0
      %645 = vmatpush1.msra.mxu0 0.0
      %646 = vmatprep.subr.mxu0 0.0
      %647 = vmatpush1.msra.mxu0 0.0
      %648 = vmatprep.subr.mxu0 0.0
      %649 = vmatpush1.msra.mxu0 0.0
      %650 = vmatprep.subr.mxu0 0.0
      %651 = vmatpush1.msra.mxu0 0.0
      %652 = vmatprep.subr.mxu0 0.0
      %653 = vmatpush1.msra.mxu0 0.0
      %654 = vmatprep.subr.mxu0 0.0
      %655 = vmatpush1.msra.mxu0 0.0
      %656 = vmatprep.subr.mxu0 0.0
      %657 = vmatpush1.msra.mxu0 0.0
      %658 = vmatprep.subr.mxu0 0.0
      %659 = vmatpush1.msra.mxu0 0.0
      %660 = vmatprep.subr.mxu0 0.0
      %661 = vmatpush1.msra.mxu0 0.0
      %662 = vmatprep.subr.mxu0 0.0
      %663 = vmatpush1.msra.mxu0 0.0
      %664 = vmatprep.mubr.f32.mxu0 0.0
      %665 = vmatmul.mubr.f32.gmra.mrb[0].mxu0 %v521
      %v666 = vpop.f32.mrb[0].mxu0
      %v667 = vadd.f32 %v517, %v666
      %v668 = vpop.f32.mrb[0].mxu0
      %669 = vdwg.mxu0
      %v670 = vld [vmem:[#allocation2] sm:$0xff]
      %v671 = vld [vmem:[#allocation2 + $0x8] sm:$0xf]
      %s672 = scalar_lea.vmem %s1, 8
      %v673 = vld [vmem:[%s672] sm:$0xf]
      %v676 = vcombine.high %v670, %v670
      %677 = vrot.lane.b32.xlu0 %v670, 126
      %v678 = vpop.permute.xlu0 %677
      %679 = vrot.lane.b32.xlu0 %v676, 126
      %v680 = vpop.permute.xlu0 %679
      %681 = vrot.lane.b32.xlu0 %v671, 126
      %v682 = vpop.permute.xlu0 %681
      %vm683 = vcmask 1031168
      %v684 = vsel %vm683, %v678, %v680
      %v685 = vsel %vm683, %v680, %v682
      %v687 = vsel %vm368, %v673, 0
      %v689 = vsel %vm372, %v684, 0
      %v691 = vsel %vm372, %v685, 0
      %v693 = vsel %vm372, %v682, 0
      %695 = vmatprep.subr.mxu0 %v691
      %696 = vmatpush1.msra.mxu0 %v689
      %697 = vmatprep.subr.mxu0 0.0
      %698 = vmatpush1.msra.mxu0 0.0
      %699 = vmatprep.subr.mxu0 0.0
      %700 = vmatpush1.msra.mxu0 0.0
      %701 = vmatprep.subr.mxu0 0.0
      %702 = vmatpush1.msra.mxu0 0.0
      %703 = vmatprep.subr.mxu0 0.0
      %704 = vmatpush1.msra.mxu0 0.0
      %705 = vmatprep.subr.mxu0 0.0
      %706 = vmatpush1.msra.mxu0 0.0
      %707 = vmatprep.subr.mxu0 0.0
      %708 = vmatpush1.msra.mxu0 0.0
      %709 = vmatprep.subr.mxu0 0.0
      %710 = vmatpush1.msra.mxu0 0.0
      %711 = vmatprep.subr.mxu0 0.0
      %712 = vmatpush1.msra.mxu0 0.0
      %713 = vmatprep.subr.mxu0 0.0
      %714 = vmatpush1.msra.mxu0 0.0
      %715 = vmatprep.subr.mxu0 0.0
      %716 = vmatpush1.msra.mxu0 0.0
      %717 = vmatprep.subr.mxu0 0.0
      %718 = vmatpush1.msra.mxu0 0.0
      %719 = vmatprep.subr.mxu0 0.0
      %720 = vmatpush1.msra.mxu0 0.0
      %721 = vmatprep.subr.mxu0 0.0
      %722 = vmatpush1.msra.mxu0 0.0
      %723 = vmatprep.subr.mxu0 0.0
      %724 = vmatpush1.msra.mxu0 0.0
      %725 = vmatprep.subr.mxu0 0.0
      %726 = vmatpush1.msra.mxu0 0.0
      %727 = vmatprep.subr.mxu0 0.0
      %728 = vmatpush1.msra.mxu0 0.0
      %729 = vmatprep.subr.mxu0 0.0
      %730 = vmatpush1.msra.mxu0 0.0
      %731 = vmatprep.subr.mxu0 0.0
      %732 = vmatpush1.msra.mxu0 0.0
      %733 = vmatprep.subr.mxu0 0.0
      %734 = vmatpush1.msra.mxu0 0.0
      %735 = vmatprep.subr.mxu0 0.0
      %736 = vmatpush1.msra.mxu0 0.0
      %737 = vmatprep.subr.mxu0 0.0
      %738 = vmatpush1.msra.mxu0 0.0
      %739 = vmatprep.subr.mxu0 0.0
      %740 = vmatpush1.msra.mxu0 0.0
      %741 = vmatprep.subr.mxu0 0.0
      %742 = vmatpush1.msra.mxu0 0.0
      %743 = vmatprep.subr.mxu0 0.0
      %744 = vmatpush1.msra.mxu0 0.0
      %745 = vmatprep.subr.mxu0 0.0
      %746 = vmatpush1.msra.mxu0 0.0
      %747 = vmatprep.subr.mxu0 0.0
      %748 = vmatpush1.msra.mxu0 0.0
      %749 = vmatprep.subr.mxu0 0.0
      %750 = vmatpush1.msra.mxu0 0.0
      %751 = vmatprep.subr.mxu0 0.0
      %752 = vmatpush1.msra.mxu0 0.0
      %753 = vmatprep.subr.mxu0 0.0
      %754 = vmatpush1.msra.mxu0 0.0
      %755 = vmatprep.subr.mxu0 0.0
      %756 = vmatpush1.msra.mxu0 0.0
      %757 = vmatprep.subr.mxu0 0.0
      %758 = vmatpush1.msra.mxu0 0.0
      %759 = vmatprep.mubr.f32.mxu0 0.0
      %760 = vmatmul.mubr.f32.gmra.mrb[0].mxu0 %v687
      %v761 = vpop.f32.mrb[0].mxu0
      %v762 = vadd.f32 0.0, %v761
      %v763 = vpop.f32.mrb[0].mxu0
      %v764 = vadd.f32 0.0, %v763
      %765 = vdwg.mxu0
      %766 = vmatprep.subr.mxu0 0.0
      %767 = vmatpush1.msra.mxu0 %v693
      %768 = vmatprep.subr.mxu0 0.0
      %769 = vmatpush1.msra.mxu0 0.0
      %770 = vmatprep.subr.mxu0 0.0
      %771 = vmatpush1.msra.mxu0 0.0
      %772 = vmatprep.subr.mxu0 0.0
      %773 = vmatpush1.msra.mxu0 0.0
      %774 = vmatprep.subr.mxu0 0.0
      %775 = vmatpush1.msra.mxu0 0.0
      %776 = vmatprep.subr.mxu0 0.0
      %777 = vmatpush1.msra.mxu0 0.0
      %778 = vmatprep.subr.mxu0 0.0
      %779 = vmatpush1.msra.mxu0 0.0
      %780 = vmatprep.subr.mxu0 0.0
      %781 = vmatpush1.msra.mxu0 0.0
      %782 = vmatprep.subr.mxu0 0.0
      %783 = vmatpush1.msra.mxu0 0.0
      %784 = vmatprep.subr.mxu0 0.0
      %785 = vmatpush1.msra.mxu0 0.0
      %786 = vmatprep.subr.mxu0 0.0
      %787 = vmatpush1.msra.mxu0 0.0
      %788 = vmatprep.subr.mxu0 0.0
      %789 = vmatpush1.msra.mxu0 0.0
      %790 = vmatprep.subr.mxu0 0.0
      %791 = vmatpush1.msra.mxu0 0.0
      %792 = vmatprep.subr.mxu0 0.0
      %793 = vmatpush1.msra.mxu0 0.0
      %794 = vmatprep.subr.mxu0 0.0
      %795 = vmatpush1.msra.mxu0 0.0
      %796 = vmatprep.subr.mxu0 0.0
      %797 = vmatpush1.msra.mxu0 0.0
      %798 = vmatprep.subr.mxu0 0.0
      %799 = vmatpush1.msra.mxu0 0.0
      %800 = vmatprep.subr.mxu0 0.0
      %801 = vmatpush1.msra.mxu0 0.0
      %802 = vmatprep.subr.mxu0 0.0
      %803 = vmatpush1.msra.mxu0 0.0
      %804 = vmatprep.subr.mxu0 0.0
      %805 = vmatpush1.msra.mxu0 0.0
      %806 = vmatprep.subr.mxu0 0.0
      %807 = vmatpush1.msra.mxu0 0.0
      %808 = vmatprep.subr.mxu0 0.0
      %809 = vmatpush1.msra.mxu0 0.0
      %810 = vmatprep.subr.mxu0 0.0
      %811 = vmatpush1.msra.mxu0 0.0
      %812 = vmatprep.subr.mxu0 0.0
      %813 = vmatpush1.msra.mxu0 0.0
      %814 = vmatprep.subr.mxu0 0.0
      %815 = vmatpush1.msra.mxu0 0.0
      %816 = vmatprep.subr.mxu0 0.0
      %817 = vmatpush1.msra.mxu0 0.0
      %818 = vmatprep.subr.mxu0 0.0
      %819 = vmatpush1.msra.mxu0 0.0
      %820 = vmatprep.subr.mxu0 0.0
      %821 = vmatpush1.msra.mxu0 0.0
      %822 = vmatprep.subr.mxu0 0.0
      %823 = vmatpush1.msra.mxu0 0.0
      %824 = vmatprep.subr.mxu0 0.0
      %825 = vmatpush1.msra.mxu0 0.0
      %826 = vmatprep.subr.mxu0 0.0
      %827 = vmatpush1.msra.mxu0 0.0
      %828 = vmatprep.subr.mxu0 0.0
      %829 = vmatpush1.msra.mxu0 0.0
      %830 = vmatprep.mubr.f32.mxu0 0.0
      %831 = vmatmul.mubr.f32.gmra.mrb[0].mxu0 %v687
      %v832 = vpop.f32.mrb[0].mxu0
      %v833 = vadd.f32 0.0, %v832
      %v834 = vpop.f32.mrb[0].mxu0
      %835 = vdwg.mxu0
      %v836 = vadd.f32 %v596, %v762
      %v837 = vadd.f32 %v598, %v764
      %v838 = vadd.f32 %v667, %v833
      %v839 = vld [vmem:[#allocation2] sm:$0xff]
      %v840 = vld [vmem:[#allocation2 + $0x8] sm:$0xf]
      %s841 = scalar_lea.vmem %s1, 12
      %v842 = vld [vmem:[%s841] sm:$0xf]
      %v845 = vcombine.high %v839, %v839
      %846 = vrot.lane.b32.xlu0 %v839, 110
      %v847 = vpop.permute.xlu0 %846
      %848 = vrot.lane.b32.xlu0 %v845, 110
      %v849 = vpop.permute.xlu0 %848
      %850 = vrot.lane.b32.xlu0 %v840, 110
      %v851 = vpop.permute.xlu0 %850
      %vm852 = vcmask 900096
      %v853 = vsel %vm852, %v847, %v849
      %v854 = vsel %vm852, %v849, %v851
      %v856 = vsel %vm368, %v842, 0
      %v858 = vsel %vm372, %v853, 0
      %v860 = vsel %vm372, %v854, 0
      %v862 = vsel %vm372, %v851, 0
      %864 = vmatprep.subr.mxu0 %v860
      %865 = vmatpush1.msra.mxu0 %v858
      %866 = vmatprep.subr.mxu0 0.0
      %867 = vmatpush1.msra.mxu0 0.0
      %868 = vmatprep.subr.mxu0 0.0
      %869 = vmatpush1.msra.mxu0 0.0
      %870 = vmatprep.subr.mxu0 0.0
      %871 = vmatpush1.msra.mxu0 0.0
      %872 = vmatprep.subr.mxu0 0.0
      %873 = vmatpush1.msra.mxu0 0.0
      %874 = vmatprep.subr.mxu0 0.0
      %875 = vmatpush1.msra.mxu0 0.0
      %876 = vmatprep.subr.mxu0 0.0
      %877 = vmatpush1.msra.mxu0 0.0
      %878 = vmatprep.subr.mxu0 0.0
      %879 = vmatpush1.msra.mxu0 0.0
      %880 = vmatprep.subr.mxu0 0.0
      %881 = vmatpush1.msra.mxu0 0.0
      %882 = vmatprep.subr.mxu0 0.0
      %883 = vmatpush1.msra.mxu0 0.0
      %884 = vmatprep.subr.mxu0 0.0
      %885 = vmatpush1.msra.mxu0 0.0
      %886 = vmatprep.subr.mxu0 0.0
      %887 = vmatpush1.msra.mxu0 0.0
      %888 = vmatprep.subr.mxu0 0.0
      %889 = vmatpush1.msra.mxu0 0.0
      %890 = vmatprep.subr.mxu0 0.0
      %891 = vmatpush1.msra.mxu0 0.0
      %892 = vmatprep.subr.mxu0 0.0
      %893 = vmatpush1.msra.mxu0 0.0
      %894 = vmatprep.subr.mxu0 0.0
      %895 = vmatpush1.msra.mxu0 0.0
      %896 = vmatprep.subr.mxu0 0.0
      %897 = vmatpush1.msra.mxu0 0.0
      %898 = vmatprep.subr.mxu0 0.0
      %899 = vmatpush1.msra.mxu0 0.0
      %900 = vmatprep.subr.mxu0 0.0
      %901 = vmatpush1.msra.mxu0 0.0
      %902 = vmatprep.subr.mxu0 0.0
      %903 = vmatpush1.msra.mxu0 0.0
      %904 = vmatprep.subr.mxu0 0.0
      %905 = vmatpush1.msra.mxu0 0.0
      %906 = vmatprep.subr.mxu0 0.0
      %907 = vmatpush1.msra.mxu0 0.0
      %908 = vmatprep.subr.mxu0 0.0
      %909 = vmatpush1.msra.mxu0 0.0
      %910 = vmatprep.subr.mxu0 0.0
      %911 = vmatpush1.msra.mxu0 0.0
      %912 = vmatprep.subr.mxu0 0.0
      %913 = vmatpush1.msra.mxu0 0.0
      %914 = vmatprep.subr.mxu0 0.0
      %915 = vmatpush1.msra.mxu0 0.0
      %916 = vmatprep.subr.mxu0 0.0
      %917 = vmatpush1.msra.mxu0 0.0
      %918 = vmatprep.subr.mxu0 0.0
      %919 = vmatpush1.msra.mxu0 0.0
      %920 = vmatprep.subr.mxu0 0.0
      %921 = vmatpush1.msra.mxu0 0.0
      %922 = vmatprep.subr.mxu0 0.0
      %923 = vmatpush1.msra.mxu0 0.0
      %924 = vmatprep.subr.mxu0 0.0
      %925 = vmatpush1.msra.mxu0 0.0
      %926 = vmatprep.subr.mxu0 0.0
      %927 = vmatpush1.msra.mxu0 0.0
      %928 = vmatprep.mubr.f32.mxu0 0.0
      %929 = vmatmul.mubr.f32.gmra.mrb[0].mxu0 %v856
      %v930 = vpop.f32.mrb[0].mxu0
      %v931 = vadd.f32 0.0, %v930
      %v932 = vpop.f32.mrb[0].mxu0
      %v933 = vadd.f32 0.0, %v932
      %934 = vdwg.mxu0
      %935 = vmatprep.subr.mxu0 0.0
      %936 = vmatpush1.msra.mxu0 %v862
      %937 = vmatprep.subr.mxu0 0.0
      %938 = vmatpush1.msra.mxu0 0.0
      %939 = vmatprep.subr.mxu0 0.0
      %940 = vmatpush1.msra.mxu0 0.0
      %941 = vmatprep.subr.mxu0 0.0
      %942 = vmatpush1.msra.mxu0 0.0
      %943 = vmatprep.subr.mxu0 0.0
      %944 = vmatpush1.msra.mxu0 0.0
      %945 = vmatprep.subr.mxu0 0.0
      %946 = vmatpush1.msra.mxu0 0.0
      %947 = vmatprep.subr.mxu0 0.0
      %948 = vmatpush1.msra.mxu0 0.0
      %949 = vmatprep.subr.mxu0 0.0
      %950 = vmatpush1.msra.mxu0 0.0
      %951 = vmatprep.subr.mxu0 0.0
      %952 = vmatpush1.msra.mxu0 0.0
      %953 = vmatprep.subr.mxu0 0.0
      %954 = vmatpush1.msra.mxu0 0.0
      %955 = vmatprep.subr.mxu0 0.0
      %956 = vmatpush1.msra.mxu0 0.0
      %957 = vmatprep.subr.mxu0 0.0
      %958 = vmatpush1.msra.mxu0 0.0
      %959 = vmatprep.subr.mxu0 0.0
      %960 = vmatpush1.msra.mxu0 0.0
      %961 = vmatprep.subr.mxu0 0.0
      %962 = vmatpush1.msra.mxu0 0.0
      %963 = vmatprep.subr.mxu0 0.0
      %964 = vmatpush1.msra.mxu0 0.0
      %965 = vmatprep.subr.mxu0 0.0
      %966 = vmatpush1.msra.mxu0 0.0
      %967 = vmatprep.subr.mxu0 0.0
      %968 = vmatpush1.msra.mxu0 0.0
      %969 = vmatprep.subr.mxu0 0.0
      %970 = vmatpush1.msra.mxu0 0.0
      %971 = vmatprep.subr.mxu0 0.0
      %972 = vmatpush1.msra.mxu0 0.0
      %973 = vmatprep.subr.mxu0 0.0
      %974 = vmatpush1.msra.mxu0 0.0
      %975 = vmatprep.subr.mxu0 0.0
      %976 = vmatpush1.msra.mxu0 0.0
      %977 = vmatprep.subr.mxu0 0.0
      %978 = vmatpush1.msra.mxu0 0.0
      %979 = vmatprep.subr.mxu0 0.0
      %980 = vmatpush1.msra.mxu0 0.0
      %981 = vmatprep.subr.mxu0 0.0
      %982 = vmatpush1.msra.mxu0 0.0
      %983 = vmatprep.subr.mxu0 0.0
      %984 = vmatpush1.msra.mxu0 0.0
      %985 = vmatprep.subr.mxu0 0.0
      %986 = vmatpush1.msra.mxu0 0.0
      %987 = vmatprep.subr.mxu0 0.0
      %988 = vmatpush1.msra.mxu0 0.0
      %989 = vmatprep.subr.mxu0 0.0
      %990 = vmatpush1.msra.mxu0 0.0
      %991 = vmatprep.subr.mxu0 0.0
      %992 = vmatpush1.msra.mxu0 0.0
      %993 = vmatprep.subr.mxu0 0.0
      %994 = vmatpush1.msra.mxu0 0.0
      %995 = vmatprep.subr.mxu0 0.0
      %996 = vmatpush1.msra.mxu0 0.0
      %997 = vmatprep.subr.mxu0 0.0
      %998 = vmatpush1.msra.mxu0 0.0
      %999 = vmatprep.mubr.f32.mxu0 0.0
      %1000 = vmatmul.mubr.f32.gmra.mrb[0].mxu0 %v856
      %v1001 = vpop.f32.mrb[0].mxu0
      %v1002 = vadd.f32 0.0, %v1001
      %v1003 = vpop.f32.mrb[0].mxu0
      %1004 = vdwg.mxu0
      %v1005 = vadd.f32 %v836, %v931
      %v1006 = vadd.f32 %v837, %v933
      %v1007 = vadd.f32 %v838, %v1002
      %v1008 = vld [vmem:[#allocation2] sm:$0xff]
      %v1009 = vld [vmem:[#allocation2 + $0x8] sm:$0xf]
      %s1010 = scalar_lea.vmem %s1, 16
      %v1011 = vld [vmem:[%s1010] sm:$0xf]
      %v1014 = vcombine.high %v1008, %v1008
      %1015 = vrot.lane.b32.xlu0 %v1008, 109
      %v1016 = vpop.permute.xlu0 %1015
      %1017 = vrot.lane.b32.xlu0 %v1014, 109
      %v1018 = vpop.permute.xlu0 %1017
      %1019 = vrot.lane.b32.xlu0 %v1009, 109
      %v1020 = vpop.permute.xlu0 %1019
      %vm1021 = vcmask 891904
      %v1022 = vsel %vm1021, %v1016, %v1018
      %v1023 = vsel %vm1021, %v1018, %v1020
      %v1025 = vsel %vm368, %v1011, 0
      %v1027 = vsel %vm372, %v1022, 0
      %v1029 = vsel %vm372, %v1023, 0
      %v1031 = vsel %vm372, %v1020, 0
      %1033 = vmatprep.subr.mxu0 %v1029
      %1034 = vmatpush1.msra.mxu0 %v1027
      %1035 = vmatprep.subr.mxu0 0.0
      %1036 = vmatpush1.msra.mxu0 0.0
      %1037 = vmatprep.subr.mxu0 0.0
      %1038 = vmatpush1.msra.mxu0 0.0
      %1039 = vmatprep.subr.mxu0 0.0
      %1040 = vmatpush1.msra.mxu0 0.0
      %1041 = vmatprep.subr.mxu0 0.0
      %1042 = vmatpush1.msra.mxu0 0.0
      %1043 = vmatprep.subr.mxu0 0.0
      %1044 = vmatpush1.msra.mxu0 0.0
      %1045 = vmatprep.subr.mxu0 0.0
      %1046 = vmatpush1.msra.mxu0 0.0
      %1047 = vmatprep.subr.mxu0 0.0
      %1048 = vmatpush1.msra.mxu0 0.0
      %1049 = vmatprep.subr.mxu0 0.0
      %1050 = vmatpush1.msra.mxu0 0.0
      %1051 = vmatprep.subr.mxu0 0.0
      %1052 = vmatpush1.msra.mxu0 0.0
      %1053 = vmatprep.subr.mxu0 0.0
      %1054 = vmatpush1.msra.mxu0 0.0
      %1055 = vmatprep.subr.mxu0 0.0
      %1056 = vmatpush1.msra.mxu0 0.0
      %1057 = vmatprep.subr.mxu0 0.0
      %1058 = vmatpush1.msra.mxu0 0.0
      %1059 = vmatprep.subr.mxu0 0.0
      %1060 = vmatpush1.msra.mxu0 0.0
      %1061 = vmatprep.subr.mxu0 0.0
      %1062 = vmatpush1.msra.mxu0 0.0
      %1063 = vmatprep.subr.mxu0 0.0
      %1064 = vmatpush1.msra.mxu0 0.0
      %1065 = vmatprep.subr.mxu0 0.0
      %1066 = vmatpush1.msra.mxu0 0.0
      %1067 = vmatprep.subr.mxu0 0.0
      %1068 = vmatpush1.msra.mxu0 0.0
      %1069 = vmatprep.subr.mxu0 0.0
      %1070 = vmatpush1.msra.mxu0 0.0
      %1071 = vmatprep.subr.mxu0 0.0
      %1072 = vmatpush1.msra.mxu0 0.0
      %1073 = vmatprep.subr.mxu0 0.0
      %1074 = vmatpush1.msra.mxu0 0.0
      %1075 = vmatprep.subr.mxu0 0.0
      %1076 = vmatpush1.msra.mxu0 0.0
      %1077 = vmatprep.subr.mxu0 0.0
      %1078 = vmatpush1.msra.mxu0 0.0
      %1079 = vmatprep.subr.mxu0 0.0
      %1080 = vmatpush1.msra.mxu0 0.0
      %1081 = vmatprep.subr.mxu0 0.0
      %1082 = vmatpush1.msra.mxu0 0.0
      %1083 = vmatprep.subr.mxu0 0.0
      %1084 = vmatpush1.msra.mxu0 0.0
      %1085 = vmatprep.subr.mxu0 0.0
      %1086 = vmatpush1.msra.mxu0 0.0
      %1087 = vmatprep.subr.mxu0 0.0
      %1088 = vmatpush1.msra.mxu0 0.0
      %1089 = vmatprep.subr.mxu0 0.0
      %1090 = vmatpush1.msra.mxu0 0.0
      %1091 = vmatprep.subr.mxu0 0.0
      %1092 = vmatpush1.msra.mxu0 0.0
      %1093 = vmatprep.subr.mxu0 0.0
      %1094 = vmatpush1.msra.mxu0 0.0
      %1095 = vmatprep.subr.mxu0 0.0
      %1096 = vmatpush1.msra.mxu0 0.0
      %1097 = vmatprep.mubr.f32.mxu0 0.0
      %1098 = vmatmul.mubr.f32.gmra.mrb[0].mxu0 %v1025
      %v1099 = vpop.f32.mrb[0].mxu0
      %v1100 = vadd.f32 0.0, %v1099
      %v1101 = vpop.f32.mrb[0].mxu0
      %v1102 = vadd.f32 0.0, %v1101
      %1103 = vdwg.mxu0
      %1104 = vmatprep.subr.mxu0 0.0
      %1105 = vmatpush1.msra.mxu0 %v1031
      %1106 = vmatprep.subr.mxu0 0.0
      %1107 = vmatpush1.msra.mxu0 0.0
      %1108 = vmatprep.subr.mxu0 0.0
      %1109 = vmatpush1.msra.mxu0 0.0
      %1110 = vmatprep.subr.mxu0 0.0
      %1111 = vmatpush1.msra.mxu0 0.0
      %1112 = vmatprep.subr.mxu0 0.0
      %1113 = vmatpush1.msra.mxu0 0.0
      %1114 = vmatprep.subr.mxu0 0.0
      %1115 = vmatpush1.msra.mxu0 0.0
      %1116 = vmatprep.subr.mxu0 0.0
      %1117 = vmatpush1.msra.mxu0 0.0
      %1118 = vmatprep.subr.mxu0 0.0
      %1119 = vmatpush1.msra.mxu0 0.0
      %1120 = vmatprep.subr.mxu0 0.0
      %1121 = vmatpush1.msra.mxu0 0.0
      %1122 = vmatprep.subr.mxu0 0.0
      %1123 = vmatpush1.msra.mxu0 0.0
      %1124 = vmatprep.subr.mxu0 0.0
      %1125 = vmatpush1.msra.mxu0 0.0
      %1126 = vmatprep.subr.mxu0 0.0
      %1127 = vmatpush1.msra.mxu0 0.0
      %1128 = vmatprep.subr.mxu0 0.0
      %1129 = vmatpush1.msra.mxu0 0.0
      %1130 = vmatprep.subr.mxu0 0.0
      %1131 = vmatpush1.msra.mxu0 0.0
      %1132 = vmatprep.subr.mxu0 0.0
      %1133 = vmatpush1.msra.mxu0 0.0
      %1134 = vmatprep.subr.mxu0 0.0
      %1135 = vmatpush1.msra.mxu0 0.0
      %1136 = vmatprep.subr.mxu0 0.0
      %1137 = vmatpush1.msra.mxu0 0.0
      %1138 = vmatprep.subr.mxu0 0.0
      %1139 = vmatpush1.msra.mxu0 0.0
      %1140 = vmatprep.subr.mxu0 0.0
      %1141 = vmatpush1.msra.mxu0 0.0
      %1142 = vmatprep.subr.mxu0 0.0
      %1143 = vmatpush1.msra.mxu0 0.0
      %1144 = vmatprep.subr.mxu0 0.0
      %1145 = vmatpush1.msra.mxu0 0.0
      %1146 = vmatprep.subr.mxu0 0.0
      %1147 = vmatpush1.msra.mxu0 0.0
      %1148 = vmatprep.subr.mxu0 0.0
      %1149 = vmatpush1.msra.mxu0 0.0
      %1150 = vmatprep.subr.mxu0 0.0
      %1151 = vmatpush1.msra.mxu0 0.0
      %1152 = vmatprep.subr.mxu0 0.0
      %1153 = vmatpush1.msra.mxu0 0.0
      %1154 = vmatprep.subr.mxu0 0.0
      %1155 = vmatpush1.msra.mxu0 0.0
      %1156 = vmatprep.subr.mxu0 0.0
      %1157 = vmatpush1.msra.mxu0 0.0
      %1158 = vmatprep.subr.mxu0 0.0
      %1159 = vmatpush1.msra.mxu0 0.0
      %1160 = vmatprep.subr.mxu0 0.0
      %1161 = vmatpush1.msra.mxu0 0.0
      %1162 = vmatprep.subr.mxu0 0.0
      %1163 = vmatpush1.msra.mxu0 0.0
      %1164 = vmatprep.subr.mxu0 0.0
      %1165 = vmatpush1.msra.mxu0 0.0
      %1166 = vmatprep.subr.mxu0 0.0
      %1167 = vmatpush1.msra.mxu0 0.0
      %1168 = vmatprep.mubr.f32.mxu0 0.0
      %1169 = vmatmul.mubr.f32.gmra.mrb[0].mxu0 %v1025
      %v1170 = vpop.f32.mrb[0].mxu0
      %v1171 = vadd.f32 0.0, %v1170
      %v1172 = vpop.f32.mrb[0].mxu0
      %1173 = vdwg.mxu0
      %v1174 = vadd.f32 %v1005, %v1100
      %v1175 = vadd.f32 %v1006, %v1102
      %v1176 = vadd.f32 %v1007, %v1171
      %v1177 = vld [vmem:[#allocation2] sm:$0xff]
      %v1178 = vld [vmem:[#allocation2 + $0x8] sm:$0xf]
      %s1179 = scalar_lea.vmem %s1, 20
      %v1180 = vld [vmem:[%s1179] sm:$0xf]
      %v1183 = vcombine.high %v1177, %v1177
      %1184 = vrot.lane.b32.xlu0 %v1177, 108
      %v1185 = vpop.permute.xlu0 %1184
      %1186 = vrot.lane.b32.xlu0 %v1183, 108
      %v1187 = vpop.permute.xlu0 %1186
      %1188 = vrot.lane.b32.xlu0 %v1178, 108
      %v1189 = vpop.permute.xlu0 %1188
      %vm1190 = vcmask 883712
      %v1191 = vsel %vm1190, %v1185, %v1187
      %v1192 = vsel %vm1190, %v1187, %v1189
      %v1194 = vsel %vm368, %v1180, 0
      %v1196 = vsel %vm372, %v1191, 0
      %v1198 = vsel %vm372, %v1192, 0
      %v1200 = vsel %vm372, %v1189, 0
      %1202 = vmatprep.subr.mxu0 %v1198
      %1203 = vmatpush1.msra.mxu0 %v1196
      %1204 = vmatprep.subr.mxu0 0.0
      %1205 = vmatpush1.msra.mxu0 0.0
      %1206 = vmatprep.subr.mxu0 0.0
      %1207 = vmatpush1.msra.mxu0 0.0
      %1208 = vmatprep.subr.mxu0 0.0
      %1209 = vmatpush1.msra.mxu0 0.0
      %1210 = vmatprep.subr.mxu0 0.0
      %1211 = vmatpush1.msra.mxu0 0.0
      %1212 = vmatprep.subr.mxu0 0.0
      %1213 = vmatpush1.msra.mxu0 0.0
      %1214 = vmatprep.subr.mxu0 0.0
      %1215 = vmatpush1.msra.mxu0 0.0
      %1216 = vmatprep.subr.mxu0 0.0
      %1217 = vmatpush1.msra.mxu0 0.0
      %1218 = vmatprep.subr.mxu0 0.0
      %1219 = vmatpush1.msra.mxu0 0.0
      %1220 = vmatprep.subr.mxu0 0.0
      %1221 = vmatpush1.msra.mxu0 0.0
      %1222 = vmatprep.subr.mxu0 0.0
      %1223 = vmatpush1.msra.mxu0 0.0
      %1224 = vmatprep.subr.mxu0 0.0
      %1225 = vmatpush1.msra.mxu0 0.0
      %1226 = vmatprep.subr.mxu0 0.0
      %1227 = vmatpush1.msra.mxu0 0.0
      %1228 = vmatprep.subr.mxu0 0.0
      %1229 = vmatpush1.msra.mxu0 0.0
      %1230 = vmatprep.subr.mxu0 0.0
      %1231 = vmatpush1.msra.mxu0 0.0
      %1232 = vmatprep.subr.mxu0 0.0
      %1233 = vmatpush1.msra.mxu0 0.0
      %1234 = vmatprep.subr.mxu0 0.0
      %1235 = vmatpush1.msra.mxu0 0.0
      %1236 = vmatprep.subr.mxu0 0.0
      %1237 = vmatpush1.msra.mxu0 0.0
      %1238 = vmatprep.subr.mxu0 0.0
      %1239 = vmatpush1.msra.mxu0 0.0
      %1240 = vmatprep.subr.mxu0 0.0
      %1241 = vmatpush1.msra.mxu0 0.0
      %1242 = vmatprep.subr.mxu0 0.0
      %1243 = vmatpush1.msra.mxu0 0.0
      %1244 = vmatprep.subr.mxu0 0.0
      %1245 = vmatpush1.msra.mxu0 0.0
      %1246 = vmatprep.subr.mxu0 0.0
      %1247 = vmatpush1.msra.mxu0 0.0
      %1248 = vmatprep.subr.mxu0 0.0
      %1249 = vmatpush1.msra.mxu0 0.0
      %1250 = vmatprep.subr.mxu0 0.0
      %1251 = vmatpush1.msra.mxu0 0.0
      %1252 = vmatprep.subr.mxu0 0.0
      %1253 = vmatpush1.msra.mxu0 0.0
      %1254 = vmatprep.subr.mxu0 0.0
      %1255 = vmatpush1.msra.mxu0 0.0
      %1256 = vmatprep.subr.mxu0 0.0
      %1257 = vmatpush1.msra.mxu0 0.0
      %1258 = vmatprep.subr.mxu0 0.0
      %1259 = vmatpush1.msra.mxu0 0.0
      %1260 = vmatprep.subr.mxu0 0.0
      %1261 = vmatpush1.msra.mxu0 0.0
      %1262 = vmatprep.subr.mxu0 0.0
      %1263 = vmatpush1.msra.mxu0 0.0
      %1264 = vmatprep.subr.mxu0 0.0
      %1265 = vmatpush1.msra.mxu0 0.0
      %1266 = vmatprep.mubr.f32.mxu0 0.0
      %1267 = vmatmul.mubr.f32.gmra.mrb[0].mxu0 %v1194
      %v1268 = vpop.f32.mrb[0].mxu0
      %v1269 = vadd.f32 0.0, %v1268
      %v1270 = vpop.f32.mrb[0].mxu0
      %v1271 = vadd.f32 0.0, %v1270
      %1272 = vdwg.mxu0
      %1273 = vmatprep.subr.mxu0 0.0
      %1274 = vmatpush1.msra.mxu0 %v1200
      %1275 = vmatprep.subr.mxu0 0.0
      %1276 = vmatpush1.msra.mxu0 0.0
      %1277 = vmatprep.subr.mxu0 0.0
      %1278 = vmatpush1.msra.mxu0 0.0
      %1279 = vmatprep.subr.mxu0 0.0
      %1280 = vmatpush1.msra.mxu0 0.0
      %1281 = vmatprep.subr.mxu0 0.0
      %1282 = vmatpush1.msra.mxu0 0.0
      %1283 = vmatprep.subr.mxu0 0.0
      %1284 = vmatpush1.msra.mxu0 0.0
      %1285 = vmatprep.subr.mxu0 0.0
      %1286 = vmatpush1.msra.mxu0 0.0
      %1287 = vmatprep.subr.mxu0 0.0
      %1288 = vmatpush1.msra.mxu0 0.0
      %1289 = vmatprep.subr.mxu0 0.0
      %1290 = vmatpush1.msra.mxu0 0.0
      %1291 = vmatprep.subr.mxu0 0.0
      %1292 = vmatpush1.msra.mxu0 0.0
      %1293 = vmatprep.subr.mxu0 0.0
      %1294 = vmatpush1.msra.mxu0 0.0
      %1295 = vmatprep.subr.mxu0 0.0
      %1296 = vmatpush1.msra.mxu0 0.0
      %1297 = vmatprep.subr.mxu0 0.0
      %1298 = vmatpush1.msra.mxu0 0.0
      %1299 = vmatprep.subr.mxu0 0.0
      %1300 = vmatpush1.msra.mxu0 0.0
      %1301 = vmatprep.subr.mxu0 0.0
      %1302 = vmatpush1.msra.mxu0 0.0
      %1303 = vmatprep.subr.mxu0 0.0
      %1304 = vmatpush1.msra.mxu0 0.0
      %1305 = vmatprep.subr.mxu0 0.0
      %1306 = vmatpush1.msra.mxu0 0.0
      %1307 = vmatprep.subr.mxu0 0.0
      %1308 = vmatpush1.msra.mxu0 0.0
      %1309 = vmatprep.subr.mxu0 0.0
      %1310 = vmatpush1.msra.mxu0 0.0
      %1311 = vmatprep.subr.mxu0 0.0
      %1312 = vmatpush1.msra.mxu0 0.0
      %1313 = vmatprep.subr.mxu0 0.0
      %1314 = vmatpush1.msra.mxu0 0.0
      %1315 = vmatprep.subr.mxu0 0.0
      %1316 = vmatpush1.msra.mxu0 0.0
      %1317 = vmatprep.subr.mxu0 0.0
      %1318 = vmatpush1.msra.mxu0 0.0
      %1319 = vmatprep.subr.mxu0 0.0
      %1320 = vmatpush1.msra.mxu0 0.0
      %1321 = vmatprep.subr.mxu0 0.0
      %1322 = vmatpush1.msra.mxu0 0.0
      %1323 = vmatprep.subr.mxu0 0.0
      %1324 = vmatpush1.msra.mxu0 0.0
      %1325 = vmatprep.subr.mxu0 0.0
      %1326 = vmatpush1.msra.mxu0 0.0
      %1327 = vmatprep.subr.mxu0 0.0
      %1328 = vmatpush1.msra.mxu0 0.0
      %1329 = vmatprep.subr.mxu0 0.0
      %1330 = vmatpush1.msra.mxu0 0.0
      %1331 = vmatprep.subr.mxu0 0.0
      %1332 = vmatpush1.msra.mxu0 0.0
      %1333 = vmatprep.subr.mxu0 0.0
      %1334 = vmatpush1.msra.mxu0 0.0
      %1335 = vmatprep.subr.mxu0 0.0
      %1336 = vmatpush1.msra.mxu0 0.0
      %1337 = vmatprep.mubr.f32.mxu0 0.0
      %1338 = vmatmul.mubr.f32.gmra.mrb[0].mxu0 %v1194
      %v1339 = vpop.f32.mrb[0].mxu0
      %v1340 = vadd.f32 0.0, %v1339
      %v1341 = vpop.f32.mrb[0].mxu0
      %1342 = vdwg.mxu0
      %v1343 = vadd.f32 %v1174, %v1269
      %v1344 = vadd.f32 %v1175, %v1271
      %v1345 = vadd.f32 %v1176, %v1340
      %v1346 = vld [vmem:[#allocation2] sm:$0xff]
      %v1347 = vld [vmem:[#allocation2 + $0x8] sm:$0xf]
      %s1348 = scalar_lea.vmem %s1, 24
      %v1349 = vld [vmem:[%s1348] sm:$0xf]
      %v1352 = vcombine.high %v1346, %v1346
      %1353 = vrot.lane.b32.xlu0 %v1346, 92
      %v1354 = vpop.permute.xlu0 %1353
      %1355 = vrot.lane.b32.xlu0 %v1352, 92
      %v1356 = vpop.permute.xlu0 %1355
      %1357 = vrot.lane.b32.xlu0 %v1347, 92
      %v1358 = vpop.permute.xlu0 %1357
      %vm1359 = vcmask 752640
      %v1360 = vsel %vm1359, %v1354, %v1356
      %v1361 = vsel %vm1359, %v1356, %v1358
      %v1363 = vsel %vm368, %v1349, 0
      %v1365 = vsel %vm372, %v1360, 0
      %v1367 = vsel %vm372, %v1361, 0
      %v1369 = vsel %vm372, %v1358, 0
      %1371 = vmatprep.subr.mxu0 %v1367
      %1372 = vmatpush1.msra.mxu0 %v1365
      %1373 = vmatprep.subr.mxu0 0.0
      %1374 = vmatpush1.msra.mxu0 0.0
      %1375 = vmatprep.subr.mxu0 0.0
      %1376 = vmatpush1.msra.mxu0 0.0
      %1377 = vmatprep.subr.mxu0 0.0
      %1378 = vmatpush1.msra.mxu0 0.0
      %1379 = vmatprep.subr.mxu0 0.0
      %1380 = vmatpush1.msra.mxu0 0.0
      %1381 = vmatprep.subr.mxu0 0.0
      %1382 = vmatpush1.msra.mxu0 0.0
      %1383 = vmatprep.subr.mxu0 0.0
      %1384 = vmatpush1.msra.mxu0 0.0
      %1385 = vmatprep.subr.mxu0 0.0
      %1386 = vmatpush1.msra.mxu0 0.0
      %1387 = vmatprep.subr.mxu0 0.0
      %1388 = vmatpush1.msra.mxu0 0.0
      %1389 = vmatprep.subr.mxu0 0.0
      %1390 = vmatpush1.msra.mxu0 0.0
      %1391 = vmatprep.subr.mxu0 0.0
      %1392 = vmatpush1.msra.mxu0 0.0
      %1393 = vmatprep.subr.mxu0 0.0
      %1394 = vmatpush1.msra.mxu0 0.0
      %1395 = vmatprep.subr.mxu0 0.0
      %1396 = vmatpush1.msra.mxu0 0.0
      %1397 = vmatprep.subr.mxu0 0.0
      %1398 = vmatpush1.msra.mxu0 0.0
      %1399 = vmatprep.subr.mxu0 0.0
      %1400 = vmatpush1.msra.mxu0 0.0
      %1401 = vmatprep.subr.mxu0 0.0
      %1402 = vmatpush1.msra.mxu0 0.0
      %1403 = vmatprep.subr.mxu0 0.0
      %1404 = vmatpush1.msra.mxu0 0.0
      %1405 = vmatprep.subr.mxu0 0.0
      %1406 = vmatpush1.msra.mxu0 0.0
      %1407 = vmatprep.subr.mxu0 0.0
      %1408 = vmatpush1.msra.mxu0 0.0
      %1409 = vmatprep.subr.mxu0 0.0
      %1410 = vmatpush1.msra.mxu0 0.0
      %1411 = vmatprep.subr.mxu0 0.0
      %1412 = vmatpush1.msra.mxu0 0.0
      %1413 = vmatprep.subr.mxu0 0.0
      %1414 = vmatpush1.msra.mxu0 0.0
      %1415 = vmatprep.subr.mxu0 0.0
      %1416 = vmatpush1.msra.mxu0 0.0
      %1417 = vmatprep.subr.mxu0 0.0
      %1418 = vmatpush1.msra.mxu0 0.0
      %1419 = vmatprep.subr.mxu0 0.0
      %1420 = vmatpush1.msra.mxu0 0.0
      %1421 = vmatprep.subr.mxu0 0.0
      %1422 = vmatpush1.msra.mxu0 0.0
      %1423 = vmatprep.subr.mxu0 0.0
      %1424 = vmatpush1.msra.mxu0 0.0
      %1425 = vmatprep.subr.mxu0 0.0
      %1426 = vmatpush1.msra.mxu0 0.0
      %1427 = vmatprep.subr.mxu0 0.0
      %1428 = vmatpush1.msra.mxu0 0.0
      %1429 = vmatprep.subr.mxu0 0.0
      %1430 = vmatpush1.msra.mxu0 0.0
      %1431 = vmatprep.subr.mxu0 0.0
      %1432 = vmatpush1.msra.mxu0 0.0
      %1433 = vmatprep.subr.mxu0 0.0
      %1434 = vmatpush1.msra.mxu0 0.0
      %1435 = vmatprep.mubr.f32.mxu0 0.0
      %1436 = vmatmul.mubr.f32.gmra.mrb[0].mxu0 %v1363
      %v1437 = vpop.f32.mrb[0].mxu0
      %v1438 = vadd.f32 0.0, %v1437
      %v1439 = vpop.f32.mrb[0].mxu0
      %v1440 = vadd.f32 0.0, %v1439
      %1441 = vdwg.mxu0
      %1442 = vmatprep.subr.mxu0 0.0
      %1443 = vmatpush1.msra.mxu0 %v1369
      %1444 = vmatprep.subr.mxu0 0.0
      %1445 = vmatpush1.msra.mxu0 0.0
      %1446 = vmatprep.subr.mxu0 0.0
      %1447 = vmatpush1.msra.mxu0 0.0
      %1448 = vmatprep.subr.mxu0 0.0
      %1449 = vmatpush1.msra.mxu0 0.0
      %1450 = vmatprep.subr.mxu0 0.0
      %1451 = vmatpush1.msra.mxu0 0.0
      %1452 = vmatprep.subr.mxu0 0.0
      %1453 = vmatpush1.msra.mxu0 0.0
      %1454 = vmatprep.subr.mxu0 0.0
      %1455 = vmatpush1.msra.mxu0 0.0
      %1456 = vmatprep.subr.mxu0 0.0
      %1457 = vmatpush1.msra.mxu0 0.0
      %1458 = vmatprep.subr.mxu0 0.0
      %1459 = vmatpush1.msra.mxu0 0.0
      %1460 = vmatprep.subr.mxu0 0.0
      %1461 = vmatpush1.msra.mxu0 0.0
      %1462 = vmatprep.subr.mxu0 0.0
      %1463 = vmatpush1.msra.mxu0 0.0
      %1464 = vmatprep.subr.mxu0 0.0
      %1465 = vmatpush1.msra.mxu0 0.0
      %1466 = vmatprep.subr.mxu0 0.0
      %1467 = vmatpush1.msra.mxu0 0.0
      %1468 = vmatprep.subr.mxu0 0.0
      %1469 = vmatpush1.msra.mxu0 0.0
      %1470 = vmatprep.subr.mxu0 0.0
      %1471 = vmatpush1.msra.mxu0 0.0
      %1472 = vmatprep.subr.mxu0 0.0
      %1473 = vmatpush1.msra.mxu0 0.0
      %1474 = vmatprep.subr.mxu0 0.0
      %1475 = vmatpush1.msra.mxu0 0.0
      %1476 = vmatprep.subr.mxu0 0.0
      %1477 = vmatpush1.msra.mxu0 0.0
      %1478 = vmatprep.subr.mxu0 0.0
      %1479 = vmatpush1.msra.mxu0 0.0
      %1480 = vmatprep.subr.mxu0 0.0
      %1481 = vmatpush1.msra.mxu0 0.0
      %1482 = vmatprep.subr.mxu0 0.0
      %1483 = vmatpush1.msra.mxu0 0.0
      %1484 = vmatprep.subr.mxu0 0.0
      %1485 = vmatpush1.msra.mxu0 0.0
      %1486 = vmatprep.subr.mxu0 0.0
      %1487 = vmatpush1.msra.mxu0 0.0
      %1488 = vmatprep.subr.mxu0 0.0
      %1489 = vmatpush1.msra.mxu0 0.0
      %1490 = vmatprep.subr.mxu0 0.0
      %1491 = vmatpush1.msra.mxu0 0.0
      %1492 = vmatprep.subr.mxu0 0.0
      %1493 = vmatpush1.msra.mxu0 0.0
      %1494 = vmatprep.subr.mxu0 0.0
      %1495 = vmatpush1.msra.mxu0 0.0
      %1496 = vmatprep.subr.mxu0 0.0
      %1497 = vmatpush1.msra.mxu0 0.0
      %1498 = vmatprep.subr.mxu0 0.0
      %1499 = vmatpush1.msra.mxu0 0.0
      %1500 = vmatprep.subr.mxu0 0.0
      %1501 = vmatpush1.msra.mxu0 0.0
      %1502 = vmatprep.subr.mxu0 0.0
      %1503 = vmatpush1.msra.mxu0 0.0
      %1504 = vmatprep.subr.mxu0 0.0
      %1505 = vmatpush1.msra.mxu0 0.0
      %1506 = vmatprep.mubr.f32.mxu0 0.0
      %1507 = vmatmul.mubr.f32.gmra.mrb[0].mxu0 %v1363
      %v1508 = vpop.f32.mrb[0].mxu0
      %v1509 = vadd.f32 0.0, %v1508
      %v1510 = vpop.f32.mrb[0].mxu0
      %1511 = vdwg.mxu0
      %v1512 = vadd.f32 %v1343, %v1438
      %v1513 = vadd.f32 %v1344, %v1440
      %v1514 = vadd.f32 %v1345, %v1509
      %v1515 = vld [vmem:[#allocation2] sm:$0xff]
      %v1516 = vld [vmem:[#allocation2 + $0x8] sm:$0xf]
      %s1517 = scalar_lea.vmem %s1, 28
      %v1518 = vld [vmem:[%s1517] sm:$0xf]
      %v1521 = vcombine.high %v1515, %v1515
      %1522 = vrot.lane.b32.xlu0 %v1515, 91
      %v1523 = vpop.permute.xlu0 %1522
      %1524 = vrot.lane.b32.xlu0 %v1521, 91
      %v1525 = vpop.permute.xlu0 %1524
      %1526 = vrot.lane.b32.xlu0 %v1516, 91
      %v1527 = vpop.permute.xlu0 %1526
      %vm1528 = vcmask 744448
      %v1529 = vsel %vm1528, %v1523, %v1525
      %v1530 = vsel %vm1528, %v1525, %v1527
      %v1532 = vsel %vm368, %v1518, 0
      %v1534 = vsel %vm372, %v1529, 0
      %v1536 = vsel %vm372, %v1530, 0
      %v1538 = vsel %vm372, %v1527, 0
      %1540 = vmatprep.subr.mxu0 %v1536
      %1541 = vmatpush1.msra.mxu0 %v1534
      %1542 = vmatprep.subr.mxu0 0.0
      %1543 = vmatpush1.msra.mxu0 0.0
      %1544 = vmatprep.subr.mxu0 0.0
      %1545 = vmatpush1.msra.mxu0 0.0
      %1546 = vmatprep.subr.mxu0 0.0
      %1547 = vmatpush1.msra.mxu0 0.0
      %1548 = vmatprep.subr.mxu0 0.0
      %1549 = vmatpush1.msra.mxu0 0.0
      %1550 = vmatprep.subr.mxu0 0.0
      %1551 = vmatpush1.msra.mxu0 0.0
      %1552 = vmatprep.subr.mxu0 0.0
      %1553 = vmatpush1.msra.mxu0 0.0
      %1554 = vmatprep.subr.mxu0 0.0
      %1555 = vmatpush1.msra.mxu0 0.0
      %1556 = vmatprep.subr.mxu0 0.0
      %1557 = vmatpush1.msra.mxu0 0.0
      %1558 = vmatprep.subr.mxu0 0.0
      %1559 = vmatpush1.msra.mxu0 0.0
      %1560 = vmatprep.subr.mxu0 0.0
      %1561 = vmatpush1.msra.mxu0 0.0
      %1562 = vmatprep.subr.mxu0 0.0
      %1563 = vmatpush1.msra.mxu0 0.0
      %1564 = vmatprep.subr.mxu0 0.0
      %1565 = vmatpush1.msra.mxu0 0.0
      %1566 = vmatprep.subr.mxu0 0.0
      %1567 = vmatpush1.msra.mxu0 0.0
      %1568 = vmatprep.subr.mxu0 0.0
      %1569 = vmatpush1.msra.mxu0 0.0
      %1570 = vmatprep.subr.mxu0 0.0
      %1571 = vmatpush1.msra.mxu0 0.0
      %1572 = vmatprep.subr.mxu0 0.0
      %1573 = vmatpush1.msra.mxu0 0.0
      %1574 = vmatprep.subr.mxu0 0.0
      %1575 = vmatpush1.msra.mxu0 0.0
      %1576 = vmatprep.subr.mxu0 0.0
      %1577 = vmatpush1.msra.mxu0 0.0
      %1578 = vmatprep.subr.mxu0 0.0
      %1579 = vmatpush1.msra.mxu0 0.0
      %1580 = vmatprep.subr.mxu0 0.0
      %1581 = vmatpush1.msra.mxu0 0.0
      %1582 = vmatprep.subr.mxu0 0.0
      %1583 = vmatpush1.msra.mxu0 0.0
      %1584 = vmatprep.subr.mxu0 0.0
      %1585 = vmatpush1.msra.mxu0 0.0
      %1586 = vmatprep.subr.mxu0 0.0
      %1587 = vmatpush1.msra.mxu0 0.0
      %1588 = vmatprep.subr.mxu0 0.0
      %1589 = vmatpush1.msra.mxu0 0.0
      %1590 = vmatprep.subr.mxu0 0.0
      %1591 = vmatpush1.msra.mxu0 0.0
      %1592 = vmatprep.subr.mxu0 0.0
      %1593 = vmatpush1.msra.mxu0 0.0
      %1594 = vmatprep.subr.mxu0 0.0
      %1595 = vmatpush1.msra.mxu0 0.0
      %1596 = vmatprep.subr.mxu0 0.0
      %1597 = vmatpush1.msra.mxu0 0.0
      %1598 = vmatprep.subr.mxu0 0.0
      %1599 = vmatpush1.msra.mxu0 0.0
      %1600 = vmatprep.subr.mxu0 0.0
      %1601 = vmatpush1.msra.mxu0 0.0
      %1602 = vmatprep.subr.mxu0 0.0
      %1603 = vmatpush1.msra.mxu0 0.0
      %1604 = vmatprep.mubr.f32.mxu0 0.0
      %1605 = vmatmul.mubr.f32.gmra.mrb[0].mxu0 %v1532
      %v1606 = vpop.f32.mrb[0].mxu0
      %v1607 = vadd.f32 0.0, %v1606
      %v1608 = vpop.f32.mrb[0].mxu0
      %v1609 = vadd.f32 0.0, %v1608
      %1610 = vdwg.mxu0
      %1611 = vmatprep.subr.mxu0 0.0
      %1612 = vmatpush1.msra.mxu0 %v1538
      %1613 = vmatprep.subr.mxu0 0.0
      %1614 = vmatpush1.msra.mxu0 0.0
      %1615 = vmatprep.subr.mxu0 0.0
      %1616 = vmatpush1.msra.mxu0 0.0
      %1617 = vmatprep.subr.mxu0 0.0
      %1618 = vmatpush1.msra.mxu0 0.0
      %1619 = vmatprep.subr.mxu0 0.0
      %1620 = vmatpush1.msra.mxu0 0.0
      %1621 = vmatprep.subr.mxu0 0.0
      %1622 = vmatpush1.msra.mxu0 0.0
      %1623 = vmatprep.subr.mxu0 0.0
      %1624 = vmatpush1.msra.mxu0 0.0
      %1625 = vmatprep.subr.mxu0 0.0
      %1626 = vmatpush1.msra.mxu0 0.0
      %1627 = vmatprep.subr.mxu0 0.0
      %1628 = vmatpush1.msra.mxu0 0.0
      %1629 = vmatprep.subr.mxu0 0.0
      %1630 = vmatpush1.msra.mxu0 0.0
      %1631 = vmatprep.subr.mxu0 0.0
      %1632 = vmatpush1.msra.mxu0 0.0
      %1633 = vmatprep.subr.mxu0 0.0
      %1634 = vmatpush1.msra.mxu0 0.0
      %1635 = vmatprep.subr.mxu0 0.0
      %1636 = vmatpush1.msra.mxu0 0.0
      %1637 = vmatprep.subr.mxu0 0.0
      %1638 = vmatpush1.msra.mxu0 0.0
      %1639 = vmatprep.subr.mxu0 0.0
      %1640 = vmatpush1.msra.mxu0 0.0
      %1641 = vmatprep.subr.mxu0 0.0
      %1642 = vmatpush1.msra.mxu0 0.0
      %1643 = vmatprep.subr.mxu0 0.0
      %1644 = vmatpush1.msra.mxu0 0.0
      %1645 = vmatprep.subr.mxu0 0.0
      %1646 = vmatpush1.msra.mxu0 0.0
      %1647 = vmatprep.subr.mxu0 0.0
      %1648 = vmatpush1.msra.mxu0 0.0
      %1649 = vmatprep.subr.mxu0 0.0
      %1650 = vmatpush1.msra.mxu0 0.0
      %1651 = vmatprep.subr.mxu0 0.0
      %1652 = vmatpush1.msra.mxu0 0.0
      %1653 = vmatprep.subr.mxu0 0.0
      %1654 = vmatpush1.msra.mxu0 0.0
      %1655 = vmatprep.subr.mxu0 0.0
      %1656 = vmatpush1.msra.mxu0 0.0
      %1657 = vmatprep.subr.mxu0 0.0
      %1658 = vmatpush1.msra.mxu0 0.0
      %1659 = vmatprep.subr.mxu0 0.0
      %1660 = vmatpush1.msra.mxu0 0.0
      %1661 = vmatprep.subr.mxu0 0.0
      %1662 = vmatpush1.msra.mxu0 0.0
      %1663 = vmatprep.subr.mxu0 0.0
      %1664 = vmatpush1.msra.mxu0 0.0
      %1665 = vmatprep.subr.mxu0 0.0
      %1666 = vmatpush1.msra.mxu0 0.0
      %1667 = vmatprep.subr.mxu0 0.0
      %1668 = vmatpush1.msra.mxu0 0.0
      %1669 = vmatprep.subr.mxu0 0.0
      %1670 = vmatpush1.msra.mxu0 0.0
      %1671 = vmatprep.subr.mxu0 0.0
      %1672 = vmatpush1.msra.mxu0 0.0
      %1673 = vmatprep.subr.mxu0 0.0
      %1674 = vmatpush1.msra.mxu0 0.0
      %1675 = vmatprep.mubr.f32.mxu0 0.0
      %1676 = vmatmul.mubr.f32.gmra.mrb[0].mxu0 %v1532
      %v1677 = vpop.f32.mrb[0].mxu0
      %v1678 = vadd.f32 0.0, %v1677
      %v1679 = vpop.f32.mrb[0].mxu0
      %1680 = vdwg.mxu0
      %v1681 = vadd.f32 %v1512, %v1607
      %v1682 = vadd.f32 %v1513, %v1609
      %v1683 = vadd.f32 %v1514, %v1678
      %v1684 = vld [vmem:[#allocation2] sm:$0xff]
      %v1685 = vld [vmem:[#allocation2 + $0x8] sm:$0xf]
      %s1686 = scalar_lea.vmem %s1, 32
      %v1687 = vld [vmem:[%s1686] sm:$0xf]
      %v1690 = vcombine.high %v1684, %v1684
      %1691 = vrot.lane.b32.xlu0 %v1684, 90
      %v1692 = vpop.permute.xlu0 %1691
      %1693 = vrot.lane.b32.xlu0 %v1690, 90
      %v1694 = vpop.permute.xlu0 %1693
      %1695 = vrot.lane.b32.xlu0 %v1685, 90
      %v1696 = vpop.permute.xlu0 %1695
      %vm1697 = vcmask 736256
      %v1698 = vsel %vm1697, %v1692, %v1694
      %v1699 = vsel %vm1697, %v1694, %v1696
      %v1701 = vsel %vm368, %v1687, 0
      %v1703 = vsel %vm372, %v1698, 0
      %v1705 = vsel %vm372, %v1699, 0
      %v1707 = vsel %vm372, %v1696, 0
      %1709 = vmatprep.subr.mxu0 %v1705
      %1710 = vmatpush1.msra.mxu0 %v1703
      %1711 = vmatprep.subr.mxu0 0.0
      %1712 = vmatpush1.msra.mxu0 0.0
      %1713 = vmatprep.subr.mxu0 0.0
      %1714 = vmatpush1.msra.mxu0 0.0
      %1715 = vmatprep.subr.mxu0 0.0
      %1716 = vmatpush1.msra.mxu0 0.0
      %1717 = vmatprep.subr.mxu0 0.0
      %1718 = vmatpush1.msra.mxu0 0.0
      %1719 = vmatprep.subr.mxu0 0.0
      %1720 = vmatpush1.msra.mxu0 0.0
      %1721 = vmatprep.subr.mxu0 0.0
      %1722 = vmatpush1.msra.mxu0 0.0
      %1723 = vmatprep.subr.mxu0 0.0
      %1724 = vmatpush1.msra.mxu0 0.0
      %1725 = vmatprep.subr.mxu0 0.0
      %1726 = vmatpush1.msra.mxu0 0.0
      %1727 = vmatprep.subr.mxu0 0.0
      %1728 = vmatpush1.msra.mxu0 0.0
      %1729 = vmatprep.subr.mxu0 0.0
      %1730 = vmatpush1.msra.mxu0 0.0
      %1731 = vmatprep.subr.mxu0 0.0
      %1732 = vmatpush1.msra.mxu0 0.0
      %1733 = vmatprep.subr.mxu0 0.0
      %1734 = vmatpush1.msra.mxu0 0.0
      %1735 = vmatprep.subr.mxu0 0.0
      %1736 = vmatpush1.msra.mxu0 0.0
      %1737 = vmatprep.subr.mxu0 0.0
      %1738 = vmatpush1.msra.mxu0 0.0
      %1739 = vmatprep.subr.mxu0 0.0
      %1740 = vmatpush1.msra.mxu0 0.0
      %1741 = vmatprep.subr.mxu0 0.0
      %1742 = vmatpush1.msra.mxu0 0.0
      %1743 = vmatprep.subr.mxu0 0.0
      %1744 = vmatpush1.msra.mxu0 0.0
      %1745 = vmatprep.subr.mxu0 0.0
      %1746 = vmatpush1.msra.mxu0 0.0
      %1747 = vmatprep.subr.mxu0 0.0
      %1748 = vmatpush1.msra.mxu0 0.0
      %1749 = vmatprep.subr.mxu0 0.0
      %1750 = vmatpush1.msra.mxu0 0.0
      %1751 = vmatprep.subr.mxu0 0.0
      %1752 = vmatpush1.msra.mxu0 0.0
      %1753 = vmatprep.subr.mxu0 0.0
      %1754 = vmatpush1.msra.mxu0 0.0
      %1755 = vmatprep.subr.mxu0 0.0
      %1756 = vmatpush1.msra.mxu0 0.0
      %1757 = vmatprep.subr.mxu0 0.0
      %1758 = vmatpush1.msra.mxu0 0.0
      %1759 = vmatprep.subr.mxu0 0.0
      %1760 = vmatpush1.msra.mxu0 0.0
      %1761 = vmatprep.subr.mxu0 0.0
      %1762 = vmatpush1.msra.mxu0 0.0
      %1763 = vmatprep.subr.mxu0 0.0
      %1764 = vmatpush1.msra.mxu0 0.0
      %1765 = vmatprep.subr.mxu0 0.0
      %1766 = vmatpush1.msra.mxu0 0.0
      %1767 = vmatprep.subr.mxu0 0.0
      %1768 = vmatpush1.msra.mxu0 0.0
      %1769 = vmatprep.subr.mxu0 0.0
      %1770 = vmatpush1.msra.mxu0 0.0
      %1771 = vmatprep.subr.mxu0 0.0
      %1772 = vmatpush1.msra.mxu0 0.0
      %1773 = vmatprep.mubr.f32.mxu0 0.0
      %1774 = vmatmul.mubr.f32.gmra.mrb[0].mxu0 %v1701
      %v1775 = vpop.f32.mrb[0].mxu0
      %v1776 = vadd.f32 0.0, %v1775
      %v1777 = vpop.f32.mrb[0].mxu0
      %v1778 = vadd.f32 0.0, %v1777
      %1779 = vdwg.mxu0
      %1780 = vmatprep.subr.mxu0 0.0
      %1781 = vmatpush1.msra.mxu0 %v1707
      %1782 = vmatprep.subr.mxu0 0.0
      %1783 = vmatpush1.msra.mxu0 0.0
      %1784 = vmatprep.subr.mxu0 0.0
      %1785 = vmatpush1.msra.mxu0 0.0
      %1786 = vmatprep.subr.mxu0 0.0
      %1787 = vmatpush1.msra.mxu0 0.0
      %1788 = vmatprep.subr.mxu0 0.0
      %1789 = vmatpush1.msra.mxu0 0.0
      %1790 = vmatprep.subr.mxu0 0.0
      %1791 = vmatpush1.msra.mxu0 0.0
      %1792 = vmatprep.subr.mxu0 0.0
      %1793 = vmatpush1.msra.mxu0 0.0
      %1794 = vmatprep.subr.mxu0 0.0
      %1795 = vmatpush1.msra.mxu0 0.0
      %1796 = vmatprep.subr.mxu0 0.0
      %1797 = vmatpush1.msra.mxu0 0.0
      %1798 = vmatprep.subr.mxu0 0.0
      %1799 = vmatpush1.msra.mxu0 0.0
      %1800 = vmatprep.subr.mxu0 0.0
      %1801 = vmatpush1.msra.mxu0 0.0
      %1802 = vmatprep.subr.mxu0 0.0
      %1803 = vmatpush1.msra.mxu0 0.0
      %1804 = vmatprep.subr.mxu0 0.0
      %1805 = vmatpush1.msra.mxu0 0.0
      %1806 = vmatprep.subr.mxu0 0.0
      %1807 = vmatpush1.msra.mxu0 0.0
      %1808 = vmatprep.subr.mxu0 0.0
      %1809 = vmatpush1.msra.mxu0 0.0
      %1810 = vmatprep.subr.mxu0 0.0
      %1811 = vmatpush1.msra.mxu0 0.0
      %1812 = vmatprep.subr.mxu0 0.0
      %1813 = vmatpush1.msra.mxu0 0.0
      %1814 = vmatprep.subr.mxu0 0.0
      %1815 = vmatpush1.msra.mxu0 0.0
      %1816 = vmatprep.subr.mxu0 0.0
      %1817 = vmatpush1.msra.mxu0 0.0
      %1818 = vmatprep.subr.mxu0 0.0
      %1819 = vmatpush1.msra.mxu0 0.0
      %1820 = vmatprep.subr.mxu0 0.0
      %1821 = vmatpush1.msra.mxu0 0.0
      %1822 = vmatprep.subr.mxu0 0.0
      %1823 = vmatpush1.msra.mxu0 0.0
      %1824 = vmatprep.subr.mxu0 0.0
      %1825 = vmatpush1.msra.mxu0 0.0
      %1826 = vmatprep.subr.mxu0 0.0
      %1827 = vmatpush1.msra.mxu0 0.0
      %1828 = vmatprep.subr.mxu0 0.0
      %1829 = vmatpush1.msra.mxu0 0.0
      %1830 = vmatprep.subr.mxu0 0.0
      %1831 = vmatpush1.msra.mxu0 0.0
      %1832 = vmatprep.subr.mxu0 0.0
      %1833 = vmatpush1.msra.mxu0 0.0
      %1834 = vmatprep.subr.mxu0 0.0
      %1835 = vmatpush1.msra.mxu0 0.0
      %1836 = vmatprep.subr.mxu0 0.0
      %1837 = vmatpush1.msra.mxu0 0.0
      %1838 = vmatprep.subr.mxu0 0.0
      %1839 = vmatpush1.msra.mxu0 0.0
      %1840 = vmatprep.subr.mxu0 0.0
      %1841 = vmatpush1.msra.mxu0 0.0
      %1842 = vmatprep.subr.mxu0 0.0
      %1843 = vmatpush1.msra.mxu0 0.0
      %1844 = vmatprep.mubr.f32.mxu0 0.0
      %1845 = vmatmul.mubr.f32.gmra.mrb[0].mxu0 %v1701
      %v1846 = vpop.f32.mrb[0].mxu0
      %v1847 = vadd.f32 0.0, %v1846
      %v1848 = vpop.f32.mrb[0].mxu0
      %1849 = vdwg.mxu0
      %v1850 = vadd.f32 %v1681, %v1776
      %v1851 = vadd.f32 %v1682, %v1778
      %v1852 = vadd.f32 %v1683, %v1847
      %v1853 = vld [vmem:[%s2] sm:$0xf]
      %1855 = vset.pattern.permute.xlu0 0
      %1856 = vperm.xlu0 %1855, %v1853
      %v1857 = vpop.permute.xlu0 %1856
      %v1859 = vadd.f32 %v1850, %v1857
      %v1860 = vadd.f32 %v1851, %v1857
      %v1861 = vadd.f32 %v1852, %v1857
      %v1862 = vsub.f32 0.0, %v1859
      %v1863 = vsub.f32 0.0, %v1860
      %v1864 = vsub.f32 0.0, %v1861
      %v1865 = vmul.f32 %v1862, 1.442695
      %v1866 = vpow.pop %v1865
      %v1867 = vmul.f32 %v1863, 1.442695
      %v1868 = vpow.pop %v1867
      %v1869 = vmul.f32 %v1864, 1.442695
      %v1870 = vpow.pop %v1869
      %v1871 = vadd.f32 %v1866, 1.0
      %v1872 = vadd.f32 %v1868, 1.0
      %v1873 = vadd.f32 %v1870, 1.0
      %v1874 = vrcp.pop %v1871
      %v1875 = vmul.f32 1.0, %v1874
      %v1876 = vrcp.pop %v1872
      %v1877 = vmul.f32 1.0, %v1876
      %v1878 = vrcp.pop %v1873
      %v1879 = vmul.f32 1.0, %v1878
      %v1880 = vmul.f32 %v1859, %v1875
      %v1881 = vmul.f32 %v1860, %v1877
      %v1882 = vmul.f32 %v1861, %v1879
      %v1883 = vld [vmem:[%s5] sm:$0x7]
      %v1885 = vlaneseq
      %v1886 = vshrl.u32 %v1885, 7
      %v1887 = vsub.s32 0, %v1886
      %v1888 = vrot.slane %v1883, %v1887
      %v1889 = vlaneseq
      %v1890 = vshrl.u32 %v1889, 7
      %v1891 = vsub.s32 1, %v1890
      %v1892 = vrot.slane %v1883, %v1891
      %v1893 = vlaneseq
      %v1894 = vshrl.u32 %v1893, 7
      %v1895 = vsub.s32 2, %v1894
      %v1896 = vrot.slane %v1883, %v1895
      %v1900 = vmul.f32 %v1880, %v1888
      %v1901 = vmul.f32 %v1881, %v1892
      %v1902 = vmul.f32 %v1882, %v1896
      %1903 = vst [vmem:[#allocation3] sm:$0xff] 0.0
      %1904 = vst.msk [vmem:[#allocation3 + $0x8] sm:$0xf] %vm255, 0.0
      %v1908 = vcombine.low %v1900, %v1901
      %1909 = vrot.lane.b32.xlu0 %v1908, 19
      %v1910 = vpop.permute.xlu0 %1909
      %1911 = vrot.lane.b32.xlu0 %v1902, 19
      %v1912 = vpop.permute.xlu0 %1911
      %v1913 = vrot.slane %v1910, 4
      %vm1914 = vcmask 154624
      %v1915 = vsel %vm1914, %v1913, %v1910
      %v1916 = vsel %vm1914, %v1913, %v1912
      %vm1919 = vcmask 1043608
      %vm1920 = vcmask 1047556
      %vm1921 = vmor %vm1920, %vm1919
      %1922 = vst.msk [vmem:[#allocation3] sm:$0xff] %vm1921, %v1915
      %vm1923 = vcmask 412672
      %1924 = vst.msk [vmem:[#allocation3 + $0x8] sm:$0xf] %vm1923, %v1916
      %v1925 = vld [vmem:[#allocation3] sm:$0xff]
      %v1926 = vld [vmem:[#allocation3 + $0x8] sm:$0xf]
      %v1927 = vld [vmem:[%s3] sm:$0xf]
      %s1928 = scalar_lea.vmem %s3, 4
      %v1929 = vld [vmem:[%s1928] sm:$0xf]
      %v1932 = vcombine.high %v1925, %v1925
      %1933 = vrot.lane.b32.xlu0 %v1925, 127
      %v1934 = vpop.permute.xlu0 %1933
      %1935 = vrot.lane.b32.xlu0 %v1932, 127
      %v1936 = vpop.permute.xlu0 %1935
      %1937 = vrot.lane.b32.xlu0 %v1926, 127
      %v1938 = vpop.permute.xlu0 %1937
      %v1939 = vsel %vm365, %v1934, %v1936
      %v1940 = vsel %vm365, %v1936, %v1938
      %v1942 = vsel %vm368, %v1929, 0
      %v1944 = vsel %vm372, %v1939, 0
      %v1946 = vsel %vm372, %v1940, 0
      %v1948 = vsel %vm372, %v1938, 0
      %1950 = vmatprep.subr.mxu0 %v1946
      %1951 = vmatpush1.msra.mxu0 %v1944
      %1952 = vmatprep.subr.mxu0 0.0
      %1953 = vmatpush1.msra.mxu0 0.0
      %1954 = vmatprep.subr.mxu0 0.0
      %1955 = vmatpush1.msra.mxu0 0.0
      %1956 = vmatprep.subr.mxu0 0.0
      %1957 = vmatpush1.msra.mxu0 0.0
      %1958 = vmatprep.subr.mxu0 0.0
      %1959 = vmatpush1.msra.mxu0 0.0
      %1960 = vmatprep.subr.mxu0 0.0
      %1961 = vmatpush1.msra.mxu0 0.0
      %1962 = vmatprep.subr.mxu0 0.0
      %1963 = vmatpush1.msra.mxu0 0.0
      %1964 = vmatprep.subr.mxu0 0.0
      %1965 = vmatpush1.msra.mxu0 0.0
      %1966 = vmatprep.subr.mxu0 0.0
      %1967 = vmatpush1.msra.mxu0 0.0
      %1968 = vmatprep.subr.mxu0 0.0
      %1969 = vmatpush1.msra.mxu0 0.0
      %1970 = vmatprep.subr.mxu0 0.0
      %1971 = vmatpush1.msra.mxu0 0.0
      %1972 = vmatprep.subr.mxu0 0.0
      %1973 = vmatpush1.msra.mxu0 0.0
      %1974 = vmatprep.subr.mxu0 0.0
      %1975 = vmatpush1.msra.mxu0 0.0
      %1976 = vmatprep.subr.mxu0 0.0
      %1977 = vmatpush1.msra.mxu0 0.0
      %1978 = vmatprep.subr.mxu0 0.0
      %1979 = vmatpush1.msra.mxu0 0.0
      %1980 = vmatprep.subr.mxu0 0.0
      %1981 = vmatpush1.msra.mxu0 0.0
      %1982 = vmatprep.subr.mxu0 0.0
      %1983 = vmatpush1.msra.mxu0 0.0
      %1984 = vmatprep.subr.mxu0 0.0
      %1985 = vmatpush1.msra.mxu0 0.0
      %1986 = vmatprep.subr.mxu0 0.0
      %1987 = vmatpush1.msra.mxu0 0.0
      %1988 = vmatprep.subr.mxu0 0.0
      %1989 = vmatpush1.msra.mxu0 0.0
      %1990 = vmatprep.subr.mxu0 0.0
      %1991 = vmatpush1.msra.mxu0 0.0
      %1992 = vmatprep.subr.mxu0 0.0
      %1993 = vmatpush1.msra.mxu0 0.0
      %1994 = vmatprep.subr.mxu0 0.0
      %1995 = vmatpush1.msra.mxu0 0.0
      %1996 = vmatprep.subr.mxu0 0.0
      %1997 = vmatpush1.msra.mxu0 0.0
      %1998 = vmatprep.subr.mxu0 0.0
      %1999 = vmatpush1.msra.mxu0 0.0
      %2000 = vmatprep.subr.mxu0 0.0
      %2001 = vmatpush1.msra.mxu0 0.0
      %2002 = vmatprep.subr.mxu0 0.0
      %2003 = vmatpush1.msra.mxu0 0.0
      %2004 = vmatprep.subr.mxu0 0.0
      %2005 = vmatpush1.msra.mxu0 0.0
      %2006 = vmatprep.subr.mxu0 0.0
      %2007 = vmatpush1.msra.mxu0 0.0
      %2008 = vmatprep.subr.mxu0 0.0
      %2009 = vmatpush1.msra.mxu0 0.0
      %2010 = vmatprep.subr.mxu0 0.0
      %2011 = vmatpush1.msra.mxu0 0.0
      %2012 = vmatprep.subr.mxu0 0.0
      %2013 = vmatpush1.msra.mxu0 0.0
      %2014 = vmatprep.mubr.f32.mxu0 0.0
      %2015 = vmatmul.mubr.f32.gmra.mrb[0].mxu0 %v1942
      %v2016 = vpop.f32.mrb[0].mxu0
      %v2017 = vadd.f32 0.0, %v2016
      %v2018 = vpop.f32.mrb[0].mxu0
      %v2019 = vadd.f32 0.0, %v2018
      %2020 = vdwg.mxu0
      %2021 = vmatprep.subr.mxu0 0.0
      %2022 = vmatpush1.msra.mxu0 %v1948
      %2023 = vmatprep.subr.mxu0 0.0
      %2024 = vmatpush1.msra.mxu0 0.0
      %2025 = vmatprep.subr.mxu0 0.0
      %2026 = vmatpush1.msra.mxu0 0.0
      %2027 = vmatprep.subr.mxu0 0.0
      %2028 = vmatpush1.msra.mxu0 0.0
      %2029 = vmatprep.subr.mxu0 0.0
      %2030 = vmatpush1.msra.mxu0 0.0
      %2031 = vmatprep.subr.mxu0 0.0
      %2032 = vmatpush1.msra.mxu0 0.0
      %2033 = vmatprep.subr.mxu0 0.0
      %2034 = vmatpush1.msra.mxu0 0.0
      %2035 = vmatprep.subr.mxu0 0.0
      %2036 = vmatpush1.msra.mxu0 0.0
      %2037 = vmatprep.subr.mxu0 0.0
      %2038 = vmatpush1.msra.mxu0 0.0
      %2039 = vmatprep.subr.mxu0 0.0
      %2040 = vmatpush1.msra.mxu0 0.0
      %2041 = vmatprep.subr.mxu0 0.0
      %2042 = vmatpush1.msra.mxu0 0.0
      %2043 = vmatprep.subr.mxu0 0.0
      %2044 = vmatpush1.msra.mxu0 0.0
      %2045 = vmatprep.subr.mxu0 0.0
      %2046 = vmatpush1.msra.mxu0 0.0
      %2047 = vmatprep.subr.mxu0 0.0
      %2048 = vmatpush1.msra.mxu0 0.0
      %2049 = vmatprep.subr.mxu0 0.0
      %2050 = vmatpush1.msra.mxu0 0.0
      %2051 = vmatprep.subr.mxu0 0.0
      %2052 = vmatpush1.msra.mxu0 0.0
      %2053 = vmatprep.subr.mxu0 0.0
      %2054 = vmatpush1.msra.mxu0 0.0
      %2055 = vmatprep.subr.mxu0 0.0
      %2056 = vmatpush1.msra.mxu0 0.0
      %2057 = vmatprep.subr.mxu0 0.0
      %2058 = vmatpush1.msra.mxu0 0.0
      %2059 = vmatprep.subr.mxu0 0.0
      %2060 = vmatpush1.msra.mxu0 0.0
      %2061 = vmatprep.subr.mxu0 0.0
      %2062 = vmatpush1.msra.mxu0 0.0
      %2063 = vmatprep.subr.mxu0 0.0
      %2064 = vmatpush1.msra.mxu0 0.0
      %2065 = vmatprep.subr.mxu0 0.0
      %2066 = vmatpush1.msra.mxu0 0.0
      %2067 = vmatprep.subr.mxu0 0.0
      %2068 = vmatpush1.msra.mxu0 0.0
      %2069 = vmatprep.subr.mxu0 0.0
      %2070 = vmatpush1.msra.mxu0 0.0
      %2071 = vmatprep.subr.mxu0 0.0
      %2072 = vmatpush1.msra.mxu0 0.0
      %2073 = vmatprep.subr.mxu0 0.0
      %2074 = vmatpush1.msra.mxu0 0.0
      %2075 = vmatprep.subr.mxu0 0.0
      %2076 = vmatpush1.msra.mxu0 0.0
      %2077 = vmatprep.subr.mxu0 0.0
      %2078 = vmatpush1.msra.mxu0 0.0
      %2079 = vmatprep.subr.mxu0 0.0
      %2080 = vmatpush1.msra.mxu0 0.0
      %2081 = vmatprep.subr.mxu0 0.0
      %2082 = vmatpush1.msra.mxu0 0.0
      %2083 = vmatprep.subr.mxu0 0.0
      %2084 = vmatpush1.msra.mxu0 0.0
      %2085 = vmatprep.mubr.f32.mxu0 0.0
      %2086 = vmatmul.mubr.f32.gmra.mrb[0].mxu0 %v1942
      %v2087 = vpop.f32.mrb[0].mxu0
      %v2088 = vadd.f32 0.0, %v2087
      %v2089 = vpop.f32.mrb[0].mxu0
      %2090 = vdwg.mxu0
      %v2092 = vsel %vm368, %v1927, 0
      %v2094 = vsel %vm372, %v1925, 0
      %v2096 = vsel %vm372, %v1932, 0
      %v2098 = vsel %vm372, %v1926, 0
      %2100 = vmatprep.subr.mxu0 %v2096
      %2101 = vmatpush1.msra.mxu0 %v2094
      %2102 = vmatprep.subr.mxu0 0.0
      %2103 = vmatpush1.msra.mxu0 0.0
      %2104 = vmatprep.subr.mxu0 0.0
      %2105 = vmatpush1.msra.mxu0 0.0
      %2106 = vmatprep.subr.mxu0 0.0
      %2107 = vmatpush1.msra.mxu0 0.0
      %2108 = vmatprep.subr.mxu0 0.0
      %2109 = vmatpush1.msra.mxu0 0.0
      %2110 = vmatprep.subr.mxu0 0.0
      %2111 = vmatpush1.msra.mxu0 0.0
      %2112 = vmatprep.subr.mxu0 0.0
      %2113 = vmatpush1.msra.mxu0 0.0
      %2114 = vmatprep.subr.mxu0 0.0
      %2115 = vmatpush1.msra.mxu0 0.0
      %2116 = vmatprep.subr.mxu0 0.0
      %2117 = vmatpush1.msra.mxu0 0.0
      %2118 = vmatprep.subr.mxu0 0.0
      %2119 = vmatpush1.msra.mxu0 0.0
      %2120 = vmatprep.subr.mxu0 0.0
      %2121 = vmatpush1.msra.mxu0 0.0
      %2122 = vmatprep.subr.mxu0 0.0
      %2123 = vmatpush1.msra.mxu0 0.0
      %2124 = vmatprep.subr.mxu0 0.0
      %2125 = vmatpush1.msra.mxu0 0.0
      %2126 = vmatprep.subr.mxu0 0.0
      %2127 = vmatpush1.msra.mxu0 0.0
      %2128 = vmatprep.subr.mxu0 0.0
      %2129 = vmatpush1.msra.mxu0 0.0
      %2130 = vmatprep.subr.mxu0 0.0
      %2131 = vmatpush1.msra.mxu0 0.0
      %2132 = vmatprep.subr.mxu0 0.0
      %2133 = vmatpush1.msra.mxu0 0.0
      %2134 = vmatprep.subr.mxu0 0.0
      %2135 = vmatpush1.msra.mxu0 0.0
      %2136 = vmatprep.subr.mxu0 0.0
      %2137 = vmatpush1.msra.mxu0 0.0
      %2138 = vmatprep.subr.mxu0 0.0
      %2139 = vmatpush1.msra.mxu0 0.0
      %2140 = vmatprep.subr.mxu0 0.0
      %2141 = vmatpush1.msra.mxu0 0.0
      %2142 = vmatprep.subr.mxu0 0.0
      %2143 = vmatpush1.msra.mxu0 0.0
      %2144 = vmatprep.subr.mxu0 0.0
      %2145 = vmatpush1.msra.mxu0 0.0
      %2146 = vmatprep.subr.mxu0 0.0
      %2147 = vmatpush1.msra.mxu0 0.0
      %2148 = vmatprep.subr.mxu0 0.0
      %2149 = vmatpush1.msra.mxu0 0.0
      %2150 = vmatprep.subr.mxu0 0.0
      %2151 = vmatpush1.msra.mxu0 0.0
      %2152 = vmatprep.subr.mxu0 0.0
      %2153 = vmatpush1.msra.mxu0 0.0
      %2154 = vmatprep.subr.mxu0 0.0
      %2155 = vmatpush1.msra.mxu0 0.0
      %2156 = vmatprep.subr.mxu0 0.0
      %2157 = vmatpush1.msra.mxu0 0.0
      %2158 = vmatprep.subr.mxu0 0.0
      %2159 = vmatpush1.msra.mxu0 0.0
      %2160 = vmatprep.subr.mxu0 0.0
      %2161 = vmatpush1.msra.mxu0 0.0
      %2162 = vmatprep.subr.mxu0 0.0
      %2163 = vmatpush1.msra.mxu0 0.0
      %2164 = vmatprep.mubr.f32.mxu0 0.0
      %2165 = vmatmul.mubr.f32.gmra.mrb[0].mxu0 %v2092
      %v2166 = vpop.f32.mrb[0].mxu0
      %v2167 = vadd.f32 %v2017, %v2166
      %v2168 = vpop.f32.mrb[0].mxu0
      %v2169 = vadd.f32 %v2019, %v2168
      %2170 = vdwg.mxu0
      %2171 = vmatprep.subr.mxu0 0.0
      %2172 = vmatpush1.msra.mxu0 %v2098
      %2173 = vmatprep.subr.mxu0 0.0
      %2174 = vmatpush1.msra.mxu0 0.0
      %2175 = vmatprep.subr.mxu0 0.0
      %2176 = vmatpush1.msra.mxu0 0.0
      %2177 = vmatprep.subr.mxu0 0.0
      %2178 = vmatpush1.msra.mxu0 0.0
      %2179 = vmatprep.subr.mxu0 0.0
      %2180 = vmatpush1.msra.mxu0 0.0
      %2181 = vmatprep.subr.mxu0 0.0
      %2182 = vmatpush1.msra.mxu0 0.0
      %2183 = vmatprep.subr.mxu0 0.0
      %2184 = vmatpush1.msra.mxu0 0.0
      %2185 = vmatprep.subr.mxu0 0.0
      %2186 = vmatpush1.msra.mxu0 0.0
      %2187 = vmatprep.subr.mxu0 0.0
      %2188 = vmatpush1.msra.mxu0 0.0
      %2189 = vmatprep.subr.mxu0 0.0
      %2190 = vmatpush1.msra.mxu0 0.0
      %2191 = vmatprep.subr.mxu0 0.0
      %2192 = vmatpush1.msra.mxu0 0.0
      %2193 = vmatprep.subr.mxu0 0.0
      %2194 = vmatpush1.msra.mxu0 0.0
      %2195 = vmatprep.subr.mxu0 0.0
      %2196 = vmatpush1.msra.mxu0 0.0
      %2197 = vmatprep.subr.mxu0 0.0
      %2198 = vmatpush1.msra.mxu0 0.0
      %2199 = vmatprep.subr.mxu0 0.0
      %2200 = vmatpush1.msra.mxu0 0.0
      %2201 = vmatprep.subr.mxu0 0.0
      %2202 = vmatpush1.msra.mxu0 0.0
      %2203 = vmatprep.subr.mxu0 0.0
      %2204 = vmatpush1.msra.mxu0 0.0
      %2205 = vmatprep.subr.mxu0 0.0
      %2206 = vmatpush1.msra.mxu0 0.0
      %2207 = vmatprep.subr.mxu0 0.0
      %2208 = vmatpush1.msra.mxu0 0.0
      %2209 = vmatprep.subr.mxu0 0.0
      %2210 = vmatpush1.msra.mxu0 0.0
      %2211 = vmatprep.subr.mxu0 0.0
      %2212 = vmatpush1.msra.mxu0 0.0
      %2213 = vmatprep.subr.mxu0 0.0
      %2214 = vmatpush1.msra.mxu0 0.0
      %2215 = vmatprep.subr.mxu0 0.0
      %2216 = vmatpush1.msra.mxu0 0.0
      %2217 = vmatprep.subr.mxu0 0.0
      %2218 = vmatpush1.msra.mxu0 0.0
      %2219 = vmatprep.subr.mxu0 0.0
      %2220 = vmatpush1.msra.mxu0 0.0
      %2221 = vmatprep.subr.mxu0 0.0
      %2222 = vmatpush1.msra.mxu0 0.0
      %2223 = vmatprep.subr.mxu0 0.0
      %2224 = vmatpush1.msra.mxu0 0.0
      %2225 = vmatprep.subr.mxu0 0.0
      %2226 = vmatpush1.msra.mxu0 0.0
      %2227 = vmatprep.subr.mxu0 0.0
      %2228 = vmatpush1.msra.mxu0 0.0
      %2229 = vmatprep.subr.mxu0 0.0
      %2230 = vmatpush1.msra.mxu0 0.0
      %2231 = vmatprep.subr.mxu0 0.0
      %2232 = vmatpush1.msra.mxu0 0.0
      %2233 = vmatprep.subr.mxu0 0.0
      %2234 = vmatpush1.msra.mxu0 0.0
      %2235 = vmatprep.mubr.f32.mxu0 0.0
      %2236 = vmatmul.mubr.f32.gmra.mrb[0].mxu0 %v2092
      %v2237 = vpop.f32.mrb[0].mxu0
      %v2238 = vadd.f32 %v2088, %v2237
      %v2239 = vpop.f32.mrb[0].mxu0
      %2240 = vdwg.mxu0
      %v2241 = vld [vmem:[#allocation3] sm:$0xff]
      %v2242 = vld [vmem:[#allocation3 + $0x8] sm:$0xf]
      %s2243 = scalar_lea.vmem %s3, 8
      %v2244 = vld [vmem:[%s2243] sm:$0xf]
      %v2247 = vcombine.high %v2241, %v2241
      %2248 = vrot.lane.b32.xlu0 %v2241, 126
      %v2249 = vpop.permute.xlu0 %2248
      %2250 = vrot.lane.b32.xlu0 %v2247, 126
      %v2251 = vpop.permute.xlu0 %2250
      %2252 = vrot.lane.b32.xlu0 %v2242, 126
      %v2253 = vpop.permute.xlu0 %2252
      %v2254 = vsel %vm683, %v2249, %v2251
      %v2255 = vsel %vm683, %v2251, %v2253
      %v2257 = vsel %vm368, %v2244, 0
      %v2259 = vsel %vm372, %v2254, 0
      %v2261 = vsel %vm372, %v2255, 0
      %v2263 = vsel %vm372, %v2253, 0
      %2265 = vmatprep.subr.mxu0 %v2261
      %2266 = vmatpush1.msra.mxu0 %v2259
      %2267 = vmatprep.subr.mxu0 0.0
      %2268 = vmatpush1.msra.mxu0 0.0
      %2269 = vmatprep.subr.mxu0 0.0
      %2270 = vmatpush1.msra.mxu0 0.0
      %2271 = vmatprep.subr.mxu0 0.0
      %2272 = vmatpush1.msra.mxu0 0.0
      %2273 = vmatprep.subr.mxu0 0.0
      %2274 = vmatpush1.msra.mxu0 0.0
      %2275 = vmatprep.subr.mxu0 0.0
      %2276 = vmatpush1.msra.mxu0 0.0
      %2277 = vmatprep.subr.mxu0 0.0
      %2278 = vmatpush1.msra.mxu0 0.0
      %2279 = vmatprep.subr.mxu0 0.0
      %2280 = vmatpush1.msra.mxu0 0.0
      %2281 = vmatprep.subr.mxu0 0.0
      %2282 = vmatpush1.msra.mxu0 0.0
      %2283 = vmatprep.subr.mxu0 0.0
      %2284 = vmatpush1.msra.mxu0 0.0
      %2285 = vmatprep.subr.mxu0 0.0
      %2286 = vmatpush1.msra.mxu0 0.0
      %2287 = vmatprep.subr.mxu0 0.0
      %2288 = vmatpush1.msra.mxu0 0.0
      %2289 = vmatprep.subr.mxu0 0.0
      %2290 = vmatpush1.msra.mxu0 0.0
      %2291 = vmatprep.subr.mxu0 0.0
      %2292 = vmatpush1.msra.mxu0 0.0
      %2293 = vmatprep.subr.mxu0 0.0
      %2294 = vmatpush1.msra.mxu0 0.0
      %2295 = vmatprep.subr.mxu0 0.0
      %2296 = vmatpush1.msra.mxu0 0.0
      %2297 = vmatprep.subr.mxu0 0.0
      %2298 = vmatpush1.msra.mxu0 0.0
      %2299 = vmatprep.subr.mxu0 0.0
      %2300 = vmatpush1.msra.mxu0 0.0
      %2301 = vmatprep.subr.mxu0 0.0
      %2302 = vmatpush1.msra.mxu0 0.0
      %2303 = vmatprep.subr.mxu0 0.0
      %2304 = vmatpush1.msra.mxu0 0.0
      %2305 = vmatprep.subr.mxu0 0.0
      %2306 = vmatpush1.msra.mxu0 0.0
      %2307 = vmatprep.subr.mxu0 0.0
      %2308 = vmatpush1.msra.mxu0 0.0
      %2309 = vmatprep.subr.mxu0 0.0
      %2310 = vmatpush1.msra.mxu0 0.0
      %2311 = vmatprep.subr.mxu0 0.0
      %2312 = vmatpush1.msra.mxu0 0.0
      %2313 = vmatprep.subr.mxu0 0.0
      %2314 = vmatpush1.msra.mxu0 0.0
      %2315 = vmatprep.subr.mxu0 0.0
      %2316 = vmatpush1.msra.mxu0 0.0
      %2317 = vmatprep.subr.mxu0 0.0
      %2318 = vmatpush1.msra.mxu0 0.0
      %2319 = vmatprep.subr.mxu0 0.0
      %2320 = vmatpush1.msra.mxu0 0.0
      %2321 = vmatprep.subr.mxu0 0.0
      %2322 = vmatpush1.msra.mxu0 0.0
      %2323 = vmatprep.subr.mxu0 0.0
      %2324 = vmatpush1.msra.mxu0 0.0
      %2325 = vmatprep.subr.mxu0 0.0
      %2326 = vmatpush1.msra.mxu0 0.0
      %2327 = vmatprep.subr.mxu0 0.0
      %2328 = vmatpush1.msra.mxu0 0.0
      %2329 = vmatprep.mubr.f32.mxu0 0.0
      %2330 = vmatmul.mubr.f32.gmra.mrb[0].mxu0 %v2257
      %v2331 = vpop.f32.mrb[0].mxu0
      %v2332 = vadd.f32 0.0, %v2331
      %v2333 = vpop.f32.mrb[0].mxu0
      %v2334 = vadd.f32 0.0, %v2333
      %2335 = vdwg.mxu0
      %2336 = vmatprep.subr.mxu0 0.0
      %2337 = vmatpush1.msra.mxu0 %v2263
      %2338 = vmatprep.subr.mxu0 0.0
      %2339 = vmatpush1.msra.mxu0 0.0
      %2340 = vmatprep.subr.mxu0 0.0
      %2341 = vmatpush1.msra.mxu0 0.0
      %2342 = vmatprep.subr.mxu0 0.0
      %2343 = vmatpush1.msra.mxu0 0.0
      %2344 = vmatprep.subr.mxu0 0.0
      %2345 = vmatpush1.msra.mxu0 0.0
      %2346 = vmatprep.subr.mxu0 0.0
      %2347 = vmatpush1.msra.mxu0 0.0
      %2348 = vmatprep.subr.mxu0 0.0
      %2349 = vmatpush1.msra.mxu0 0.0
      %2350 = vmatprep.subr.mxu0 0.0
      %2351 = vmatpush1.msra.mxu0 0.0
      %2352 = vmatprep.subr.mxu0 0.0
      %2353 = vmatpush1.msra.mxu0 0.0
      %2354 = vmatprep.subr.mxu0 0.0
      %2355 = vmatpush1.msra.mxu0 0.0
      %2356 = vmatprep.subr.mxu0 0.0
      %2357 = vmatpush1.msra.mxu0 0.0
      %2358 = vmatprep.subr.mxu0 0.0
      %2359 = vmatpush1.msra.mxu0 0.0
      %2360 = vmatprep.subr.mxu0 0.0
      %2361 = vmatpush1.msra.mxu0 0.0
      %2362 = vmatprep.subr.mxu0 0.0
      %2363 = vmatpush1.msra.mxu0 0.0
      %2364 = vmatprep.subr.mxu0 0.0
      %2365 = vmatpush1.msra.mxu0 0.0
      %2366 = vmatprep.subr.mxu0 0.0
      %2367 = vmatpush1.msra.mxu0 0.0
      %2368 = vmatprep.subr.mxu0 0.0
      %2369 = vmatpush1.msra.mxu0 0.0
      %2370 = vmatprep.subr.mxu0 0.0
      %2371 = vmatpush1.msra.mxu0 0.0
      %2372 = vmatprep.subr.mxu0 0.0
      %2373 = vmatpush1.msra.mxu0 0.0
      %2374 = vmatprep.subr.mxu0 0.0
      %2375 = vmatpush1.msra.mxu0 0.0
      %2376 = vmatprep.subr.mxu0 0.0
      %2377 = vmatpush1.msra.mxu0 0.0
      %2378 = vmatprep.subr.mxu0 0.0
      %2379 = vmatpush1.msra.mxu0 0.0
      %2380 = vmatprep.subr.mxu0 0.0
      %2381 = vmatpush1.msra.mxu0 0.0
      %2382 = vmatprep.subr.mxu0 0.0
      %2383 = vmatpush1.msra.mxu0 0.0
      %2384 = vmatprep.subr.mxu0 0.0
      %2385 = vmatpush1.msra.mxu0 0.0
      %2386 = vmatprep.subr.mxu0 0.0
      %2387 = vmatpush1.msra.mxu0 0.0
      %2388 = vmatprep.subr.mxu0 0.0
      %2389 = vmatpush1.msra.mxu0 0.0
      %2390 = vmatprep.subr.mxu0 0.0
      %2391 = vmatpush1.msra.mxu0 0.0
      %2392 = vmatprep.subr.mxu0 0.0
      %2393 = vmatpush1.msra.mxu0 0.0
      %2394 = vmatprep.subr.mxu0 0.0
      %2395 = vmatpush1.msra.mxu0 0.0
      %2396 = vmatprep.subr.mxu0 0.0
      %2397 = vmatpush1.msra.mxu0 0.0
      %2398 = vmatprep.subr.mxu0 0.0
      %2399 = vmatpush1.msra.mxu0 0.0
      %2400 = vmatprep.mubr.f32.mxu0 0.0
      %2401 = vmatmul.mubr.f32.gmra.mrb[0].mxu0 %v2257
      %v2402 = vpop.f32.mrb[0].mxu0
      %v2403 = vadd.f32 0.0, %v2402
      %v2404 = vpop.f32.mrb[0].mxu0
      %2405 = vdwg.mxu0
      %v2406 = vadd.f32 %v2167, %v2332
      %v2407 = vadd.f32 %v2169, %v2334
      %v2408 = vadd.f32 %v2238, %v2403
      %v2409 = vld [vmem:[#allocation3] sm:$0xff]
      %v2410 = vld [vmem:[#allocation3 + $0x8] sm:$0xf]
      %s2411 = scalar_lea.vmem %s3, 12
      %v2412 = vld [vmem:[%s2411] sm:$0xf]
      %v2415 = vcombine.high %v2409, %v2409
      %2416 = vrot.lane.b32.xlu0 %v2409, 110
      %v2417 = vpop.permute.xlu0 %2416
      %2418 = vrot.lane.b32.xlu0 %v2415, 110
      %v2419 = vpop.permute.xlu0 %2418
      %2420 = vrot.lane.b32.xlu0 %v2410, 110
      %v2421 = vpop.permute.xlu0 %2420
      %v2422 = vsel %vm852, %v2417, %v2419
      %v2423 = vsel %vm852, %v2419, %v2421
      %v2425 = vsel %vm368, %v2412, 0
      %v2427 = vsel %vm372, %v2422, 0
      %v2429 = vsel %vm372, %v2423, 0
      %v2431 = vsel %vm372, %v2421, 0
      %2433 = vmatprep.subr.mxu0 %v2429
      %2434 = vmatpush1.msra.mxu0 %v2427
      %2435 = vmatprep.subr.mxu0 0.0
      %2436 = vmatpush1.msra.mxu0 0.0
      %2437 = vmatprep.subr.mxu0 0.0
      %2438 = vmatpush1.msra.mxu0 0.0
      %2439 = vmatprep.subr.mxu0 0.0
      %2440 = vmatpush1.msra.mxu0 0.0
      %2441 = vmatprep.subr.mxu0 0.0
      %2442 = vmatpush1.msra.mxu0 0.0
      %2443 = vmatprep.subr.mxu0 0.0
      %2444 = vmatpush1.msra.mxu0 0.0
      %2445 = vmatprep.subr.mxu0 0.0
      %2446 = vmatpush1.msra.mxu0 0.0
      %2447 = vmatprep.subr.mxu0 0.0
      %2448 = vmatpush1.msra.mxu0 0.0
      %2449 = vmatprep.subr.mxu0 0.0
      %2450 = vmatpush1.msra.mxu0 0.0
      %2451 = vmatprep.subr.mxu0 0.0
      %2452 = vmatpush1.msra.mxu0 0.0
      %2453 = vmatprep.subr.mxu0 0.0
      %2454 = vmatpush1.msra.mxu0 0.0
      %2455 = vmatprep.subr.mxu0 0.0
      %2456 = vmatpush1.msra.mxu0 0.0
      %2457 = vmatprep.subr.mxu0 0.0
      %2458 = vmatpush1.msra.mxu0 0.0
      %2459 = vmatprep.subr.mxu0 0.0
      %2460 = vmatpush1.msra.mxu0 0.0
      %2461 = vmatprep.subr.mxu0 0.0
      %2462 = vmatpush1.msra.mxu0 0.0
      %2463 = vmatprep.subr.mxu0 0.0
      %2464 = vmatpush1.msra.mxu0 0.0
      %2465 = vmatprep.subr.mxu0 0.0
      %2466 = vmatpush1.msra.mxu0 0.0
      %2467 = vmatprep.subr.mxu0 0.0
      %2468 = vmatpush1.msra.mxu0 0.0
      %2469 = vmatprep.subr.mxu0 0.0
      %2470 = vmatpush1.msra.mxu0 0.0
      %2471 = vmatprep.subr.mxu0 0.0
      %2472 = vmatpush1.msra.mxu0 0.0
      %2473 = vmatprep.subr.mxu0 0.0
      %2474 = vmatpush1.msra.mxu0 0.0
      %2475 = vmatprep.subr.mxu0 0.0
      %2476 = vmatpush1.msra.mxu0 0.0
      %2477 = vmatprep.subr.mxu0 0.0
      %2478 = vmatpush1.msra.mxu0 0.0
      %2479 = vmatprep.subr.mxu0 0.0
      %2480 = vmatpush1.msra.mxu0 0.0
      %2481 = vmatprep.subr.mxu0 0.0
      %2482 = vmatpush1.msra.mxu0 0.0
      %2483 = vmatprep.subr.mxu0 0.0
      %2484 = vmatpush1.msra.mxu0 0.0
      %2485 = vmatprep.subr.mxu0 0.0
      %2486 = vmatpush1.msra.mxu0 0.0
      %2487 = vmatprep.subr.mxu0 0.0
      %2488 = vmatpush1.msra.mxu0 0.0
      %2489 = vmatprep.subr.mxu0 0.0
      %2490 = vmatpush1.msra.mxu0 0.0
      %2491 = vmatprep.subr.mxu0 0.0
      %2492 = vmatpush1.msra.mxu0 0.0
      %2493 = vmatprep.subr.mxu0 0.0
      %2494 = vmatpush1.msra.mxu0 0.0
      %2495 = vmatprep.subr.mxu0 0.0
      %2496 = vmatpush1.msra.mxu0 0.0
      %2497 = vmatprep.mubr.f32.mxu0 0.0
      %2498 = vmatmul.mubr.f32.gmra.mrb[0].mxu0 %v2425
      %v2499 = vpop.f32.mrb[0].mxu0
      %v2500 = vadd.f32 0.0, %v2499
      %v2501 = vpop.f32.mrb[0].mxu0
      %v2502 = vadd.f32 0.0, %v2501
      %2503 = vdwg.mxu0
      %2504 = vmatprep.subr.mxu0 0.0
      %2505 = vmatpush1.msra.mxu0 %v2431
      %2506 = vmatprep.subr.mxu0 0.0
      %2507 = vmatpush1.msra.mxu0 0.0
      %2508 = vmatprep.subr.mxu0 0.0
      %2509 = vmatpush1.msra.mxu0 0.0
      %2510 = vmatprep.subr.mxu0 0.0
      %2511 = vmatpush1.msra.mxu0 0.0
      %2512 = vmatprep.subr.mxu0 0.0
      %2513 = vmatpush1.msra.mxu0 0.0
      %2514 = vmatprep.subr.mxu0 0.0
      %2515 = vmatpush1.msra.mxu0 0.0
      %2516 = vmatprep.subr.mxu0 0.0
      %2517 = vmatpush1.msra.mxu0 0.0
      %2518 = vmatprep.subr.mxu0 0.0
      %2519 = vmatpush1.msra.mxu0 0.0
      %2520 = vmatprep.subr.mxu0 0.0
      %2521 = vmatpush1.msra.mxu0 0.0
      %2522 = vmatprep.subr.mxu0 0.0
      %2523 = vmatpush1.msra.mxu0 0.0
      %2524 = vmatprep.subr.mxu0 0.0
      %2525 = vmatpush1.msra.mxu0 0.0
      %2526 = vmatprep.subr.mxu0 0.0
      %2527 = vmatpush1.msra.mxu0 0.0
      %2528 = vmatprep.subr.mxu0 0.0
      %2529 = vmatpush1.msra.mxu0 0.0
      %2530 = vmatprep.subr.mxu0 0.0
      %2531 = vmatpush1.msra.mxu0 0.0
      %2532 = vmatprep.subr.mxu0 0.0
      %2533 = vmatpush1.msra.mxu0 0.0
      %2534 = vmatprep.subr.mxu0 0.0
      %2535 = vmatpush1.msra.mxu0 0.0
      %2536 = vmatprep.subr.mxu0 0.0
      %2537 = vmatpush1.msra.mxu0 0.0
      %2538 = vmatprep.subr.mxu0 0.0
      %2539 = vmatpush1.msra.mxu0 0.0
      %2540 = vmatprep.subr.mxu0 0.0
      %2541 = vmatpush1.msra.mxu0 0.0
      %2542 = vmatprep.subr.mxu0 0.0
      %2543 = vmatpush1.msra.mxu0 0.0
      %2544 = vmatprep.subr.mxu0 0.0
      %2545 = vmatpush1.msra.mxu0 0.0
      %2546 = vmatprep.subr.mxu0 0.0
      %2547 = vmatpush1.msra.mxu0 0.0
      %2548 = vmatprep.subr.mxu0 0.0
      %2549 = vmatpush1.msra.mxu0 0.0
      %2550 = vmatprep.subr.mxu0 0.0
      %2551 = vmatpush1.msra.mxu0 0.0
      %2552 = vmatprep.subr.mxu0 0.0
      %2553 = vmatpush1.msra.mxu0 0.0
      %2554 = vmatprep.subr.mxu0 0.0
      %2555 = vmatpush1.msra.mxu0 0.0
      %2556 = vmatprep.subr.mxu0 0.0
      %2557 = vmatpush1.msra.mxu0 0.0
      %2558 = vmatprep.subr.mxu0 0.0
      %2559 = vmatpush1.msra.mxu0 0.0
      %2560 = vmatprep.subr.mxu0 0.0
      %2561 = vmatpush1.msra.mxu0 0.0
      %2562 = vmatprep.subr.mxu0 0.0
      %2563 = vmatpush1.msra.mxu0 0.0
      %2564 = vmatprep.subr.mxu0 0.0
      %2565 = vmatpush1.msra.mxu0 0.0
      %2566 = vmatprep.subr.mxu0 0.0
      %2567 = vmatpush1.msra.mxu0 0.0
      %2568 = vmatprep.mubr.f32.mxu0 0.0
      %2569 = vmatmul.mubr.f32.gmra.mrb[0].mxu0 %v2425
      %v2570 = vpop.f32.mrb[0].mxu0
      %v2571 = vadd.f32 0.0, %v2570
      %v2572 = vpop.f32.mrb[0].mxu0
      %2573 = vdwg.mxu0
      %v2574 = vadd.f32 %v2406, %v2500
      %v2575 = vadd.f32 %v2407, %v2502
      %v2576 = vadd.f32 %v2408, %v2571
      %v2577 = vld [vmem:[#allocation3] sm:$0xff]
      %v2578 = vld [vmem:[#allocation3 + $0x8] sm:$0xf]
      %s2579 = scalar_lea.vmem %s3, 16
      %v2580 = vld [vmem:[%s2579] sm:$0xf]
      %v2583 = vcombine.high %v2577, %v2577
      %2584 = vrot.lane.b32.xlu0 %v2577, 109
      %v2585 = vpop.permute.xlu0 %2584
      %2586 = vrot.lane.b32.xlu0 %v2583, 109
      %v2587 = vpop.permute.xlu0 %2586
      %2588 = vrot.lane.b32.xlu0 %v2578, 109
      %v2589 = vpop.permute.xlu0 %2588
      %v2590 = vsel %vm1021, %v2585, %v2587
      %v2591 = vsel %vm1021, %v2587, %v2589
      %v2593 = vsel %vm368, %v2580, 0
      %v2595 = vsel %vm372, %v2590, 0
      %v2597 = vsel %vm372, %v2591, 0
      %v2599 = vsel %vm372, %v2589, 0
      %2601 = vmatprep.subr.mxu0 %v2597
      %2602 = vmatpush1.msra.mxu0 %v2595
      %2603 = vmatprep.subr.mxu0 0.0
      %2604 = vmatpush1.msra.mxu0 0.0
      %2605 = vmatprep.subr.mxu0 0.0
      %2606 = vmatpush1.msra.mxu0 0.0
      %2607 = vmatprep.subr.mxu0 0.0
      %2608 = vmatpush1.msra.mxu0 0.0
      %2609 = vmatprep.subr.mxu0 0.0
      %2610 = vmatpush1.msra.mxu0 0.0
      %2611 = vmatprep.subr.mxu0 0.0
      %2612 = vmatpush1.msra.mxu0 0.0
      %2613 = vmatprep.subr.mxu0 0.0
      %2614 = vmatpush1.msra.mxu0 0.0
      %2615 = vmatprep.subr.mxu0 0.0
      %2616 = vmatpush1.msra.mxu0 0.0
      %2617 = vmatprep.subr.mxu0 0.0
      %2618 = vmatpush1.msra.mxu0 0.0
      %2619 = vmatprep.subr.mxu0 0.0
      %2620 = vmatpush1.msra.mxu0 0.0
      %2621 = vmatprep.subr.mxu0 0.0
      %2622 = vmatpush1.msra.mxu0 0.0
      %2623 = vmatprep.subr.mxu0 0.0
      %2624 = vmatpush1.msra.mxu0 0.0
      %2625 = vmatprep.subr.mxu0 0.0
      %2626 = vmatpush1.msra.mxu0 0.0
      %2627 = vmatprep.subr.mxu0 0.0
      %2628 = vmatpush1.msra.mxu0 0.0
      %2629 = vmatprep.subr.mxu0 0.0
      %2630 = vmatpush1.msra.mxu0 0.0
      %2631 = vmatprep.subr.mxu0 0.0
      %2632 = vmatpush1.msra.mxu0 0.0
      %2633 = vmatprep.subr.mxu0 0.0
      %2634 = vmatpush1.msra.mxu0 0.0
      %2635 = vmatprep.subr.mxu0 0.0
      %2636 = vmatpush1.msra.mxu0 0.0
      %2637 = vmatprep.subr.mxu0 0.0
      %2638 = vmatpush1.msra.mxu0 0.0
      %2639 = vmatprep.subr.mxu0 0.0
      %2640 = vmatpush1.msra.mxu0 0.0
      %2641 = vmatprep.subr.mxu0 0.0
      %2642 = vmatpush1.msra.mxu0 0.0
      %2643 = vmatprep.subr.mxu0 0.0
      %2644 = vmatpush1.msra.mxu0 0.0
      %2645 = vmatprep.subr.mxu0 0.0
      %2646 = vmatpush1.msra.mxu0 0.0
      %2647 = vmatprep.subr.mxu0 0.0
      %2648 = vmatpush1.msra.mxu0 0.0
      %2649 = vmatprep.subr.mxu0 0.0
      %2650 = vmatpush1.msra.mxu0 0.0
      %2651 = vmatprep.subr.mxu0 0.0
      %2652 = vmatpush1.msra.mxu0 0.0
      %2653 = vmatprep.subr.mxu0 0.0
      %2654 = vmatpush1.msra.mxu0 0.0
      %2655 = vmatprep.subr.mxu0 0.0
      %2656 = vmatpush1.msra.mxu0 0.0
      %2657 = vmatprep.subr.mxu0 0.0
      %2658 = vmatpush1.msra.mxu0 0.0
      %2659 = vmatprep.subr.mxu0 0.0
      %2660 = vmatpush1.msra.mxu0 0.0
      %2661 = vmatprep.subr.mxu0 0.0
      %2662 = vmatpush1.msra.mxu0 0.0
      %2663 = vmatprep.subr.mxu0 0.0
      %2664 = vmatpush1.msra.mxu0 0.0
      %2665 = vmatprep.mubr.f32.mxu0 0.0
      %2666 = vmatmul.mubr.f32.gmra.mrb[0].mxu0 %v2593
      %v2667 = vpop.f32.mrb[0].mxu0
      %v2668 = vadd.f32 0.0, %v2667
      %v2669 = vpop.f32.mrb[0].mxu0
      %v2670 = vadd.f32 0.0, %v2669
      %2671 = vdwg.mxu0
      %2672 = vmatprep.subr.mxu0 0.0
      %2673 = vmatpush1.msra.mxu0 %v2599
      %2674 = vmatprep.subr.mxu0 0.0
      %2675 = vmatpush1.msra.mxu0 0.0
      %2676 = vmatprep.subr.mxu0 0.0
      %2677 = vmatpush1.msra.mxu0 0.0
      %2678 = vmatprep.subr.mxu0 0.0
      %2679 = vmatpush1.msra.mxu0 0.0
      %2680 = vmatprep.subr.mxu0 0.0
      %2681 = vmatpush1.msra.mxu0 0.0
      %2682 = vmatprep.subr.mxu0 0.0
      %2683 = vmatpush1.msra.mxu0 0.0
      %2684 = vmatprep.subr.mxu0 0.0
      %2685 = vmatpush1.msra.mxu0 0.0
      %2686 = vmatprep.subr.mxu0 0.0
      %2687 = vmatpush1.msra.mxu0 0.0
      %2688 = vmatprep.subr.mxu0 0.0
      %2689 = vmatpush1.msra.mxu0 0.0
      %2690 = vmatprep.subr.mxu0 0.0
      %2691 = vmatpush1.msra.mxu0 0.0
      %2692 = vmatprep.subr.mxu0 0.0
      %2693 = vmatpush1.msra.mxu0 0.0
      %2694 = vmatprep.subr.mxu0 0.0
      %2695 = vmatpush1.msra.mxu0 0.0
      %2696 = vmatprep.subr.mxu0 0.0
      %2697 = vmatpush1.msra.mxu0 0.0
      %2698 = vmatprep.subr.mxu0 0.0
      %2699 = vmatpush1.msra.mxu0 0.0
      %2700 = vmatprep.subr.mxu0 0.0
      %2701 = vmatpush1.msra.mxu0 0.0
      %2702 = vmatprep.subr.mxu0 0.0
      %2703 = vmatpush1.msra.mxu0 0.0
      %2704 = vmatprep.subr.mxu0 0.0
      %2705 = vmatpush1.msra.mxu0 0.0
      %2706 = vmatprep.subr.mxu0 0.0
      %2707 = vmatpush1.msra.mxu0 0.0
      %2708 = vmatprep.subr.mxu0 0.0
      %2709 = vmatpush1.msra.mxu0 0.0
      %2710 = vmatprep.subr.mxu0 0.0
      %2711 = vmatpush1.msra.mxu0 0.0
      %2712 = vmatprep.subr.mxu0 0.0
      %2713 = vmatpush1.msra.mxu0 0.0
      %2714 = vmatprep.subr.mxu0 0.0
      %2715 = vmatpush1.msra.mxu0 0.0
      %2716 = vmatprep.subr.mxu0 0.0
      %2717 = vmatpush1.msra.mxu0 0.0
      %2718 = vmatprep.subr.mxu0 0.0
      %2719 = vmatpush1.msra.mxu0 0.0
      %2720 = vmatprep.subr.mxu0 0.0
      %2721 = vmatpush1.msra.mxu0 0.0
      %2722 = vmatprep.subr.mxu0 0.0
      %2723 = vmatpush1.msra.mxu0 0.0
      %2724 = vmatprep.subr.mxu0 0.0
      %2725 = vmatpush1.msra.mxu0 0.0
      %2726 = vmatprep.subr.mxu0 0.0
      %2727 = vmatpush1.msra.mxu0 0.0
      %2728 = vmatprep.subr.mxu0 0.0
      %2729 = vmatpush1.msra.mxu0 0.0
      %2730 = vmatprep.subr.mxu0 0.0
      %2731 = vmatpush1.msra.mxu0 0.0
      %2732 = vmatprep.subr.mxu0 0.0
      %2733 = vmatpush1.msra.mxu0 0.0
      %2734 = vmatprep.subr.mxu0 0.0
      %2735 = vmatpush1.msra.mxu0 0.0
      %2736 = vmatprep.mubr.f32.mxu0 0.0
      %2737 = vmatmul.mubr.f32.gmra.mrb[0].mxu0 %v2593
      %v2738 = vpop.f32.mrb[0].mxu0
      %v2739 = vadd.f32 0.0, %v2738
      %v2740 = vpop.f32.mrb[0].mxu0
      %2741 = vdwg.mxu0
      %v2742 = vadd.f32 %v2574, %v2668
      %v2743 = vadd.f32 %v2575, %v2670
      %v2744 = vadd.f32 %v2576, %v2739
      %v2745 = vld [vmem:[#allocation3] sm:$0xff]
      %v2746 = vld [vmem:[#allocation3 + $0x8] sm:$0xf]
      %s2747 = scalar_lea.vmem %s3, 20
      %v2748 = vld [vmem:[%s2747] sm:$0xf]
      %v2751 = vcombine.high %v2745, %v2745
      %2752 = vrot.lane.b32.xlu0 %v2745, 108
      %v2753 = vpop.permute.xlu0 %2752
      %2754 = vrot.lane.b32.xlu0 %v2751, 108
      %v2755 = vpop.permute.xlu0 %2754
      %2756 = vrot.lane.b32.xlu0 %v2746, 108
      %v2757 = vpop.permute.xlu0 %2756
      %v2758 = vsel %vm1190, %v2753, %v2755
      %v2759 = vsel %vm1190, %v2755, %v2757
      %v2761 = vsel %vm368, %v2748, 0
      %v2763 = vsel %vm372, %v2758, 0
      %v2765 = vsel %vm372, %v2759, 0
      %v2767 = vsel %vm372, %v2757, 0
      %2769 = vmatprep.subr.mxu0 %v2765
      %2770 = vmatpush1.msra.mxu0 %v2763
      %2771 = vmatprep.subr.mxu0 0.0
      %2772 = vmatpush1.msra.mxu0 0.0
      %2773 = vmatprep.subr.mxu0 0.0
      %2774 = vmatpush1.msra.mxu0 0.0
      %2775 = vmatprep.subr.mxu0 0.0
      %2776 = vmatpush1.msra.mxu0 0.0
      %2777 = vmatprep.subr.mxu0 0.0
      %2778 = vmatpush1.msra.mxu0 0.0
      %2779 = vmatprep.subr.mxu0 0.0
      %2780 = vmatpush1.msra.mxu0 0.0
      %2781 = vmatprep.subr.mxu0 0.0
      %2782 = vmatpush1.msra.mxu0 0.0
      %2783 = vmatprep.subr.mxu0 0.0
      %2784 = vmatpush1.msra.mxu0 0.0
      %2785 = vmatprep.subr.mxu0 0.0
      %2786 = vmatpush1.msra.mxu0 0.0
      %2787 = vmatprep.subr.mxu0 0.0
      %2788 = vmatpush1.msra.mxu0 0.0
      %2789 = vmatprep.subr.mxu0 0.0
      %2790 = vmatpush1.msra.mxu0 0.0
      %2791 = vmatprep.subr.mxu0 0.0
      %2792 = vmatpush1.msra.mxu0 0.0
      %2793 = vmatprep.subr.mxu0 0.0
      %2794 = vmatpush1.msra.mxu0 0.0
      %2795 = vmatprep.subr.mxu0 0.0
      %2796 = vmatpush1.msra.mxu0 0.0
      %2797 = vmatprep.subr.mxu0 0.0
      %2798 = vmatpush1.msra.mxu0 0.0
      %2799 = vmatprep.subr.mxu0 0.0
      %2800 = vmatpush1.msra.mxu0 0.0
      %2801 = vmatprep.subr.mxu0 0.0
      %2802 = vmatpush1.msra.mxu0 0.0
      %2803 = vmatprep.subr.mxu0 0.0
      %2804 = vmatpush1.msra.mxu0 0.0
      %2805 = vmatprep.subr.mxu0 0.0
      %2806 = vmatpush1.msra.mxu0 0.0
      %2807 = vmatprep.subr.mxu0 0.0
      %2808 = vmatpush1.msra.mxu0 0.0
      %2809 = vmatprep.subr.mxu0 0.0
      %2810 = vmatpush1.msra.mxu0 0.0
      %2811 = vmatprep.subr.mxu0 0.0
      %2812 = vmatpush1.msra.mxu0 0.0
      %2813 = vmatprep.subr.mxu0 0.0
      %2814 = vmatpush1.msra.mxu0 0.0
      %2815 = vmatprep.subr.mxu0 0.0
      %2816 = vmatpush1.msra.mxu0 0.0
      %2817 = vmatprep.subr.mxu0 0.0
      %2818 = vmatpush1.msra.mxu0 0.0
      %2819 = vmatprep.subr.mxu0 0.0
      %2820 = vmatpush1.msra.mxu0 0.0
      %2821 = vmatprep.subr.mxu0 0.0
      %2822 = vmatpush1.msra.mxu0 0.0
      %2823 = vmatprep.subr.mxu0 0.0
      %2824 = vmatpush1.msra.mxu0 0.0
      %2825 = vmatprep.subr.mxu0 0.0
      %2826 = vmatpush1.msra.mxu0 0.0
      %2827 = vmatprep.subr.mxu0 0.0
      %2828 = vmatpush1.msra.mxu0 0.0
      %2829 = vmatprep.subr.mxu0 0.0
      %2830 = vmatpush1.msra.mxu0 0.0
      %2831 = vmatprep.subr.mxu0 0.0
      %2832 = vmatpush1.msra.mxu0 0.0
      %2833 = vmatprep.mubr.f32.mxu0 0.0
      %2834 = vmatmul.mubr.f32.gmra.mrb[0].mxu0 %v2761
      %v2835 = vpop.f32.mrb[0].mxu0
      %v2836 = vadd.f32 0.0, %v2835
      %v2837 = vpop.f32.mrb[0].mxu0
      %v2838 = vadd.f32 0.0, %v2837
      %2839 = vdwg.mxu0
      %2840 = vmatprep.subr.mxu0 0.0
      %2841 = vmatpush1.msra.mxu0 %v2767
      %2842 = vmatprep.subr.mxu0 0.0
      %2843 = vmatpush1.msra.mxu0 0.0
      %2844 = vmatprep.subr.mxu0 0.0
      %2845 = vmatpush1.msra.mxu0 0.0
      %2846 = vmatprep.subr.mxu0 0.0
      %2847 = vmatpush1.msra.mxu0 0.0
      %2848 = vmatprep.subr.mxu0 0.0
      %2849 = vmatpush1.msra.mxu0 0.0
      %2850 = vmatprep.subr.mxu0 0.0
      %2851 = vmatpush1.msra.mxu0 0.0
      %2852 = vmatprep.subr.mxu0 0.0
      %2853 = vmatpush1.msra.mxu0 0.0
      %2854 = vmatprep.subr.mxu0 0.0
      %2855 = vmatpush1.msra.mxu0 0.0
      %2856 = vmatprep.subr.mxu0 0.0
      %2857 = vmatpush1.msra.mxu0 0.0
      %2858 = vmatprep.subr.mxu0 0.0
      %2859 = vmatpush1.msra.mxu0 0.0
      %2860 = vmatprep.subr.mxu0 0.0
      %2861 = vmatpush1.msra.mxu0 0.0
      %2862 = vmatprep.subr.mxu0 0.0
      %2863 = vmatpush1.msra.mxu0 0.0
      %2864 = vmatprep.subr.mxu0 0.0
      %2865 = vmatpush1.msra.mxu0 0.0
      %2866 = vmatprep.subr.mxu0 0.0
      %2867 = vmatpush1.msra.mxu0 0.0
      %2868 = vmatprep.subr.mxu0 0.0
      %2869 = vmatpush1.msra.mxu0 0.0
      %2870 = vmatprep.subr.mxu0 0.0
      %2871 = vmatpush1.msra.mxu0 0.0
      %2872 = vmatprep.subr.mxu0 0.0
      %2873 = vmatpush1.msra.mxu0 0.0
      %2874 = vmatprep.subr.mxu0 0.0
      %2875 = vmatpush1.msra.mxu0 0.0
      %2876 = vmatprep.subr.mxu0 0.0
      %2877 = vmatpush1.msra.mxu0 0.0
      %2878 = vmatprep.subr.mxu0 0.0
      %2879 = vmatpush1.msra.mxu0 0.0
      %2880 = vmatprep.subr.mxu0 0.0
      %2881 = vmatpush1.msra.mxu0 0.0
      %2882 = vmatprep.subr.mxu0 0.0
      %2883 = vmatpush1.msra.mxu0 0.0
      %2884 = vmatprep.subr.mxu0 0.0
      %2885 = vmatpush1.msra.mxu0 0.0
      %2886 = vmatprep.subr.mxu0 0.0
      %2887 = vmatpush1.msra.mxu0 0.0
      %2888 = vmatprep.subr.mxu0 0.0
      %2889 = vmatpush1.msra.mxu0 0.0
      %2890 = vmatprep.subr.mxu0 0.0
      %2891 = vmatpush1.msra.mxu0 0.0
      %2892 = vmatprep.subr.mxu0 0.0
      %2893 = vmatpush1.msra.mxu0 0.0
      %2894 = vmatprep.subr.mxu0 0.0
      %2895 = vmatpush1.msra.mxu0 0.0
      %2896 = vmatprep.subr.mxu0 0.0
      %2897 = vmatpush1.msra.mxu0 0.0
      %2898 = vmatprep.subr.mxu0 0.0
      %2899 = vmatpush1.msra.mxu0 0.0
      %2900 = vmatprep.subr.mxu0 0.0
      %2901 = vmatpush1.msra.mxu0 0.0
      %2902 = vmatprep.subr.mxu0 0.0
      %2903 = vmatpush1.msra.mxu0 0.0
      %2904 = vmatprep.mubr.f32.mxu0 0.0
      %2905 = vmatmul.mubr.f32.gmra.mrb[0].mxu0 %v2761
      %v2906 = vpop.f32.mrb[0].mxu0
      %v2907 = vadd.f32 0.0, %v2906
      %v2908 = vpop.f32.mrb[0].mxu0
      %2909 = vdwg.mxu0
      %v2910 = vadd.f32 %v2742, %v2836
      %v2911 = vadd.f32 %v2743, %v2838
      %v2912 = vadd.f32 %v2744, %v2907
      %v2913 = vld [vmem:[#allocation3] sm:$0xff]
      %v2914 = vld [vmem:[#allocation3 + $0x8] sm:$0xf]
      %s2915 = scalar_lea.vmem %s3, 24
      %v2916 = vld [vmem:[%s2915] sm:$0xf]
      %v2919 = vcombine.high %v2913, %v2913
      %2920 = vrot.lane.b32.xlu0 %v2913, 92
      %v2921 = vpop.permute.xlu0 %2920
      %2922 = vrot.lane.b32.xlu0 %v2919, 92
      %v2923 = vpop.permute.xlu0 %2922
      %2924 = vrot.lane.b32.xlu0 %v2914, 92
      %v2925 = vpop.permute.xlu0 %2924
      %v2926 = vsel %vm1359, %v2921, %v2923
      %v2927 = vsel %vm1359, %v2923, %v2925
      %v2929 = vsel %vm368, %v2916, 0
      %v2931 = vsel %vm372, %v2926, 0
      %v2933 = vsel %vm372, %v2927, 0
      %v2935 = vsel %vm372, %v2925, 0
      %2937 = vmatprep.subr.mxu0 %v2933
      %2938 = vmatpush1.msra.mxu0 %v2931
      %2939 = vmatprep.subr.mxu0 0.0
      %2940 = vmatpush1.msra.mxu0 0.0
      %2941 = vmatprep.subr.mxu0 0.0
      %2942 = vmatpush1.msra.mxu0 0.0
      %2943 = vmatprep.subr.mxu0 0.0
      %2944 = vmatpush1.msra.mxu0 0.0
      %2945 = vmatprep.subr.mxu0 0.0
      %2946 = vmatpush1.msra.mxu0 0.0
      %2947 = vmatprep.subr.mxu0 0.0
      %2948 = vmatpush1.msra.mxu0 0.0
      %2949 = vmatprep.subr.mxu0 0.0
      %2950 = vmatpush1.msra.mxu0 0.0
      %2951 = vmatprep.subr.mxu0 0.0
      %2952 = vmatpush1.msra.mxu0 0.0
      %2953 = vmatprep.subr.mxu0 0.0
      %2954 = vmatpush1.msra.mxu0 0.0
      %2955 = vmatprep.subr.mxu0 0.0
      %2956 = vmatpush1.msra.mxu0 0.0
      %2957 = vmatprep.subr.mxu0 0.0
      %2958 = vmatpush1.msra.mxu0 0.0
      %2959 = vmatprep.subr.mxu0 0.0
      %2960 = vmatpush1.msra.mxu0 0.0
      %2961 = vmatprep.subr.mxu0 0.0
      %2962 = vmatpush1.msra.mxu0 0.0
      %2963 = vmatprep.subr.mxu0 0.0
      %2964 = vmatpush1.msra.mxu0 0.0
      %2965 = vmatprep.subr.mxu0 0.0
      %2966 = vmatpush1.msra.mxu0 0.0
      %2967 = vmatprep.subr.mxu0 0.0
      %2968 = vmatpush1.msra.mxu0 0.0
      %2969 = vmatprep.subr.mxu0 0.0
      %2970 = vmatpush1.msra.mxu0 0.0
      %2971 = vmatprep.subr.mxu0 0.0
      %2972 = vmatpush1.msra.mxu0 0.0
      %2973 = vmatprep.subr.mxu0 0.0
      %2974 = vmatpush1.msra.mxu0 0.0
      %2975 = vmatprep.subr.mxu0 0.0
      %2976 = vmatpush1.msra.mxu0 0.0
      %2977 = vmatprep.subr.mxu0 0.0
      %2978 = vmatpush1.msra.mxu0 0.0
      %2979 = vmatprep.subr.mxu0 0.0
      %2980 = vmatpush1.msra.mxu0 0.0
      %2981 = vmatprep.subr.mxu0 0.0
      %2982 = vmatpush1.msra.mxu0 0.0
      %2983 = vmatprep.subr.mxu0 0.0
      %2984 = vmatpush1.msra.mxu0 0.0
      %2985 = vmatprep.subr.mxu0 0.0
      %2986 = vmatpush1.msra.mxu0 0.0
      %2987 = vmatprep.subr.mxu0 0.0
      %2988 = vmatpush1.msra.mxu0 0.0
      %2989 = vmatprep.subr.mxu0 0.0
      %2990 = vmatpush1.msra.mxu0 0.0
      %2991 = vmatprep.subr.mxu0 0.0
      %2992 = vmatpush1.msra.mxu0 0.0
      %2993 = vmatprep.subr.mxu0 0.0
      %2994 = vmatpush1.msra.mxu0 0.0
      %2995 = vmatprep.subr.mxu0 0.0
      %2996 = vmatpush1.msra.mxu0 0.0
      %2997 = vmatprep.subr.mxu0 0.0
      %2998 = vmatpush1.msra.mxu0 0.0
      %2999 = vmatprep.subr.mxu0 0.0
      %3000 = vmatpush1.msra.mxu0 0.0
      %3001 = vmatprep.mubr.f32.mxu0 0.0
      %3002 = vmatmul.mubr.f32.gmra.mrb[0].mxu0 %v2929
      %v3003 = vpop.f32.mrb[0].mxu0
      %v3004 = vadd.f32 0.0, %v3003
      %v3005 = vpop.f32.mrb[0].mxu0
      %v3006 = vadd.f32 0.0, %v3005
      %3007 = vdwg.mxu0
      %3008 = vmatprep.subr.mxu0 0.0
      %3009 = vmatpush1.msra.mxu0 %v2935
      %3010 = vmatprep.subr.mxu0 0.0
      %3011 = vmatpush1.msra.mxu0 0.0
      %3012 = vmatprep.subr.mxu0 0.0
      %3013 = vmatpush1.msra.mxu0 0.0
      %3014 = vmatprep.subr.mxu0 0.0
      %3015 = vmatpush1.msra.mxu0 0.0
      %3016 = vmatprep.subr.mxu0 0.0
      %3017 = vmatpush1.msra.mxu0 0.0
      %3018 = vmatprep.subr.mxu0 0.0
      %3019 = vmatpush1.msra.mxu0 0.0
      %3020 = vmatprep.subr.mxu0 0.0
      %3021 = vmatpush1.msra.mxu0 0.0
      %3022 = vmatprep.subr.mxu0 0.0
      %3023 = vmatpush1.msra.mxu0 0.0
      %3024 = vmatprep.subr.mxu0 0.0
      %3025 = vmatpush1.msra.mxu0 0.0
      %3026 = vmatprep.subr.mxu0 0.0
      %3027 = vmatpush1.msra.mxu0 0.0
      %3028 = vmatprep.subr.mxu0 0.0
      %3029 = vmatpush1.msra.mxu0 0.0
      %3030 = vmatprep.subr.mxu0 0.0
      %3031 = vmatpush1.msra.mxu0 0.0
      %3032 = vmatprep.subr.mxu0 0.0
      %3033 = vmatpush1.msra.mxu0 0.0
      %3034 = vmatprep.subr.mxu0 0.0
      %3035 = vmatpush1.msra.mxu0 0.0
      %3036 = vmatprep.subr.mxu0 0.0
      %3037 = vmatpush1.msra.mxu0 0.0
      %3038 = vmatprep.subr.mxu0 0.0
      %3039 = vmatpush1.msra.mxu0 0.0
      %3040 = vmatprep.subr.mxu0 0.0
      %3041 = vmatpush1.msra.mxu0 0.0
      %3042 = vmatprep.subr.mxu0 0.0
      %3043 = vmatpush1.msra.mxu0 0.0
      %3044 = vmatprep.subr.mxu0 0.0
      %3045 = vmatpush1.msra.mxu0 0.0
      %3046 = vmatprep.subr.mxu0 0.0
      %3047 = vmatpush1.msra.mxu0 0.0
      %3048 = vmatprep.subr.mxu0 0.0
      %3049 = vmatpush1.msra.mxu0 0.0
      %3050 = vmatprep.subr.mxu0 0.0
      %3051 = vmatpush1.msra.mxu0 0.0
      %3052 = vmatprep.subr.mxu0 0.0
      %3053 = vmatpush1.msra.mxu0 0.0
      %3054 = vmatprep.subr.mxu0 0.0
      %3055 = vmatpush1.msra.mxu0 0.0
      %3056 = vmatprep.subr.mxu0 0.0
      %3057 = vmatpush1.msra.mxu0 0.0
      %3058 = vmatprep.subr.mxu0 0.0
      %3059 = vmatpush1.msra.mxu0 0.0
      %3060 = vmatprep.subr.mxu0 0.0
      %3061 = vmatpush1.msra.mxu0 0.0
      %3062 = vmatprep.subr.mxu0 0.0
      %3063 = vmatpush1.msra.mxu0 0.0
      %3064 = vmatprep.subr.mxu0 0.0
      %3065 = vmatpush1.msra.mxu0 0.0
      %3066 = vmatprep.subr.mxu0 0.0
      %3067 = vmatpush1.msra.mxu0 0.0
      %3068 = vmatprep.subr.mxu0 0.0
      %3069 = vmatpush1.msra.mxu0 0.0
      %3070 = vmatprep.subr.mxu0 0.0
      %3071 = vmatpush1.msra.mxu0 0.0
      %3072 = vmatprep.mubr.f32.mxu0 0.0
      %3073 = vmatmul.mubr.f32.gmra.mrb[0].mxu0 %v2929
      %v3074 = vpop.f32.mrb[0].mxu0
      %v3075 = vadd.f32 0.0, %v3074
      %v3076 = vpop.f32.mrb[0].mxu0
      %3077 = vdwg.mxu0
      %v3078 = vadd.f32 %v2910, %v3004
      %v3079 = vadd.f32 %v2911, %v3006
      %v3080 = vadd.f32 %v2912, %v3075
      %v3081 = vld [vmem:[#allocation3] sm:$0xff]
      %v3082 = vld [vmem:[#allocation3 + $0x8] sm:$0xf]
      %s3083 = scalar_lea.vmem %s3, 28
      %v3084 = vld [vmem:[%s3083] sm:$0xf]
      %v3087 = vcombine.high %v3081, %v3081
      %3088 = vrot.lane.b32.xlu0 %v3081, 91
      %v3089 = vpop.permute.xlu0 %3088
      %3090 = vrot.lane.b32.xlu0 %v3087, 91
      %v3091 = vpop.permute.xlu0 %3090
      %3092 = vrot.lane.b32.xlu0 %v3082, 91
      %v3093 = vpop.permute.xlu0 %3092
      %v3094 = vsel %vm1528, %v3089, %v3091
      %v3095 = vsel %vm1528, %v3091, %v3093
      %v3097 = vsel %vm368, %v3084, 0
      %v3099 = vsel %vm372, %v3094, 0
      %v3101 = vsel %vm372, %v3095, 0
      %v3103 = vsel %vm372, %v3093, 0
      %3105 = vmatprep.subr.mxu0 %v3101
      %3106 = vmatpush1.msra.mxu0 %v3099
      %3107 = vmatprep.subr.mxu0 0.0
      %3108 = vmatpush1.msra.mxu0 0.0
      %3109 = vmatprep.subr.mxu0 0.0
      %3110 = vmatpush1.msra.mxu0 0.0
      %3111 = vmatprep.subr.mxu0 0.0
      %3112 = vmatpush1.msra.mxu0 0.0
      %3113 = vmatprep.subr.mxu0 0.0
      %3114 = vmatpush1.msra.mxu0 0.0
      %3115 = vmatprep.subr.mxu0 0.0
      %3116 = vmatpush1.msra.mxu0 0.0
      %3117 = vmatprep.subr.mxu0 0.0
      %3118 = vmatpush1.msra.mxu0 0.0
      %3119 = vmatprep.subr.mxu0 0.0
      %3120 = vmatpush1.msra.mxu0 0.0
      %3121 = vmatprep.subr.mxu0 0.0
      %3122 = vmatpush1.msra.mxu0 0.0
      %3123 = vmatprep.subr.mxu0 0.0
      %3124 = vmatpush1.msra.mxu0 0.0
      %3125 = vmatprep.subr.mxu0 0.0
      %3126 = vmatpush1.msra.mxu0 0.0
      %3127 = vmatprep.subr.mxu0 0.0
      %3128 = vmatpush1.msra.mxu0 0.0
      %3129 = vmatprep.subr.mxu0 0.0
      %3130 = vmatpush1.msra.mxu0 0.0
      %3131 = vmatprep.subr.mxu0 0.0
      %3132 = vmatpush1.msra.mxu0 0.0
      %3133 = vmatprep.subr.mxu0 0.0
      %3134 = vmatpush1.msra.mxu0 0.0
      %3135 = vmatprep.subr.mxu0 0.0
      %3136 = vmatpush1.msra.mxu0 0.0
      %3137 = vmatprep.subr.mxu0 0.0
      %3138 = vmatpush1.msra.mxu0 0.0
      %3139 = vmatprep.subr.mxu0 0.0
      %3140 = vmatpush1.msra.mxu0 0.0
      %3141 = vmatprep.subr.mxu0 0.0
      %3142 = vmatpush1.msra.mxu0 0.0
      %3143 = vmatprep.subr.mxu0 0.0
      %3144 = vmatpush1.msra.mxu0 0.0
      %3145 = vmatprep.subr.mxu0 0.0
      %3146 = vmatpush1.msra.mxu0 0.0
      %3147 = vmatprep.subr.mxu0 0.0
      %3148 = vmatpush1.msra.mxu0 0.0
      %3149 = vmatprep.subr.mxu0 0.0
      %3150 = vmatpush1.msra.mxu0 0.0
      %3151 = vmatprep.subr.mxu0 0.0
      %3152 = vmatpush1.msra.mxu0 0.0
      %3153 = vmatprep.subr.mxu0 0.0
      %3154 = vmatpush1.msra.mxu0 0.0
      %3155 = vmatprep.subr.mxu0 0.0
      %3156 = vmatpush1.msra.mxu0 0.0
      %3157 = vmatprep.subr.mxu0 0.0
      %3158 = vmatpush1.msra.mxu0 0.0
      %3159 = vmatprep.subr.mxu0 0.0
      %3160 = vmatpush1.msra.mxu0 0.0
      %3161 = vmatprep.subr.mxu0 0.0
      %3162 = vmatpush1.msra.mxu0 0.0
      %3163 = vmatprep.subr.mxu0 0.0
      %3164 = vmatpush1.msra.mxu0 0.0
      %3165 = vmatprep.subr.mxu0 0.0
      %3166 = vmatpush1.msra.mxu0 0.0
      %3167 = vmatprep.subr.mxu0 0.0
      %3168 = vmatpush1.msra.mxu0 0.0
      %3169 = vmatprep.mubr.f32.mxu0 0.0
      %3170 = vmatmul.mubr.f32.gmra.mrb[0].mxu0 %v3097
      %v3171 = vpop.f32.mrb[0].mxu0
      %v3172 = vadd.f32 0.0, %v3171
      %v3173 = vpop.f32.mrb[0].mxu0
      %v3174 = vadd.f32 0.0, %v3173
      %3175 = vdwg.mxu0
      %3176 = vmatprep.subr.mxu0 0.0
      %3177 = vmatpush1.msra.mxu0 %v3103
      %3178 = vmatprep.subr.mxu0 0.0
      %3179 = vmatpush1.msra.mxu0 0.0
      %3180 = vmatprep.subr.mxu0 0.0
      %3181 = vmatpush1.msra.mxu0 0.0
      %3182 = vmatprep.subr.mxu0 0.0
      %3183 = vmatpush1.msra.mxu0 0.0
      %3184 = vmatprep.subr.mxu0 0.0
      %3185 = vmatpush1.msra.mxu0 0.0
      %3186 = vmatprep.subr.mxu0 0.0
      %3187 = vmatpush1.msra.mxu0 0.0
      %3188 = vmatprep.subr.mxu0 0.0
      %3189 = vmatpush1.msra.mxu0 0.0
      %3190 = vmatprep.subr.mxu0 0.0
      %3191 = vmatpush1.msra.mxu0 0.0
      %3192 = vmatprep.subr.mxu0 0.0
      %3193 = vmatpush1.msra.mxu0 0.0
      %3194 = vmatprep.subr.mxu0 0.0
      %3195 = vmatpush1.msra.mxu0 0.0
      %3196 = vmatprep.subr.mxu0 0.0
      %3197 = vmatpush1.msra.mxu0 0.0
      %3198 = vmatprep.subr.mxu0 0.0
      %3199 = vmatpush1.msra.mxu0 0.0
      %3200 = vmatprep.subr.mxu0 0.0
      %3201 = vmatpush1.msra.mxu0 0.0
      %3202 = vmatprep.subr.mxu0 0.0
      %3203 = vmatpush1.msra.mxu0 0.0
      %3204 = vmatprep.subr.mxu0 0.0
      %3205 = vmatpush1.msra.mxu0 0.0
      %3206 = vmatprep.subr.mxu0 0.0
      %3207 = vmatpush1.msra.mxu0 0.0
      %3208 = vmatprep.subr.mxu0 0.0
      %3209 = vmatpush1.msra.mxu0 0.0
      %3210 = vmatprep.subr.mxu0 0.0
      %3211 = vmatpush1.msra.mxu0 0.0
      %3212 = vmatprep.subr.mxu0 0.0
      %3213 = vmatpush1.msra.mxu0 0.0
      %3214 = vmatprep.subr.mxu0 0.0
      %3215 = vmatpush1.msra.mxu0 0.0
      %3216 = vmatprep.subr.mxu0 0.0
      %3217 = vmatpush1.msra.mxu0 0.0
      %3218 = vmatprep.subr.mxu0 0.0
      %3219 = vmatpush1.msra.mxu0 0.0
      %3220 = vmatprep.subr.mxu0 0.0
      %3221 = vmatpush1.msra.mxu0 0.0
      %3222 = vmatprep.subr.mxu0 0.0
      %3223 = vmatpush1.msra.mxu0 0.0
      %3224 = vmatprep.subr.mxu0 0.0
      %3225 = vmatpush1.msra.mxu0 0.0
      %3226 = vmatprep.subr.mxu0 0.0
      %3227 = vmatpush1.msra.mxu0 0.0
      %3228 = vmatprep.subr.mxu0 0.0
      %3229 = vmatpush1.msra.mxu0 0.0
      %3230 = vmatprep.subr.mxu0 0.0
      %3231 = vmatpush1.msra.mxu0 0.0
      %3232 = vmatprep.subr.mxu0 0.0
      %3233 = vmatpush1.msra.mxu0 0.0
      %3234 = vmatprep.subr.mxu0 0.0
      %3235 = vmatpush1.msra.mxu0 0.0
      %3236 = vmatprep.subr.mxu0 0.0
      %3237 = vmatpush1.msra.mxu0 0.0
      %3238 = vmatprep.subr.mxu0 0.0
      %3239 = vmatpush1.msra.mxu0 0.0
      %3240 = vmatprep.mubr.f32.mxu0 0.0
      %3241 = vmatmul.mubr.f32.gmra.mrb[0].mxu0 %v3097
      %v3242 = vpop.f32.mrb[0].mxu0
      %v3243 = vadd.f32 0.0, %v3242
      %v3244 = vpop.f32.mrb[0].mxu0
      %3245 = vdwg.mxu0
      %v3246 = vadd.f32 %v3078, %v3172
      %v3247 = vadd.f32 %v3079, %v3174
      %v3248 = vadd.f32 %v3080, %v3243
      %v3249 = vld [vmem:[#allocation3] sm:$0xff]
      %v3250 = vld [vmem:[#allocation3 + $0x8] sm:$0xf]
      %s3251 = scalar_lea.vmem %s3, 32
      %v3252 = vld [vmem:[%s3251] sm:$0xf]
      %v3255 = vcombine.high %v3249, %v3249
      %3256 = vrot.lane.b32.xlu0 %v3249, 90
      %v3257 = vpop.permute.xlu0 %3256
      %3258 = vrot.lane.b32.xlu0 %v3255, 90
      %v3259 = vpop.permute.xlu0 %3258
      %3260 = vrot.lane.b32.xlu0 %v3250, 90
      %v3261 = vpop.permute.xlu0 %3260
      %v3262 = vsel %vm1697, %v3257, %v3259
      %v3263 = vsel %vm1697, %v3259, %v3261
      %v3265 = vsel %vm368, %v3252, 0
      %v3267 = vsel %vm372, %v3262, 0
      %v3269 = vsel %vm372, %v3263, 0
      %v3271 = vsel %vm372, %v3261, 0
      %3273 = vmatprep.subr.mxu0 %v3269
      %3274 = vmatpush1.msra.mxu0 %v3267
      %3275 = vmatprep.subr.mxu0 0.0
      %3276 = vmatpush1.msra.mxu0 0.0
      %3277 = vmatprep.subr.mxu0 0.0
      %3278 = vmatpush1.msra.mxu0 0.0
      %3279 = vmatprep.subr.mxu0 0.0
      %3280 = vmatpush1.msra.mxu0 0.0
      %3281 = vmatprep.subr.mxu0 0.0
      %3282 = vmatpush1.msra.mxu0 0.0
      %3283 = vmatprep.subr.mxu0 0.0
      %3284 = vmatpush1.msra.mxu0 0.0
      %3285 = vmatprep.subr.mxu0 0.0
      %3286 = vmatpush1.msra.mxu0 0.0
      %3287 = vmatprep.subr.mxu0 0.0
      %3288 = vmatpush1.msra.mxu0 0.0
      %3289 = vmatprep.subr.mxu0 0.0
      %3290 = vmatpush1.msra.mxu0 0.0
      %3291 = vmatprep.subr.mxu0 0.0
      %3292 = vmatpush1.msra.mxu0 0.0
      %3293 = vmatprep.subr.mxu0 0.0
      %3294 = vmatpush1.msra.mxu0 0.0
      %3295 = vmatprep.subr.mxu0 0.0
      %3296 = vmatpush1.msra.mxu0 0.0
      %3297 = vmatprep.subr.mxu0 0.0
      %3298 = vmatpush1.msra.mxu0 0.0
      %3299 = vmatprep.subr.mxu0 0.0
      %3300 = vmatpush1.msra.mxu0 0.0
      %3301 = vmatprep.subr.mxu0 0.0
      %3302 = vmatpush1.msra.mxu0 0.0
      %3303 = vmatprep.subr.mxu0 0.0
      %3304 = vmatpush1.msra.mxu0 0.0
      %3305 = vmatprep.subr.mxu0 0.0
      %3306 = vmatpush1.msra.mxu0 0.0
      %3307 = vmatprep.subr.mxu0 0.0
      %3308 = vmatpush1.msra.mxu0 0.0
      %3309 = vmatprep.subr.mxu0 0.0
      %3310 = vmatpush1.msra.mxu0 0.0
      %3311 = vmatprep.subr.mxu0 0.0
      %3312 = vmatpush1.msra.mxu0 0.0
      %3313 = vmatprep.subr.mxu0 0.0
      %3314 = vmatpush1.msra.mxu0 0.0
      %3315 = vmatprep.subr.mxu0 0.0
      %3316 = vmatpush1.msra.mxu0 0.0
      %3317 = vmatprep.subr.mxu0 0.0
      %3318 = vmatpush1.msra.mxu0 0.0
      %3319 = vmatprep.subr.mxu0 0.0
      %3320 = vmatpush1.msra.mxu0 0.0
      %3321 = vmatprep.subr.mxu0 0.0
      %3322 = vmatpush1.msra.mxu0 0.0
      %3323 = vmatprep.subr.mxu0 0.0
      %3324 = vmatpush1.msra.mxu0 0.0
      %3325 = vmatprep.subr.mxu0 0.0
      %3326 = vmatpush1.msra.mxu0 0.0
      %3327 = vmatprep.subr.mxu0 0.0
      %3328 = vmatpush1.msra.mxu0 0.0
      %3329 = vmatprep.subr.mxu0 0.0
      %3330 = vmatpush1.msra.mxu0 0.0
      %3331 = vmatprep.subr.mxu0 0.0
      %3332 = vmatpush1.msra.mxu0 0.0
      %3333 = vmatprep.subr.mxu0 0.0
      %3334 = vmatpush1.msra.mxu0 0.0
      %3335 = vmatprep.subr.mxu0 0.0
      %3336 = vmatpush1.msra.mxu0 0.0
      %3337 = vmatprep.mubr.f32.mxu0 0.0
      %3338 = vmatmul.mubr.f32.gmra.mrb[0].mxu0 %v3265
      %v3339 = vpop.f32.mrb[0].mxu0
      %v3340 = vadd.f32 0.0, %v3339
      %v3341 = vpop.f32.mrb[0].mxu0
      %v3342 = vadd.f32 0.0, %v3341
      %3343 = vdwg.mxu0
      %3344 = vmatprep.subr.mxu0 0.0
      %3345 = vmatpush1.msra.mxu0 %v3271
      %3346 = vmatprep.subr.mxu0 0.0
      %3347 = vmatpush1.msra.mxu0 0.0
      %3348 = vmatprep.subr.mxu0 0.0
      %3349 = vmatpush1.msra.mxu0 0.0
      %3350 = vmatprep.subr.mxu0 0.0
      %3351 = vmatpush1.msra.mxu0 0.0
      %3352 = vmatprep.subr.mxu0 0.0
      %3353 = vmatpush1.msra.mxu0 0.0
      %3354 = vmatprep.subr.mxu0 0.0
      %3355 = vmatpush1.msra.mxu0 0.0
      %3356 = vmatprep.subr.mxu0 0.0
      %3357 = vmatpush1.msra.mxu0 0.0
      %3358 = vmatprep.subr.mxu0 0.0
      %3359 = vmatpush1.msra.mxu0 0.0
      %3360 = vmatprep.subr.mxu0 0.0
      %3361 = vmatpush1.msra.mxu0 0.0
      %3362 = vmatprep.subr.mxu0 0.0
      %3363 = vmatpush1.msra.mxu0 0.0
      %3364 = vmatprep.subr.mxu0 0.0
      %3365 = vmatpush1.msra.mxu0 0.0
      %3366 = vmatprep.subr.mxu0 0.0
      %3367 = vmatpush1.msra.mxu0 0.0
      %3368 = vmatprep.subr.mxu0 0.0
      %3369 = vmatpush1.msra.mxu0 0.0
      %3370 = vmatprep.subr.mxu0 0.0
      %3371 = vmatpush1.msra.mxu0 0.0
      %3372 = vmatprep.subr.mxu0 0.0
      %3373 = vmatpush1.msra.mxu0 0.0
      %3374 = vmatprep.subr.mxu0 0.0
      %3375 = vmatpush1.msra.mxu0 0.0
      %3376 = vmatprep.subr.mxu0 0.0
      %3377 = vmatpush1.msra.mxu0 0.0
      %3378 = vmatprep.subr.mxu0 0.0
      %3379 = vmatpush1.msra.mxu0 0.0
      %3380 = vmatprep.subr.mxu0 0.0
      %3381 = vmatpush1.msra.mxu0 0.0
      %3382 = vmatprep.subr.mxu0 0.0
      %3383 = vmatpush1.msra.mxu0 0.0
      %3384 = vmatprep.subr.mxu0 0.0
      %3385 = vmatpush1.msra.mxu0 0.0
      %3386 = vmatprep.subr.mxu0 0.0
      %3387 = vmatpush1.msra.mxu0 0.0
      %3388 = vmatprep.subr.mxu0 0.0
      %3389 = vmatpush1.msra.mxu0 0.0
      %3390 = vmatprep.subr.mxu0 0.0
      %3391 = vmatpush1.msra.mxu0 0.0
      %3392 = vmatprep.subr.mxu0 0.0
      %3393 = vmatpush1.msra.mxu0 0.0
      %3394 = vmatprep.subr.mxu0 0.0
      %3395 = vmatpush1.msra.mxu0 0.0
      %3396 = vmatprep.subr.mxu0 0.0
      %3397 = vmatpush1.msra.mxu0 0.0
      %3398 = vmatprep.subr.mxu0 0.0
      %3399 = vmatpush1.msra.mxu0 0.0
      %3400 = vmatprep.subr.mxu0 0.0
      %3401 = vmatpush1.msra.mxu0 0.0
      %3402 = vmatprep.subr.mxu0 0.0
      %3403 = vmatpush1.msra.mxu0 0.0
      %3404 = vmatprep.subr.mxu0 0.0
      %3405 = vmatpush1.msra.mxu0 0.0
      %3406 = vmatprep.subr.mxu0 0.0
      %3407 = vmatpush1.msra.mxu0 0.0
      %3408 = vmatprep.mubr.f32.mxu0 0.0
      %3409 = vmatmul.mubr.f32.gmra.mrb[0].mxu0 %v3265
      %v3410 = vpop.f32.mrb[0].mxu0
      %v3411 = vadd.f32 0.0, %v3410
      %v3412 = vpop.f32.mrb[0].mxu0
      %3413 = vdwg.mxu0
      %v3414 = vadd.f32 %v3246, %v3340
      %v3415 = vadd.f32 %v3247, %v3342
      %v3416 = vadd.f32 %v3248, %v3411
      %v3417 = vld [vmem:[%s4] sm:$0xf]
      %3419 = vset.pattern.permute.xlu0 0
      %3420 = vperm.xlu0 %3419, %v3417
      %v3421 = vpop.permute.xlu0 %3420
      %v3423 = vadd.f32 %v3414, %v3421
      %v3424 = vadd.f32 %v3415, %v3421
      %v3425 = vadd.f32 %v3416, %v3421
      %v3426 = vsub.f32 0.0, %v3423
      %v3427 = vsub.f32 0.0, %v3424
      %v3428 = vsub.f32 0.0, %v3425
      %v3429 = vmul.f32 %v3426, 1.442695
      %v3430 = vpow.pop %v3429
      %v3431 = vmul.f32 %v3427, 1.442695
      %v3432 = vpow.pop %v3431
      %v3433 = vmul.f32 %v3428, 1.442695
      %v3434 = vpow.pop %v3433
      %v3435 = vadd.f32 %v3430, 1.0
      %v3436 = vadd.f32 %v3432, 1.0
      %v3437 = vadd.f32 %v3434, 1.0
      %v3438 = vrcp.pop %v3435
      %v3439 = vmul.f32 1.0, %v3438
      %v3440 = vrcp.pop %v3436
      %v3441 = vmul.f32 1.0, %v3440
      %v3442 = vrcp.pop %v3437
      %v3443 = vmul.f32 1.0, %v3442
      %v3444 = vmul.f32 %v3423, %v3439
      %v3445 = vmul.f32 %v3424, %v3441
      %v3446 = vmul.f32 %v3425, %v3443
      %3448 = vrot.lane.b32.xlu0 %v3444, 126
      %v3449 = vpop.permute.xlu0 %3448
      %3451 = vrot.lane.b32.xlu0 %v3444, 124
      %v3452 = vpop.permute.xlu0 %3451
      %3454 = vrot.lane.b32.xlu0 %v3444, 122
      %v3455 = vpop.permute.xlu0 %3454
      %3457 = vrot.lane.b32.xlu0 %v3444, 120
      %v3458 = vpop.permute.xlu0 %3457
      %3460 = vrot.lane.b32.xlu0 %v3444, 118
      %v3461 = vpop.permute.xlu0 %3460
      %3463 = vrot.lane.b32.xlu0 %v3444, 116
      %v3464 = vpop.permute.xlu0 %3463
      %3467 = vrot.lane.b32.xlu0 %v3444, 114
      %v3468 = vpop.permute.xlu0 %3467
      %3469 = vrot.lane.b32.xlu0 %v3445, 114
      %v3470 = vpop.permute.xlu0 %3469
      %vm3471 = vcmask 932864
      %v3472 = vsel %vm3471, %v3468, %v3470
      %3474 = vrot.lane.b32.xlu0 %v3445, 112
      %v3475 = vpop.permute.xlu0 %3474
      %3477 = vrot.lane.b32.xlu0 %v3445, 110
      %v3478 = vpop.permute.xlu0 %3477
      %3480 = vrot.lane.b32.xlu0 %v3445, 108
      %v3481 = vpop.permute.xlu0 %3480
      %3483 = vrot.lane.b32.xlu0 %v3445, 106
      %v3484 = vpop.permute.xlu0 %3483
      %3486 = vrot.lane.b32.xlu0 %v3445, 104
      %v3487 = vpop.permute.xlu0 %3486
      %3489 = vrot.lane.b32.xlu0 %v3445, 102
      %v3490 = vpop.permute.xlu0 %3489
      %3493 = vrot.lane.b32.xlu0 %v3445, 100
      %v3494 = vpop.permute.xlu0 %3493
      %3495 = vrot.lane.b32.xlu0 %v3446, 100
      %v3496 = vpop.permute.xlu0 %3495
      %vm3497 = vcmask 818176
      %v3498 = vsel %vm3497, %v3494, %v3496
      %3500 = vrot.lane.b32.xlu0 %v3446, 98
      %v3501 = vpop.permute.xlu0 %3500
      %vm3503 = vcmask 130048
      %v3504 = vsel %vm3503, %v3444, %v3449
      %vm3505 = vcmask 261120
      %v3506 = vsel %vm3505, %v3504, %v3452
      %vm3507 = vcmask 392192
      %v3508 = vsel %vm3507, %v3506, %v3455
      %vm3509 = vcmask 523264
      %v3510 = vsel %vm3509, %v3508, %v3458
      %vm3511 = vcmask 654336
      %v3512 = vsel %vm3511, %v3510, %v3461
      %vm3513 = vcmask 785408
      %v3514 = vsel %vm3513, %v3512, %v3464
      %vm3515 = vcmask 916480
      %v3516 = vsel %vm3515, %v3514, %v3472
      %v3517 = vsel %vm3503, %v3475, %v3478
      %v3518 = vsel %vm3505, %v3517, %v3481
      %v3519 = vsel %vm3507, %v3518, %v3484
      %v3520 = vsel %vm3509, %v3519, %v3487
      %v3521 = vsel %vm3511, %v3520, %v3490
      %v3522 = vsel %vm3513, %v3521, %v3498
      %v3523 = vsel %vm3515, %v3522, %v3501
      %v3526 = vcombine.low %v3516, %v3523
      %3528 = vst [vmem:[%s251] sm:$0xff] %v3526
      %p3529 = scmp.lt.s32.totalorder %s17, 1
      %s3530 = scalar_select %p3529, %s17, 1
      %s3531 = smul.addr %s3530, 2
      %s3532 = smul.addr %s3531, 4
      %s3533 = scalar_lea.vmem %s6, %s3532
      // Predicated region
      $region45: #{c2f_v2_pallas.4} parent=43 // pred_check
        %p3534 = pneg %p166
      $region46: #{c2f_v2_pallas.4} parent=43 // pred_check_branch
        %3536 = sbr.rel (%p3534) target = $region48
      $region47: #{c2f_v2_pallas.4} parent=43 // pred_region
        _
      $region48: #{c2f_v2_pallas.4} parent=43 // pred_fallthru
        _
    $region44: #{c2f_v2_pallas.4} parent=5 // pred_fallthru
      _
    %p3537 = scmp.le.s32.totalorder 2, %s12
    // Predicated region
    $region49: #{c2f_v2_pallas.4} parent=5 // pred_check
      %p3538 = pneg %p3537
    $region50: #{c2f_v2_pallas.4} parent=5 // pred_check_branch
      %3540 = sbr.rel (%p3538) target = $region52
    $region51: #{c2f_v2_pallas.4} parent=5 // pred_region
      %s3541 = ssub.s32 %s12, 2
      // Predicated region
      $region53: #{c2f_v2_pallas.4} parent=51 // pred_check
        %p3542 = pneg %p172
      $region54: #{c2f_v2_pallas.4} parent=51 // pred_check_branch
        %3544 = sbr.rel (%p3542) target = $region56
      $region55: #{c2f_v2_pallas.4} parent=51 // pred_region
        %p3545 = scmp.lt.s32.totalorder %s18, 1
        %s3546 = scalar_select %p3545, %s18, 1
        %s3547 = smul.addr %s3546, 2
        %s3548 = smul.addr %s3547, 4
        %s3549 = scalar_lea.vmem %s6, %s3548
      $region56: #{c2f_v2_pallas.4} parent=51 // pred_fallthru
        _
    $region52: #{c2f_v2_pallas.4} parent=5 // pred_fallthru
      _
  $region6: #{c2f_v2_pallas.4} parent=0 // loop_footer
    %s16 = sadd.s32 1, %s12
  $region7: #{c2f_v2_pallas.4} parent=0 // loop_footer_branch
    %11 = sbr.rel target = $region3
  $region8: #{c2f_v2_pallas.4} parent=0 // loop_exit
    _

</llo_original>
